<compile_context>
chip_gen: v5e
topology: v5e:2x2
jax: 0.10.0
libtpu: 0.0.40
codegen_flags: <defaults>
</compile_context>

<pallas_src>
import functools

import jax
import jax.numpy as jnp
from jax.experimental import pallas as pl
from jax.experimental.pallas import tpu as pltpu

LRELU_SLOPE = 0.2
BN_EPS = 1e-5
LANE = 128
MAX_TM = 512          # M-tile rows; sized so 2x double-buffered tiles fit v5e scoped VMEM


def _round_up(x, m):
    return (x + m - 1) // m * m


def _choose_tm(m, max_tm=MAX_TM):
    tm = min(max_tm, _round_up(m, 8))
    return tm, _round_up(m, tm)


# ---------------------------------------------------------------------------
# Pallas kernels
# ---------------------------------------------------------------------------
def conv_bias_lrelu_kernel(p_ref, w_ref, b_ref, out_ref, *, slope):
    # Layer 1: conv (bf16 matmul, f32 acc) + bias + LeakyReLU, bf16 lane-dense store.
    y = jnp.dot(p_ref[...], w_ref[...], preferred_element_type=jnp.float32)
    y = y + b_ref[...]
    out_ref[...] = jnp.maximum(y, slope * y).astype(out_ref.dtype)


def conv_stats_kernel(p_ref, w_ref, y_ref, sum_ref, sq_ref):
    # BN layers, pass 1: conv matmul tile + accumulate per-channel sum / sum-of-squares
    # across the M grid (sum_ref / sq_ref are resident accumulators).
    y = jnp.dot(p_ref[...], w_ref[...], preferred_element_type=jnp.float32)
    y_ref[...] = y

    @pl.when(pl.program_id(0) == 0)
    def _init():
        sum_ref[...] = jnp.zeros_like(sum_ref)
        sq_ref[...] = jnp.zeros_like(sq_ref)

    sum_ref[...] += jnp.sum(y, axis=0, keepdims=True)
    sq_ref[...] += jnp.sum(y * y, axis=0, keepdims=True)


def bn_lrelu_kernel(y_ref, sum_ref, sq_ref, gamma_ref, beta_ref, out_ref,
                    *, count, eps, slope):
    # BN layers, pass 2: global batch-stats normalize + LeakyReLU, tiled over M.
    inv_n = 1.0 / count
    mean = sum_ref[...] * inv_n
    var = sq_ref[...] * inv_n - mean * mean            # biased variance (training-mode BN)
    scale = gamma_ref[...] * jax.lax.rsqrt(var + eps)
    shift = beta_ref[...] - mean * scale
    a = y_ref[...] * scale + shift
    out_ref[...] = jnp.maximum(a, slope * a).astype(out_ref.dtype)


def bn_lrelu_pool_cls_kernel(y_ref, sum_ref, sq_ref, gamma_ref, beta_ref,
                             wc_ref, bc_ref, out_ref, *, count, eps, slope):
    # Last layer, pass 2 (fused): BN + LeakyReLU + global average pool + 1x1-conv classifier.
    inv_n = 1.0 / count
    mean = sum_ref[...] * inv_n
    var = sq_ref[...] * inv_n - mean * mean
    scale = gamma_ref[...] * jax.lax.rsqrt(var + eps)
    shift = beta_ref[...] - mean * scale
    a = y_ref[0] * scale + shift                       # (OH*OW, C_pad) for this image
    a = jnp.maximum(a, slope * a)
    pooled = jnp.mean(a, axis=0, keepdims=True)        # (1, C_pad) global avg pool
    logits = jnp.dot(pooled, wc_ref[...], preferred_element_type=jnp.float32) + bc_ref[...]
    out_ref[...] = logits.reshape(out_ref.shape)


# ---------------------------------------------------------------------------
# pallas_call wrappers (grids / BlockSpecs)
# ---------------------------------------------------------------------------
def conv_layer_no_bn(patches, w, b, *, tm):
    m_pad, k_pad = patches.shape
    oc_pad = w.shape[1]
    return pl.pallas_call(
        functools.partial(conv_bias_lrelu_kernel, slope=LRELU_SLOPE),
        grid=(m_pad // tm,),
        in_specs=[pl.BlockSpec((tm, k_pad), lambda i: (i, 0)),
                  pl.BlockSpec((k_pad, oc_pad), lambda i: (0, 0)),
                  pl.BlockSpec((1, oc_pad), lambda i: (0, 0))],
        out_specs=pl.BlockSpec((tm, oc_pad), lambda i: (i, 0)),
        out_shape=jax.ShapeDtypeStruct((m_pad, oc_pad), jnp.bfloat16),
        compiler_params=pltpu.CompilerParams(dimension_semantics=("parallel",)),
    )(patches, w, b)


def conv_layer_stats(patches, w, *, tm):
    m_pad, k_pad = patches.shape
    oc_pad = w.shape[1]
    return pl.pallas_call(
        conv_stats_kernel,
        grid=(m_pad // tm,),
        in_specs=[pl.BlockSpec((tm, k_pad), lambda i: (i, 0)),
                  pl.BlockSpec((k_pad, oc_pad), lambda i: (0, 0))],
        out_specs=(pl.BlockSpec((tm, oc_pad), lambda i: (i, 0)),
                   pl.BlockSpec((1, oc_pad), lambda i: (0, 0)),
                   pl.BlockSpec((1, oc_pad), lambda i: (0, 0))),
        out_shape=(jax.ShapeDtypeStruct((m_pad, oc_pad), jnp.float32),
                   jax.ShapeDtypeStruct((1, oc_pad), jnp.float32),
                   jax.ShapeDtypeStruct((1, oc_pad), jnp.float32)),
        # stats outputs are resident accumulators across the M axis -> reduction axis
        compiler_params=pltpu.CompilerParams(dimension_semantics=("arbitrary",)),
    )(patches, w)


def bn_lrelu_layer(y_raw, ssum, ssq, gamma, beta, *, count, tm):
    m_pad, oc_pad = y_raw.shape
    return pl.pallas_call(
        functools.partial(bn_lrelu_kernel, count=float(count), eps=BN_EPS, slope=LRELU_SLOPE),
        grid=(m_pad // tm,),
        in_specs=[pl.BlockSpec((tm, oc_pad), lambda i: (i, 0)),
                  pl.BlockSpec((1, oc_pad), lambda i: (0, 0)),
                  pl.BlockSpec((1, oc_pad), lambda i: (0, 0)),
                  pl.BlockSpec((1, oc_pad), lambda i: (0, 0)),
                  pl.BlockSpec((1, oc_pad), lambda i: (0, 0))],
        out_specs=pl.BlockSpec((tm, oc_pad), lambda i: (i, 0)),
        out_shape=jax.ShapeDtypeStruct((m_pad, oc_pad), jnp.bfloat16),
        compiler_params=pltpu.CompilerParams(dimension_semantics=("parallel",)),
    )(y_raw, ssum, ssq, gamma, beta)


def bn_lrelu_pool_cls(y3, ssum, ssq, gamma, beta, w_cls, b_cls, *, count):
    n, ohw, oc_pad = y3.shape
    nc_pad = w_cls.shape[1]
    out = pl.pallas_call(
        functools.partial(bn_lrelu_pool_cls_kernel,
                          count=float(count), eps=BN_EPS, slope=LRELU_SLOPE),
        grid=(n,),
        in_specs=[pl.BlockSpec((1, ohw, oc_pad), lambda i: (i, 0, 0)),
                  pl.BlockSpec((1, oc_pad), lambda i: (0, 0)),
                  pl.BlockSpec((1, oc_pad), lambda i: (0, 0)),
                  pl.BlockSpec((1, oc_pad), lambda i: (0, 0)),
                  pl.BlockSpec((1, oc_pad), lambda i: (0, 0)),
                  pl.BlockSpec((oc_pad, nc_pad), lambda i: (0, 0)),
                  pl.BlockSpec((1, nc_pad), lambda i: (0, 0))],
        out_specs=pl.BlockSpec((1, 1, nc_pad), lambda i: (i, 0, 0)),
        out_shape=jax.ShapeDtypeStruct((n, 1, nc_pad), jnp.float32),
        compiler_params=pltpu.CompilerParams(dimension_semantics=("parallel",)),
    )(y3, ssum, ssq, gamma, beta, w_cls, b_cls)
    return out.reshape(n, nc_pad)


# ---------------------------------------------------------------------------
# JAX glue: im2col patch extraction (data movement only)
# ---------------------------------------------------------------------------
def im2col(x, k, stride, pad):
    # x: (N, H, W, C) -> patches (N*OH*OW, k*k*C), ordered (kh, kw, c) to match weights
    x = jnp.pad(x, ((0, 0), (pad, pad), (pad, pad), (0, 0)))
    n, h, w, c = x.shape
    oh = (h - k) // stride + 1
    ow = (w - k) // stride + 1
    ih = jnp.arange(oh) * stride
    iw = jnp.arange(ow) * stride
    cols = []
    for dh in range(k):
        for dw in range(k):
            cols.append(x[:, ih + dh][:, :, iw + dw])       # (N, OH, OW, C)
    patches = jnp.stack(cols, axis=3)                        # (N, OH, OW, k*k, C)
    return patches.reshape(n * oh * ow, k * k * c), oh, ow


# ---------------------------------------------------------------------------
# Parameter init (deterministic, synthetic) + forward
# ---------------------------------------------------------------------------
def init_params(key, *, nf=8, num_classes=10, n_layers=3, input_nc=3, kw=4):
    # conv specs: (in_c, out_c, stride, use_bias, use_bn)   (BatchNorm => use_bias=False)
    specs = [(input_nc, nf, 2, True, False)]
    nf_mult = 1
    for nl in range(1, n_layers):
        nf_mult_prev = nf_mult
        nf_mult = min(2 ** nl, 8)
        specs.append((nf * nf_mult_prev, nf * nf_mult, 2, False, True))
    nf_mult_prev = nf_mult
    nf_mult = min(2 ** n_layers, 8)
    specs.append((nf * nf_mult_prev, nf * nf_mult, 1, False, True))

    conv_params = []
    for (ic, oc, stride, use_bias, use_bn) in specs:
        key, k1, k2 = jax.random.split(key, 3)
        k_true = kw * kw * ic
        k_pad = _round_up(k_true, LANE)
        oc_pad = _round_up(oc, LANE)
        w = jax.random.normal(k1, (k_true, oc), jnp.float32) / jnp.sqrt(float(k_true))
        w_pad = jnp.pad(w, ((0, k_pad - k_true), (0, oc_pad - oc))).astype(jnp.bfloat16)
        b = (jax.random.normal(k2, (1, oc), jnp.float32) * 0.01
             if use_bias else jnp.zeros((1, oc), jnp.float32))
        b_pad = jnp.pad(b, ((0, 0), (0, oc_pad - oc)))
        gamma = jnp.pad(jnp.ones((1, oc), jnp.float32), ((0, 0), (0, oc_pad - oc)))
        beta = jnp.zeros((1, oc_pad), jnp.float32)
        conv_params.append(dict(w=w_pad, b=b_pad, gamma=gamma, beta=beta,
                                oc=oc, stride=stride, use_bias=use_bias, use_bn=use_bn))

    key, k1, k2 = jax.random.split(key, 3)
    c_in = nf * nf_mult
    c_in_pad = _round_up(c_in, LANE)
    nc_pad = _round_up(num_classes, LANE)
    w_cls = jax.random.normal(k1, (c_in, num_classes), jnp.float32) / jnp.sqrt(float(c_in))
    w_cls_pad = jnp.pad(w_cls, ((0, c_in_pad - c_in), (0, nc_pad - num_classes)))
    b_cls = jax.random.normal(k2, (1, num_classes), jnp.float32) * 0.01
    b_cls_pad = jnp.pad(b_cls, ((0, 0), (0, nc_pad - num_classes)))
    return conv_params, dict(w=w_cls_pad, b=b_cls_pad, num_classes=num_classes)


def nlayer_classifier_forward(x_nchw, conv_params, cls_params):
    # NCHW (PyTorch) -> NHWC; inter-layer activations are kept in bf16 (matmul inputs).
    x = jnp.transpose(x_nchw, (0, 2, 3, 1)).astype(jnp.bfloat16)
    n = x.shape[0]
    last = len(conv_params) - 1

    for li, p in enumerate(conv_params):
        patches, oh, ow = im2col(x, 4, p["stride"], 1)
        m_true, k_true = patches.shape
        k_pad = _round_up(k_true, LANE)
        tm, m_pad = _choose_tm(m_true)
        patches = jnp.pad(patches, ((0, m_pad - m_true), (0, k_pad - k_true)))

        if not p["use_bn"]:
            act = conv_layer_no_bn(patches, p["w"], p["b"], tm=tm)
            x = act[:m_true, :p["oc"]].reshape(n, oh, ow, p["oc"])
        elif li < last:
            y_raw, ssum, ssq = conv_layer_stats(patches, p["w"], tm=tm)
            act = bn_lrelu_layer(y_raw, ssum, ssq, p["gamma"], p["beta"],
                                 count=m_true, tm=tm)
            x = act[:m_true, :p["oc"]].reshape(n, oh, ow, p["oc"])
        else:
            # Last conv: BN + LReLU + global AvgPool + classifier fused in one kernel.
            y_raw, ssum, ssq = conv_layer_stats(patches, p["w"], tm=tm)
            oc_pad = p["w"].shape[1]
            y3 = y_raw[:m_true].reshape(n, oh * ow, oc_pad)
            logits = bn_lrelu_pool_cls(y3, ssum, ssq, p["gamma"], p["beta"],
                                       cls_params["w"], cls_params["b"], count=m_true)
            return logits[:, :cls_params["num_classes"]]     # == y.view(N, -1)


if __name__ == "__main__":
    key = jax.random.PRNGKey(0)
    k_in, k_par = jax.random.split(key)
    # small shapes: batch=2, 3-channel 32x32 input, nf=8 (spatial: 32->16->8->4->3->pool)
    x = jax.random.normal(k_in, (2, 3, 32, 32), jnp.float32)
    conv_params, cls_params = init_params(k_par, nf=8, num_classes=10, n_layers=3)

    fwd = jax.jit(functools.partial(nlayer_classifier_forward,
                                    conv_params=conv_params, cls_params=cls_params))
    y = jax.block_until_ready(fwd(x))
    assert y.shape == (2, 10) and y.dtype == jnp.float32
    assert bool(jnp.all(jnp.isfinite(y)))
    print("KERNEL_OK")
</pallas_src>

<mosaic_0001>
module attributes {stable_mosaic.version = 11 : i64} {
  func.func @conv_bias_lrelu_kernel(%arg0: i32, %arg1: memref<512x128xbf16, #tpu.memory_space<vmem>>, %arg2: memref<128x128xbf16, #tpu.memory_space<vmem>>, %arg3: memref<1x128xf32, #tpu.memory_space<vmem>>, %arg4: memref<512x128xbf16, #tpu.memory_space<vmem>>) attributes {dimension_semantics = [#tpu.dimension_semantics<parallel>], iteration_bounds = array<i64: 1>, scalar_prefetch = 0 : i64, scratch_operands = 0 : i64, tpu.core_type = #tpu.core_type<tc>, window_params = [{transform_indices = @transform_0, window_bounds = array<i64: 512, 128>}, {pipeline_mode = #tpu.pipeline_mode<synchronous>, transform_indices = @transform_1, window_bounds = array<i64: 128, 128>}, {pipeline_mode = #tpu.pipeline_mode<synchronous>, transform_indices = @transform_2, window_bounds = array<i64: 1, 128>}, {transform_indices = @transform_3, window_bounds = array<i64: 512, 128>}]} {
    %c0 = arith.constant 0 : index
    %c0_0 = arith.constant 0 : index
    %0 = vector.load %arg1[%c0, %c0_0] : memref<512x128xbf16, #tpu.memory_space<vmem>>, vector<512x128xbf16>
    %c0_1 = arith.constant 0 : index
    %c0_2 = arith.constant 0 : index
    %1 = vector.load %arg2[%c0_1, %c0_2] : memref<128x128xbf16, #tpu.memory_space<vmem>>, vector<128x128xbf16>
    %cst = arith.constant dense<0.000000e+00> : vector<512x128xf32>
    %2 = tpu.matmul %0, %1, %cst {dimension_numbers = #tpu.dot_dimension_numbers<[1], [0], [0], [1], [0, 0, 1, 1], [], []>} : vector<512x128xbf16>, vector<128x128xbf16>, vector<512x128xf32> -> vector<512x128xf32>
    %c0_3 = arith.constant 0 : index
    %c0_4 = arith.constant 0 : index
    %3 = vector.load %arg3[%c0_3, %c0_4] : memref<1x128xf32, #tpu.memory_space<vmem>>, vector<1x128xf32>
    %4 = vector.broadcast %3 : vector<1x128xf32> to vector<512x128xf32>
    %5 = arith.addf %2, %4 : vector<512x128xf32>
    %cst_5 = arith.constant 2.000000e-01 : f32
    %6 = vector.broadcast %cst_5 : f32 to vector<512x128xf32>
    %7 = arith.mulf %6, %5 : vector<512x128xf32>
    %8 = arith.maximumf %5, %7 : vector<512x128xf32>
    %9 = arith.truncf %8 : vector<512x128xf32> to vector<512x128xbf16>
    %c0_6 = arith.constant 0 : index
    %c0_7 = arith.constant 0 : index
    %10 = vector.load %arg4[%c0_6, %c0_7] : memref<512x128xbf16, #tpu.memory_space<vmem>>, vector<512x128xbf16>
    tpu.vector_store %arg4[%c0_6, %c0_7], %9 {strides = array<i32>} : memref<512x128xbf16, #tpu.memory_space<vmem>>, vector<512x128xbf16>,
    return
  }
  func.func @transform_0(%arg0: i32) -> (i32, i32) {
    %c0_i32 = arith.constant 0 : i32
    %c0_i32_0 = arith.constant 0 : i32
    return %arg0, %c0_i32 : i32, i32
  }
  func.func @transform_1(%arg0: i32) -> (i32, i32) {
    %c0_i32 = arith.constant 0 : i32
    %c0_i32_0 = arith.constant 0 : i32
    %c0_i32_1 = arith.constant 0 : i32
    return %c0_i32, %c0_i32_0 : i32, i32
  }
  func.func @transform_2(%arg0: i32) -> (i32, i32) {
    %c0_i32 = arith.constant 0 : i32
    %c0_i32_0 = arith.constant 0 : i32
    %c0_i32_1 = arith.constant 0 : i32
    return %c0_i32, %c0_i32_0 : i32, i32
  }
  func.func @transform_3(%arg0: i32) -> (i32, i32) {
    %c0_i32 = arith.constant 0 : i32
    %c0_i32_0 = arith.constant 0 : i32
    return %arg0, %c0_i32 : i32, i32
  }
}

module attributes {stable_mosaic.version = 11 : i64} {
  func.func @conv_stats_kernel(%arg0: i32, %arg1: memref<128x128xbf16, #tpu.memory_space<vmem>>, %arg2: memref<128x128xbf16, #tpu.memory_space<vmem>>, %arg3: memref<128x128xf32, #tpu.memory_space<vmem>>, %arg4: memref<1x128xf32, #tpu.memory_space<vmem>>, %arg5: memref<1x128xf32, #tpu.memory_space<vmem>>) attributes {dimension_semantics = [#tpu.dimension_semantics<arbitrary>], iteration_bounds = array<i64: 1>, scalar_prefetch = 0 : i64, scratch_operands = 0 : i64, tpu.core_type = #tpu.core_type<tc>, window_params = [{transform_indices = @transform_0, window_bounds = array<i64: 128, 128>}, {pipeline_mode = #tpu.pipeline_mode<synchronous>, transform_indices = @transform_1, window_bounds = array<i64: 128, 128>}, {transform_indices = @transform_2, window_bounds = array<i64: 128, 128>}, {pipeline_mode = #tpu.pipeline_mode<synchronous>, transform_indices = @transform_3, window_bounds = array<i64: 1, 128>}, {pipeline_mode = #tpu.pipeline_mode<synchronous>, transform_indices = @transform_4, window_bounds = array<i64: 1, 128>}]} {
    %c0 = arith.constant 0 : index
    %c0_0 = arith.constant 0 : index
    %0 = vector.load %arg1[%c0, %c0_0] : memref<128x128xbf16, #tpu.memory_space<vmem>>, vector<128x128xbf16>
    %c0_1 = arith.constant 0 : index
    %c0_2 = arith.constant 0 : index
    %1 = vector.load %arg2[%c0_1, %c0_2] : memref<128x128xbf16, #tpu.memory_space<vmem>>, vector<128x128xbf16>
    %cst = arith.constant dense<0.000000e+00> : vector<128x128xf32>
    %2 = tpu.matmul %0, %1, %cst {dimension_numbers = #tpu.dot_dimension_numbers<[1], [0], [0], [1], [0, 0, 1, 1], [], []>} : vector<128x128xbf16>, vector<128x128xbf16>, vector<128x128xf32> -> vector<128x128xf32>
    %c0_3 = arith.constant 0 : index
    %c0_4 = arith.constant 0 : index
    %3 = vector.load %arg3[%c0_3, %c0_4] : memref<128x128xf32, #tpu.memory_space<vmem>>, vector<128x128xf32>
    tpu.vector_store %arg3[%c0_3, %c0_4], %2 {strides = array<i32>} : memref<128x128xf32, #tpu.memory_space<vmem>>, vector<128x128xf32>,
    %c0_i32 = arith.constant 0 : i32
    %4 = arith.cmpi eq, %arg0, %c0_i32 : i32
    %5 = arith.extui %4 : i1 to i32
    %c0_i32_5 = arith.constant 0 : i32
    %6 = arith.cmpi ne, %5, %c0_i32_5 : i32
    scf.if %6 {
      %cst_16 = arith.constant 0.000000e+00 : f32
      %18 = vector.broadcast %cst_16 : f32 to vector<1x128xf32>
      %c0_17 = arith.constant 0 : index
      %c0_18 = arith.constant 0 : index
      %19 = vector.load %arg4[%c0_17, %c0_18] : memref<1x128xf32, #tpu.memory_space<vmem>>, vector<1x128xf32>
      tpu.vector_store %arg4[%c0_17, %c0_18], %18 {strides = array<i32>} : memref<1x128xf32, #tpu.memory_space<vmem>>, vector<1x128xf32>,
      %cst_19 = arith.constant 0.000000e+00 : f32
      %20 = vector.broadcast %cst_19 : f32 to vector<1x128xf32>
      %c0_20 = arith.constant 0 : index
      %c0_21 = arith.constant 0 : index
      %21 = vector.load %arg5[%c0_20, %c0_21] : memref<1x128xf32, #tpu.memory_space<vmem>>, vector<1x128xf32>
      tpu.vector_store %arg5[%c0_20, %c0_21], %20 {strides = array<i32>} : memref<1x128xf32, #tpu.memory_space<vmem>>, vector<1x128xf32>,
    } else {
    }
    %c0_6 = arith.constant 0 : index
    %c0_7 = arith.constant 0 : index
    %7 = vector.load %arg4[%c0_6, %c0_7] : memref<1x128xf32, #tpu.memory_space<vmem>>, vector<1x128xf32>
    %cst_8 = arith.constant dense<0.000000e+00> : vector<128xf32>
    %8 = vector.multi_reduction <add>, %2, %cst_8 [0] : vector<128x128xf32> to vector<128xf32>
    %9 = vector.shape_cast %8 : vector<128xf32> to vector<1x128xf32>
    %10 = arith.addf %7, %9 : vector<1x128xf32>
    %c0_9 = arith.constant 0 : index
    %c0_10 = arith.constant 0 : index
    %11 = vector.load %arg4[%c0_9, %c0_10] : memref<1x128xf32, #tpu.memory_space<vmem>>, vector<1x128xf32>
    tpu.vector_store %arg4[%c0_9, %c0_10], %10 {strides = array<i32>} : memref<1x128xf32, #tpu.memory_space<vmem>>, vector<1x128xf32>,
    %c0_11 = arith.constant 0 : index
    %c0_12 = arith.constant 0 : index
    %12 = vector.load %arg5[%c0_11, %c0_12] : memref<1x128xf32, #tpu.memory_space<vmem>>, vector<1x128xf32>
    %13 = arith.mulf %2, %2 : vector<128x128xf32>
    %cst_13 = arith.constant dense<0.000000e+00> : vector<128xf32>
    %14 = vector.multi_reduction <add>, %13, %cst_13 [0] : vector<128x128xf32> to vector<128xf32>
    %15 = vector.shape_cast %14 : vector<128xf32> to vector<1x128xf32>
    %16 = arith.addf %12, %15 : vector<1x128xf32>
    %c0_14 = arith.constant 0 : index
    %c0_15 = arith.constant 0 : index
    %17 = vector.load %arg5[%c0_14, %c0_15] : memref<1x128xf32, #tpu.memory_space<vmem>>, vector<1x128xf32>
    tpu.vector_store %arg5[%c0_14, %c0_15], %16 {strides = array<i32>} : memref<1x128xf32, #tpu.memory_space<vmem>>, vector<1x128xf32>,
    return
  }
  func.func @transform_0(%arg0: i32) -> (i32, i32) {
    %c0_i32 = arith.constant 0 : i32
    %c0_i32_0 = arith.constant 0 : i32
    return %arg0, %c0_i32 : i32, i32
  }
  func.func @transform_1(%arg0: i32) -> (i32, i32) {
    %c0_i32 = arith.constant 0 : i32
    %c0_i32_0 = arith.constant 0 : i32
    %c0_i32_1 = arith.constant 0 : i32
    return %c0_i32, %c0_i32_0 : i32, i32
  }
  func.func @transform_2(%arg0: i32) -> (i32, i32) {
    %c0_i32 = arith.constant 0 : i32
    %c0_i32_0 = arith.constant 0 : i32
    return %arg0, %c0_i32 : i32, i32
  }
  func.func @transform_3(%arg0: i32) -> (i32, i32) {
    %c0_i32 = arith.constant 0 : i32
    %c0_i32_0 = arith.constant 0 : i32
    %c0_i32_1 = arith.constant 0 : i32
    return %c0_i32, %c0_i32_0 : i32, i32
  }
  func.func @transform_4(%arg0: i32) -> (i32, i32) {
    %c0_i32 = arith.constant 0 : i32
    %c0_i32_0 = arith.constant 0 : i32
    %c0_i32_1 = arith.constant 0 : i32
    return %c0_i32, %c0_i32_0 : i32, i32
  }
}

module attributes {stable_mosaic.version = 11 : i64} {
  func.func @bn_lrelu_kernel(%arg0: i32, %arg1: memref<128x128xf32, #tpu.memory_space<vmem>>, %arg2: memref<1x128xf32, #tpu.memory_space<vmem>>, %arg3: memref<1x128xf32, #tpu.memory_space<vmem>>, %arg4: memref<1x128xf32, #tpu.memory_space<vmem>>, %arg5: memref<1x128xf32, #tpu.memory_space<vmem>>, %arg6: memref<128x128xbf16, #tpu.memory_space<vmem>>) attributes {dimension_semantics = [#tpu.dimension_semantics<parallel>], iteration_bounds = array<i64: 1>, scalar_prefetch = 0 : i64, scratch_operands = 0 : i64, tpu.core_type = #tpu.core_type<tc>, window_params = [{transform_indices = @transform_0, window_bounds = array<i64: 128, 128>}, {pipeline_mode = #tpu.pipeline_mode<synchronous>, transform_indices = @transform_1, window_bounds = array<i64: 1, 128>}, {pipeline_mode = #tpu.pipeline_mode<synchronous>, transform_indices = @transform_2, window_bounds = array<i64: 1, 128>}, {pipeline_mode = #tpu.pipeline_mode<synchronous>, transform_indices = @transform_3, window_bounds = array<i64: 1, 128>}, {pipeline_mode = #tpu.pipeline_mode<synchronous>, transform_indices = @transform_4, window_bounds = array<i64: 1, 128>}, {transform_indices = @transform_5, window_bounds = array<i64: 128, 128>}]} {
    %c0 = arith.constant 0 : index
    %c0_0 = arith.constant 0 : index
    %0 = vector.load %arg2[%c0, %c0_0] : memref<1x128xf32, #tpu.memory_space<vmem>>, vector<1x128xf32>
    %cst = arith.constant 7.812500e-03 : f32
    %1 = vector.broadcast %cst : f32 to vector<1x128xf32>
    %2 = arith.mulf %0, %1 : vector<1x128xf32>
    %c0_1 = arith.constant 0 : index
    %c0_2 = arith.constant 0 : index
    %3 = vector.load %arg3[%c0_1, %c0_2] : memref<1x128xf32, #tpu.memory_space<vmem>>, vector<1x128xf32>
    %cst_3 = arith.constant 7.812500e-03 : f32
    %4 = vector.broadcast %cst_3 : f32 to vector<1x128xf32>
    %5 = arith.mulf %3, %4 : vector<1x128xf32>
    %6 = arith.mulf %2, %2 : vector<1x128xf32>
    %7 = arith.subf %5, %6 : vector<1x128xf32>
    %c0_4 = arith.constant 0 : index
    %c0_5 = arith.constant 0 : index
    %8 = vector.load %arg4[%c0_4, %c0_5] : memref<1x128xf32, #tpu.memory_space<vmem>>, vector<1x128xf32>
    %cst_6 = arith.constant 9.99999974E-6 : f32
    %9 = vector.broadcast %cst_6 : f32 to vector<1x128xf32>
    %10 = arith.addf %7, %9 : vector<1x128xf32>
    %11 = math.rsqrt %10 : vector<1x128xf32>
    %12 = arith.mulf %8, %11 : vector<1x128xf32>
    %c0_7 = arith.constant 0 : index
    %c0_8 = arith.constant 0 : index
    %13 = vector.load %arg5[%c0_7, %c0_8] : memref<1x128xf32, #tpu.memory_space<vmem>>, vector<1x128xf32>
    %14 = arith.mulf %2, %12 : vector<1x128xf32>
    %15 = arith.subf %13, %14 : vector<1x128xf32>
    %c0_9 = arith.constant 0 : index
    %c0_10 = arith.constant 0 : index
    %16 = vector.load %arg1[%c0_9, %c0_10] : memref<128x128xf32, #tpu.memory_space<vmem>>, vector<128x128xf32>
    %17 = vector.broadcast %12 : vector<1x128xf32> to vector<128x128xf32>
    %18 = arith.mulf %16, %17 : vector<128x128xf32>
    %19 = vector.broadcast %15 : vector<1x128xf32> to vector<128x128xf32>
    %20 = arith.addf %18, %19 : vector<128x128xf32>
    %cst_11 = arith.constant 2.000000e-01 : f32
    %21 = vector.broadcast %cst_11 : f32 to vector<128x128xf32>
    %22 = arith.mulf %21, %20 : vector<128x128xf32>
    %23 = arith.maximumf %20, %22 : vector<128x128xf32>
    %24 = arith.truncf %23 : vector<128x128xf32> to vector<128x128xbf16>
    %c0_12 = arith.constant 0 : index
    %c0_13 = arith.constant 0 : index
    %25 = vector.load %arg6[%c0_12, %c0_13] : memref<128x128xbf16, #tpu.memory_space<vmem>>, vector<128x128xbf16>
    tpu.vector_store %arg6[%c0_12, %c0_13], %24 {strides = array<i32>} : memref<128x128xbf16, #tpu.memory_space<vmem>>, vector<128x128xbf16>,
    return
  }
  func.func @transform_0(%arg0: i32) -> (i32, i32) {
    %c0_i32 = arith.constant 0 : i32
    %c0_i32_0 = arith.constant 0 : i32
    return %arg0, %c0_i32 : i32, i32
  }
  func.func @transform_1(%arg0: i32) -> (i32, i32) {
    %c0_i32 = arith.constant 0 : i32
    %c0_i32_0 = arith.constant 0 : i32
    %c0_i32_1 = arith.constant 0 : i32
    return %c0_i32, %c0_i32_0 : i32, i32
  }
  func.func @transform_2(%arg0: i32) -> (i32, i32) {
    %c0_i32 = arith.constant 0 : i32
    %c0_i32_0 = arith.constant 0 : i32
    %c0_i32_1 = arith.constant 0 : i32
    return %c0_i32, %c0_i32_0 : i32, i32
  }
  func.func @transform_3(%arg0: i32) -> (i32, i32) {
    %c0_i32 = arith.constant 0 : i32
    %c0_i32_0 = arith.constant 0 : i32
    %c0_i32_1 = arith.constant 0 : i32
    return %c0_i32, %c0_i32_0 : i32, i32
  }
  func.func @transform_4(%arg0: i32) -> (i32, i32) {
    %c0_i32 = arith.constant 0 : i32
    %c0_i32_0 = arith.constant 0 : i32
    %c0_i32_1 = arith.constant 0 : i32
    return %c0_i32, %c0_i32_0 : i32, i32
  }
  func.func @transform_5(%arg0: i32) -> (i32, i32) {
    %c0_i32 = arith.constant 0 : i32
    %c0_i32_0 = arith.constant 0 : i32
    return %arg0, %c0_i32 : i32, i32
  }
}

module attributes {stable_mosaic.version = 11 : i64} {
  func.func @conv_stats_kernel(%arg0: i32, %arg1: memref<32x256xbf16, #tpu.memory_space<vmem>>, %arg2: memref<256x128xbf16, #tpu.memory_space<vmem>>, %arg3: memref<32x128xf32, #tpu.memory_space<vmem>>, %arg4: memref<1x128xf32, #tpu.memory_space<vmem>>, %arg5: memref<1x128xf32, #tpu.memory_space<vmem>>) attributes {dimension_semantics = [#tpu.dimension_semantics<arbitrary>], iteration_bounds = array<i64: 1>, scalar_prefetch = 0 : i64, scratch_operands = 0 : i64, tpu.core_type = #tpu.core_type<tc>, window_params = [{transform_indices = @transform_0, window_bounds = array<i64: 32, 256>}, {pipeline_mode = #tpu.pipeline_mode<synchronous>, transform_indices = @transform_1, window_bounds = array<i64: 256, 128>}, {transform_indices = @transform_2, window_bounds = array<i64: 32, 128>}, {pipeline_mode = #tpu.pipeline_mode<synchronous>, transform_indices = @transform_3, window_bounds = array<i64: 1, 128>}, {pipeline_mode = #tpu.pipeline_mode<synchronous>, transform_indices = @transform_4, window_bounds = array<i64: 1, 128>}]} {
    %c0 = arith.constant 0 : index
    %c0_0 = arith.constant 0 : index
    %0 = vector.load %arg1[%c0, %c0_0] : memref<32x256xbf16, #tpu.memory_space<vmem>>, vector<32x256xbf16>
    %c0_1 = arith.constant 0 : index
    %c0_2 = arith.constant 0 : index
    %1 = vector.load %arg2[%c0_1, %c0_2] : memref<256x128xbf16, #tpu.memory_space<vmem>>, vector<256x128xbf16>
    %cst = arith.constant dense<0.000000e+00> : vector<32x128xf32>
    %2 = tpu.matmul %0, %1, %cst {dimension_numbers = #tpu.dot_dimension_numbers<[1], [0], [0], [1], [0, 0, 1, 1], [], []>} : vector<32x256xbf16>, vector<256x128xbf16>, vector<32x128xf32> -> vector<32x128xf32>
    %c0_3 = arith.constant 0 : index
    %c0_4 = arith.constant 0 : index
    %3 = vector.load %arg3[%c0_3, %c0_4] : memref<32x128xf32, #tpu.memory_space<vmem>>, vector<32x128xf32>
    tpu.vector_store %arg3[%c0_3, %c0_4], %2 {strides = array<i32>} : memref<32x128xf32, #tpu.memory_space<vmem>>, vector<32x128xf32>,
    %c0_i32 = arith.constant 0 : i32
    %4 = arith.cmpi eq, %arg0, %c0_i32 : i32
    %5 = arith.extui %4 : i1 to i32
    %c0_i32_5 = arith.constant 0 : i32
    %6 = arith.cmpi ne, %5, %c0_i32_5 : i32
    scf.if %6 {
      %cst_16 = arith.constant 0.000000e+00 : f32
      %18 = vector.broadcast %cst_16 : f32 to vector<1x128xf32>
      %c0_17 = arith.constant 0 : index
      %c0_18 = arith.constant 0 : index
      %19 = vector.load %arg4[%c0_17, %c0_18] : memref<1x128xf32, #tpu.memory_space<vmem>>, vector<1x128xf32>
      tpu.vector_store %arg4[%c0_17, %c0_18], %18 {strides = array<i32>} : memref<1x128xf32, #tpu.memory_space<vmem>>, vector<1x128xf32>,
      %cst_19 = arith.constant 0.000000e+00 : f32
      %20 = vector.broadcast %cst_19 : f32 to vector<1x128xf32>
      %c0_20 = arith.constant 0 : index
      %c0_21 = arith.constant 0 : index
      %21 = vector.load %arg5[%c0_20, %c0_21] : memref<1x128xf32, #tpu.memory_space<vmem>>, vector<1x128xf32>
      tpu.vector_store %arg5[%c0_20, %c0_21], %20 {strides = array<i32>} : memref<1x128xf32, #tpu.memory_space<vmem>>, vector<1x128xf32>,
    } else {
    }
    %c0_6 = arith.constant 0 : index
    %c0_7 = arith.constant 0 : index
    %7 = vector.load %arg4[%c0_6, %c0_7] : memref<1x128xf32, #tpu.memory_space<vmem>>, vector<1x128xf32>
    %cst_8 = arith.constant dense<0.000000e+00> : vector<128xf32>
    %8 = vector.multi_reduction <add>, %2, %cst_8 [0] : vector<32x128xf32> to vector<128xf32>
    %9 = vector.shape_cast %8 : vector<128xf32> to vector<1x128xf32>
    %10 = arith.addf %7, %9 : vector<1x128xf32>
    %c0_9 = arith.constant 0 : index
    %c0_10 = arith.constant 0 : index
    %11 = vector.load %arg4[%c0_9, %c0_10] : memref<1x128xf32, #tpu.memory_space<vmem>>, vector<1x128xf32>
    tpu.vector_store %arg4[%c0_9, %c0_10], %10 {strides = array<i32>} : memref<1x128xf32, #tpu.memory_space<vmem>>, vector<1x128xf32>,
    %c0_11 = arith.constant 0 : index
    %c0_12 = arith.constant 0 : index
    %12 = vector.load %arg5[%c0_11, %c0_12] : memref<1x128xf32, #tpu.memory_space<vmem>>, vector<1x128xf32>
    %13 = arith.mulf %2, %2 : vector<32x128xf32>
    %cst_13 = arith.constant dense<0.000000e+00> : vector<128xf32>
    %14 = vector.multi_reduction <add>, %13, %cst_13 [0] : vector<32x128xf32> to vector<128xf32>
    %15 = vector.shape_cast %14 : vector<128xf32> to vector<1x128xf32>
    %16 = arith.addf %12, %15 : vector<1x128xf32>
    %c0_14 = arith.constant 0 : index
    %c0_15 = arith.constant 0 : index
    %17 = vector.load %arg5[%c0_14, %c0_15] : memref<1x128xf32, #tpu.memory_space<vmem>>, vector<1x128xf32>
    tpu.vector_store %arg5[%c0_14, %c0_15], %16 {strides = array<i32>} : memref<1x128xf32, #tpu.memory_space<vmem>>, vector<1x128xf32>,
    return
  }
  func.func @transform_0(%arg0: i32) -> (i32, i32) {
    %c0_i32 = arith.constant 0 : i32
    %c0_i32_0 = arith.constant 0 : i32
    return %arg0, %c0_i32 : i32, i32
  }
  func.func @transform_1(%arg0: i32) -> (i32, i32) {
    %c0_i32 = arith.constant 0 : i32
    %c0_i32_0 = arith.constant 0 : i32
    %c0_i32_1 = arith.constant 0 : i32
    return %c0_i32, %c0_i32_0 : i32, i32
  }
  func.func @transform_2(%arg0: i32) -> (i32, i32) {
    %c0_i32 = arith.constant 0 : i32
    %c0_i32_0 = arith.constant 0 : i32
    return %arg0, %c0_i32 : i32, i32
  }
  func.func @transform_3(%arg0: i32) -> (i32, i32) {
    %c0_i32 = arith.constant 0 : i32
    %c0_i32_0 = arith.constant 0 : i32
    %c0_i32_1 = arith.constant 0 : i32
    return %c0_i32, %c0_i32_0 : i32, i32
  }
  func.func @transform_4(%arg0: i32) -> (i32, i32) {
    %c0_i32 = arith.constant 0 : i32
    %c0_i32_0 = arith.constant 0 : i32
    %c0_i32_1 = arith.constant 0 : i32
    return %c0_i32, %c0_i32_0 : i32, i32
  }
}

module attributes {stable_mosaic.version = 11 : i64} {
  func.func @bn_lrelu_kernel(%arg0: i32, %arg1: memref<32x128xf32, #tpu.memory_space<vmem>>, %arg2: memref<1x128xf32, #tpu.memory_space<vmem>>, %arg3: memref<1x128xf32, #tpu.memory_space<vmem>>, %arg4: memref<1x128xf32, #tpu.memory_space<vmem>>, %arg5: memref<1x128xf32, #tpu.memory_space<vmem>>, %arg6: memref<32x128xbf16, #tpu.memory_space<vmem>>) attributes {dimension_semantics = [#tpu.dimension_semantics<parallel>], iteration_bounds = array<i64: 1>, scalar_prefetch = 0 : i64, scratch_operands = 0 : i64, tpu.core_type = #tpu.core_type<tc>, window_params = [{transform_indices = @transform_0, window_bounds = array<i64: 32, 128>}, {pipeline_mode = #tpu.pipeline_mode<synchronous>, transform_indices = @transform_1, window_bounds = array<i64: 1, 128>}, {pipeline_mode = #tpu.pipeline_mode<synchronous>, transform_indices = @transform_2, window_bounds = array<i64: 1, 128>}, {pipeline_mode = #tpu.pipeline_mode<synchronous>, transform_indices = @transform_3, window_bounds = array<i64: 1, 128>}, {pipeline_mode = #tpu.pipeline_mode<synchronous>, transform_indices = @transform_4, window_bounds = array<i64: 1, 128>}, {transform_indices = @transform_5, window_bounds = array<i64: 32, 128>}]} {
    %c0 = arith.constant 0 : index
    %c0_0 = arith.constant 0 : index
    %0 = vector.load %arg2[%c0, %c0_0] : memref<1x128xf32, #tpu.memory_space<vmem>>, vector<1x128xf32>
    %cst = arith.constant 3.125000e-02 : f32
    %1 = vector.broadcast %cst : f32 to vector<1x128xf32>
    %2 = arith.mulf %0, %1 : vector<1x128xf32>
    %c0_1 = arith.constant 0 : index
    %c0_2 = arith.constant 0 : index
    %3 = vector.load %arg3[%c0_1, %c0_2] : memref<1x128xf32, #tpu.memory_space<vmem>>, vector<1x128xf32>
    %cst_3 = arith.constant 3.125000e-02 : f32
    %4 = vector.broadcast %cst_3 : f32 to vector<1x128xf32>
    %5 = arith.mulf %3, %4 : vector<1x128xf32>
    %6 = arith.mulf %2, %2 : vector<1x128xf32>
    %7 = arith.subf %5, %6 : vector<1x128xf32>
    %c0_4 = arith.constant 0 : index
    %c0_5 = arith.constant 0 : index
    %8 = vector.load %arg4[%c0_4, %c0_5] : memref<1x128xf32, #tpu.memory_space<vmem>>, vector<1x128xf32>
    %cst_6 = arith.constant 9.99999974E-6 : f32
    %9 = vector.broadcast %cst_6 : f32 to vector<1x128xf32>
    %10 = arith.addf %7, %9 : vector<1x128xf32>
    %11 = math.rsqrt %10 : vector<1x128xf32>
    %12 = arith.mulf %8, %11 : vector<1x128xf32>
    %c0_7 = arith.constant 0 : index
    %c0_8 = arith.constant 0 : index
    %13 = vector.load %arg5[%c0_7, %c0_8] : memref<1x128xf32, #tpu.memory_space<vmem>>, vector<1x128xf32>
    %14 = arith.mulf %2, %12 : vector<1x128xf32>
    %15 = arith.subf %13, %14 : vector<1x128xf32>
    %c0_9 = arith.constant 0 : index
    %c0_10 = arith.constant 0 : index
    %16 = vector.load %arg1[%c0_9, %c0_10] : memref<32x128xf32, #tpu.memory_space<vmem>>, vector<32x128xf32>
    %17 = vector.broadcast %12 : vector<1x128xf32> to vector<32x128xf32>
    %18 = arith.mulf %16, %17 : vector<32x128xf32>
    %19 = vector.broadcast %15 : vector<1x128xf32> to vector<32x128xf32>
    %20 = arith.addf %18, %19 : vector<32x128xf32>
    %cst_11 = arith.constant 2.000000e-01 : f32
    %21 = vector.broadcast %cst_11 : f32 to vector<32x128xf32>
    %22 = arith.mulf %21, %20 : vector<32x128xf32>
    %23 = arith.maximumf %20, %22 : vector<32x128xf32>
    %24 = arith.truncf %23 : vector<32x128xf32> to vector<32x128xbf16>
    %c0_12 = arith.constant 0 : index
    %c0_13 = arith.constant 0 : index
    %25 = vector.load %arg6[%c0_12, %c0_13] : memref<32x128xbf16, #tpu.memory_space<vmem>>, vector<32x128xbf16>
    tpu.vector_store %arg6[%c0_12, %c0_13], %24 {strides = array<i32>} : memref<32x128xbf16, #tpu.memory_space<vmem>>, vector<32x128xbf16>,
    return
  }
  func.func @transform_0(%arg0: i32) -> (i32, i32) {
    %c0_i32 = arith.constant 0 : i32
    %c0_i32_0 = arith.constant 0 : i32
    return %arg0, %c0_i32 : i32, i32
  }
  func.func @transform_1(%arg0: i32) -> (i32, i32) {
    %c0_i32 = arith.constant 0 : i32
    %c0_i32_0 = arith.constant 0 : i32
    %c0_i32_1 = arith.constant 0 : i32
    return %c0_i32, %c0_i32_0 : i32, i32
  }
  func.func @transform_2(%arg0: i32) -> (i32, i32) {
    %c0_i32 = arith.constant 0 : i32
    %c0_i32_0 = arith.constant 0 : i32
    %c0_i32_1 = arith.constant 0 : i32
    return %c0_i32, %c0_i32_0 : i32, i32
  }
  func.func @transform_3(%arg0: i32) -> (i32, i32) {
    %c0_i32 = arith.constant 0 : i32
    %c0_i32_0 = arith.constant 0 : i32
    %c0_i32_1 = arith.constant 0 : i32
    return %c0_i32, %c0_i32_0 : i32, i32
  }
  func.func @transform_4(%arg0: i32) -> (i32, i32) {
    %c0_i32 = arith.constant 0 : i32
    %c0_i32_0 = arith.constant 0 : i32
    %c0_i32_1 = arith.constant 0 : i32
    return %c0_i32, %c0_i32_0 : i32, i32
  }
  func.func @transform_5(%arg0: i32) -> (i32, i32) {
    %c0_i32 = arith.constant 0 : i32
    %c0_i32_0 = arith.constant 0 : i32
    return %arg0, %c0_i32 : i32, i32
  }
}

module attributes {stable_mosaic.version = 11 : i64} {
  func.func @conv_stats_kernel(%arg0: i32, %arg1: memref<24x512xbf16, #tpu.memory_space<vmem>>, %arg2: memref<512x128xbf16, #tpu.memory_space<vmem>>, %arg3: memref<24x128xf32, #tpu.memory_space<vmem>>, %arg4: memref<1x128xf32, #tpu.memory_space<vmem>>, %arg5: memref<1x128xf32, #tpu.memory_space<vmem>>) attributes {dimension_semantics = [#tpu.dimension_semantics<arbitrary>], iteration_bounds = array<i64: 1>, scalar_prefetch = 0 : i64, scratch_operands = 0 : i64, tpu.core_type = #tpu.core_type<tc>, window_params = [{transform_indices = @transform_0, window_bounds = array<i64: 24, 512>}, {pipeline_mode = #tpu.pipeline_mode<synchronous>, transform_indices = @transform_1, window_bounds = array<i64: 512, 128>}, {transform_indices = @transform_2, window_bounds = array<i64: 24, 128>}, {pipeline_mode = #tpu.pipeline_mode<synchronous>, transform_indices = @transform_3, window_bounds = array<i64: 1, 128>}, {pipeline_mode = #tpu.pipeline_mode<synchronous>, transform_indices = @transform_4, window_bounds = array<i64: 1, 128>}]} {
    %c0 = arith.constant 0 : index
    %c0_0 = arith.constant 0 : index
    %0 = vector.load %arg1[%c0, %c0_0] : memref<24x512xbf16, #tpu.memory_space<vmem>>, vector<24x512xbf16>
    %c0_1 = arith.constant 0 : index
    %c0_2 = arith.constant 0 : index
    %1 = vector.load %arg2[%c0_1, %c0_2] : memref<512x128xbf16, #tpu.memory_space<vmem>>, vector<512x128xbf16>
    %cst = arith.constant dense<0.000000e+00> : vector<24x128xf32>
    %2 = tpu.matmul %0, %1, %cst {dimension_numbers = #tpu.dot_dimension_numbers<[1], [0], [0], [1], [0, 0, 1, 1], [], []>} : vector<24x512xbf16>, vector<512x128xbf16>, vector<24x128xf32> -> vector<24x128xf32>
    %c0_3 = arith.constant 0 : index
    %c0_4 = arith.constant 0 : index
    %3 = vector.load %arg3[%c0_3, %c0_4] : memref<24x128xf32, #tpu.memory_space<vmem>>, vector<24x128xf32>
    tpu.vector_store %arg3[%c0_3, %c0_4], %2 {strides = array<i32>} : memref<24x128xf32, #tpu.memory_space<vmem>>, vector<24x128xf32>,
    %c0_i32 = arith.constant 0 : i32
    %4 = arith.cmpi eq, %arg0, %c0_i32 : i32
    %5 = arith.extui %4 : i1 to i32
    %c0_i32_5 = arith.constant 0 : i32
    %6 = arith.cmpi ne, %5, %c0_i32_5 : i32
    scf.if %6 {
      %cst_16 = arith.constant 0.000000e+00 : f32
      %18 = vector.broadcast %cst_16 : f32 to vector<1x128xf32>
      %c0_17 = arith.constant 0 : index
      %c0_18 = arith.constant 0 : index
      %19 = vector.load %arg4[%c0_17, %c0_18] : memref<1x128xf32, #tpu.memory_space<vmem>>, vector<1x128xf32>
      tpu.vector_store %arg4[%c0_17, %c0_18], %18 {strides = array<i32>} : memref<1x128xf32, #tpu.memory_space<vmem>>, vector<1x128xf32>,
      %cst_19 = arith.constant 0.000000e+00 : f32
      %20 = vector.broadcast %cst_19 : f32 to vector<1x128xf32>
      %c0_20 = arith.constant 0 : index
      %c0_21 = arith.constant 0 : index
      %21 = vector.load %arg5[%c0_20, %c0_21] : memref<1x128xf32, #tpu.memory_space<vmem>>, vector<1x128xf32>
      tpu.vector_store %arg5[%c0_20, %c0_21], %20 {strides = array<i32>} : memref<1x128xf32, #tpu.memory_space<vmem>>, vector<1x128xf32>,
    } else {
    }
    %c0_6 = arith.constant 0 : index
    %c0_7 = arith.constant 0 : index
    %7 = vector.load %arg4[%c0_6, %c0_7] : memref<1x128xf32, #tpu.memory_space<vmem>>, vector<1x128xf32>
    %cst_8 = arith.constant dense<0.000000e+00> : vector<128xf32>
    %8 = vector.multi_reduction <add>, %2, %cst_8 [0] : vector<24x128xf32> to vector<128xf32>
    %9 = vector.shape_cast %8 : vector<128xf32> to vector<1x128xf32>
    %10 = arith.addf %7, %9 : vector<1x128xf32>
    %c0_9 = arith.constant 0 : index
    %c0_10 = arith.constant 0 : index
    %11 = vector.load %arg4[%c0_9, %c0_10] : memref<1x128xf32, #tpu.memory_space<vmem>>, vector<1x128xf32>
    tpu.vector_store %arg4[%c0_9, %c0_10], %10 {strides = array<i32>} : memref<1x128xf32, #tpu.memory_space<vmem>>, vector<1x128xf32>,
    %c0_11 = arith.constant 0 : index
    %c0_12 = arith.constant 0 : index
    %12 = vector.load %arg5[%c0_11, %c0_12] : memref<1x128xf32, #tpu.memory_space<vmem>>, vector<1x128xf32>
    %13 = arith.mulf %2, %2 : vector<24x128xf32>
    %cst_13 = arith.constant dense<0.000000e+00> : vector<128xf32>
    %14 = vector.multi_reduction <add>, %13, %cst_13 [0] : vector<24x128xf32> to vector<128xf32>
    %15 = vector.shape_cast %14 : vector<128xf32> to vector<1x128xf32>
    %16 = arith.addf %12, %15 : vector<1x128xf32>
    %c0_14 = arith.constant 0 : index
    %c0_15 = arith.constant 0 : index
    %17 = vector.load %arg5[%c0_14, %c0_15] : memref<1x128xf32, #tpu.memory_space<vmem>>, vector<1x128xf32>
    tpu.vector_store %arg5[%c0_14, %c0_15], %16 {strides = array<i32>} : memref<1x128xf32, #tpu.memory_space<vmem>>, vector<1x128xf32>,
    return
  }
  func.func @transform_0(%arg0: i32) -> (i32, i32) {
    %c0_i32 = arith.constant 0 : i32
    %c0_i32_0 = arith.constant 0 : i32
    return %arg0, %c0_i32 : i32, i32
  }
  func.func @transform_1(%arg0: i32) -> (i32, i32) {
    %c0_i32 = arith.constant 0 : i32
    %c0_i32_0 = arith.constant 0 : i32
    %c0_i32_1 = arith.constant 0 : i32
    return %c0_i32, %c0_i32_0 : i32, i32
  }
  func.func @transform_2(%arg0: i32) -> (i32, i32) {
    %c0_i32 = arith.constant 0 : i32
    %c0_i32_0 = arith.constant 0 : i32
    return %arg0, %c0_i32 : i32, i32
  }
  func.func @transform_3(%arg0: i32) -> (i32, i32) {
    %c0_i32 = arith.constant 0 : i32
    %c0_i32_0 = arith.constant 0 : i32
    %c0_i32_1 = arith.constant 0 : i32
    return %c0_i32, %c0_i32_0 : i32, i32
  }
  func.func @transform_4(%arg0: i32) -> (i32, i32) {
    %c0_i32 = arith.constant 0 : i32
    %c0_i32_0 = arith.constant 0 : i32
    %c0_i32_1 = arith.constant 0 : i32
    return %c0_i32, %c0_i32_0 : i32, i32
  }
}

module attributes {stable_mosaic.version = 11 : i64} {
  func.func @bn_lrelu_pool_cls_kernel(%arg0: i32, %arg1: memref<1x9x128xf32, #tpu.memory_space<vmem>>, %arg2: memref<1x128xf32, #tpu.memory_space<vmem>>, %arg3: memref<1x128xf32, #tpu.memory_space<vmem>>, %arg4: memref<1x128xf32, #tpu.memory_space<vmem>>, %arg5: memref<1x128xf32, #tpu.memory_space<vmem>>, %arg6: memref<128x128xf32, #tpu.memory_space<vmem>>, %arg7: memref<1x128xf32, #tpu.memory_space<vmem>>, %arg8: memref<1x1x128xf32, #tpu.memory_space<vmem>>) attributes {dimension_semantics = [#tpu.dimension_semantics<parallel>], iteration_bounds = array<i64: 2>, scalar_prefetch = 0 : i64, scratch_operands = 0 : i64, tpu.core_type = #tpu.core_type<tc>, window_params = [{transform_indices = @transform_0, window_bounds = array<i64: 1, 9, 128>}, {pipeline_mode = #tpu.pipeline_mode<synchronous>, transform_indices = @transform_1, window_bounds = array<i64: 1, 128>}, {pipeline_mode = #tpu.pipeline_mode<synchronous>, transform_indices = @transform_2, window_bounds = array<i64: 1, 128>}, {pipeline_mode = #tpu.pipeline_mode<synchronous>, transform_indices = @transform_3, window_bounds = array<i64: 1, 128>}, {pipeline_mode = #tpu.pipeline_mode<synchronous>, transform_indices = @transform_4, window_bounds = array<i64: 1, 128>}, {pipeline_mode = #tpu.pipeline_mode<synchronous>, transform_indices = @transform_5, window_bounds = array<i64: 128, 128>}, {pipeline_mode = #tpu.pipeline_mode<synchronous>, transform_indices = @transform_6, window_bounds = array<i64: 1, 128>}, {transform_indices = @transform_7, window_bounds = array<i64: 1, 1, 128>}]} {
    %c0 = arith.constant 0 : index
    %c0_0 = arith.constant 0 : index
    %0 = vector.load %arg2[%c0, %c0_0] : memref<1x128xf32, #tpu.memory_space<vmem>>, vector<1x128xf32>
    %cst = arith.constant 0.055555556 : f32
    %1 = vector.broadcast %cst : f32 to vector<1x128xf32>
    %2 = arith.mulf %0, %1 : vector<1x128xf32>
    %c0_1 = arith.constant 0 : index
    %c0_2 = arith.constant 0 : index
    %3 = vector.load %arg3[%c0_1, %c0_2] : memref<1x128xf32, #tpu.memory_space<vmem>>, vector<1x128xf32>
    %cst_3 = arith.constant 0.055555556 : f32
    %4 = vector.broadcast %cst_3 : f32 to vector<1x128xf32>
    %5 = arith.mulf %3, %4 : vector<1x128xf32>
    %6 = arith.mulf %2, %2 : vector<1x128xf32>
    %7 = arith.subf %5, %6 : vector<1x128xf32>
    %c0_4 = arith.constant 0 : index
    %c0_5 = arith.constant 0 : index
    %8 = vector.load %arg4[%c0_4, %c0_5] : memref<1x128xf32, #tpu.memory_space<vmem>>, vector<1x128xf32>
    %cst_6 = arith.constant 9.99999974E-6 : f32
    %9 = vector.broadcast %cst_6 : f32 to vector<1x128xf32>
    %10 = arith.addf %7, %9 : vector<1x128xf32>
    %11 = math.rsqrt %10 : vector<1x128xf32>
    %12 = arith.mulf %8, %11 : vector<1x128xf32>
    %c0_7 = arith.constant 0 : index
    %c0_8 = arith.constant 0 : index
    %13 = vector.load %arg5[%c0_7, %c0_8] : memref<1x128xf32, #tpu.memory_space<vmem>>, vector<1x128xf32>
    %14 = arith.mulf %2, %12 : vector<1x128xf32>
    %15 = arith.subf %13, %14 : vector<1x128xf32>
    %c0_9 = arith.constant 0 : index
    %c0_10 = arith.constant 0 : index
    %c0_11 = arith.constant 0 : index
    %16 = vector.load %arg1[%c0_9, %c0_10, %c0_11] : memref<1x9x128xf32, #tpu.memory_space<vmem>>, vector<1x9x128xf32>
    %17 = vector.shape_cast %16 : vector<1x9x128xf32> to vector<9x128xf32>
    %18 = vector.broadcast %12 : vector<1x128xf32> to vector<9x128xf32>
    %19 = arith.mulf %17, %18 : vector<9x128xf32>
    %20 = vector.broadcast %15 : vector<1x128xf32> to vector<9x128xf32>
    %21 = arith.addf %19, %20 : vector<9x128xf32>
    %cst_12 = arith.constant 2.000000e-01 : f32
    %22 = vector.broadcast %cst_12 : f32 to vector<9x128xf32>
    %23 = arith.mulf %22, %21 : vector<9x128xf32>
    %24 = arith.maximumf %21, %23 : vector<9x128xf32>
    %cst_13 = arith.constant dense<0.000000e+00> : vector<128xf32>
    %25 = vector.multi_reduction <add>, %24, %cst_13 [0] : vector<9x128xf32> to vector<128xf32>
    %26 = vector.shape_cast %25 : vector<128xf32> to vector<1x128xf32>
    %cst_14 = arith.constant 9.000000e+00 : f32
    %27 = vector.broadcast %cst_14 : f32 to vector<1x128xf32>
    %28 = arith.divf %26, %27 : vector<1x128xf32>
    %c0_15 = arith.constant 0 : index
    %c0_16 = arith.constant 0 : index
    %29 = vector.load %arg6[%c0_15, %c0_16] : memref<128x128xf32, #tpu.memory_space<vmem>>, vector<128x128xf32>
    %cst_17 = arith.constant dense<0.000000e+00> : vector<1x128xf32>
    %30 = tpu.matmul %28, %29, %cst_17 {dimension_numbers = #tpu.dot_dimension_numbers<[1], [0], [0], [1], [0, 0, 1, 1], [], []>} : vector<1x128xf32>, vector<128x128xf32>, vector<1x128xf32> -> vector<1x128xf32>
    %c0_18 = arith.constant 0 : index
    %c0_19 = arith.constant 0 : index
    %31 = vector.load %arg7[%c0_18, %c0_19] : memref<1x128xf32, #tpu.memory_space<vmem>>, vector<1x128xf32>
    %32 = arith.addf %30, %31 : vector<1x128xf32>
    %33 = vector.shape_cast %32 : vector<1x128xf32> to vector<1x1x128xf32>
    %c0_20 = arith.constant 0 : index
    %c0_21 = arith.constant 0 : index
    %c0_22 = arith.constant 0 : index
    %34 = vector.load %arg8[%c0_20, %c0_21, %c0_22] : memref<1x1x128xf32, #tpu.memory_space<vmem>>, vector<1x1x128xf32>
    tpu.vector_store %arg8[%c0_20, %c0_21, %c0_22], %33 {strides = array<i32>} : memref<1x1x128xf32, #tpu.memory_space<vmem>>, vector<1x1x128xf32>,
    return
  }
  func.func @transform_0(%arg0: i32) -> (i32, i32, i32) {
    %c0_i32 = arith.constant 0 : i32
    %c0_i32_0 = arith.constant 0 : i32
    %c0_i32_1 = arith.constant 0 : i32
    return %arg0, %c0_i32, %c0_i32_0 : i32, i32, i32
  }
  func.func @transform_1(%arg0: i32) -> (i32, i32) {
    %c0_i32 = arith.constant 0 : i32
    %c0_i32_0 = arith.constant 0 : i32
    %c0_i32_1 = arith.constant 0 : i32
    return %c0_i32, %c0_i32_0 : i32, i32
  }
  func.func @transform_2(%arg0: i32) -> (i32, i32) {
    %c0_i32 = arith.constant 0 : i32
    %c0_i32_0 = arith.constant 0 : i32
    %c0_i32_1 = arith.constant 0 : i32
    return %c0_i32, %c0_i32_0 : i32, i32
  }
  func.func @transform_3(%arg0: i32) -> (i32, i32) {
    %c0_i32 = arith.constant 0 : i32
    %c0_i32_0 = arith.constant 0 : i32
    %c0_i32_1 = arith.constant 0 : i32
    return %c0_i32, %c0_i32_0 : i32, i32
  }
  func.func @transform_4(%arg0: i32) -> (i32, i32) {
    %c0_i32 = arith.constant 0 : i32
    %c0_i32_0 = arith.constant 0 : i32
    %c0_i32_1 = arith.constant 0 : i32
    return %c0_i32, %c0_i32_0 : i32, i32
  }
  func.func @transform_5(%arg0: i32) -> (i32, i32) {
    %c0_i32 = arith.constant 0 : i32
    %c0_i32_0 = arith.constant 0 : i32
    %c0_i32_1 = arith.constant 0 : i32
    return %c0_i32, %c0_i32_0 : i32, i32
  }
  func.func @transform_6(%arg0: i32) -> (i32, i32) {
    %c0_i32 = arith.constant 0 : i32
    %c0_i32_0 = arith.constant 0 : i32
    %c0_i32_1 = arith.constant 0 : i32
    return %c0_i32, %c0_i32_0 : i32, i32
  }
  func.func @transform_7(%arg0: i32) -> (i32, i32, i32) {
    %c0_i32 = arith.constant 0 : i32
    %c0_i32_0 = arith.constant 0 : i32
    %c0_i32_1 = arith.constant 0 : i32
    return %arg0, %c0_i32, %c0_i32_0 : i32, i32, i32
  }
}

</mosaic_0001>

<llo_original>
// kernel: nlayer_classifier_forward.7
$region0: #{nlayer_classifier_forward.7}
  #allocation0 [shape = 'u32[]', space=smem, size = 0x4, offset = 0x4, fixed_abs, tag = 'smem constant byte address 0x4 - core index']
  #allocation1 [shape = 'u32[72,128]{1,0:T(1,128)}', space=vmem, size = 0x9000, scoped, tag = 'internal scratch']
  %s0 = inlined_call_operand.vmem [shape: bf16[512,128], index: 0, kind: input, shape index: {}]
  %s1 = inlined_call_operand.vmem [shape: bf16[128,128], index: 1, kind: input, shape index: {}]
  %s2 = inlined_call_operand.vmem [shape: f32[1,128], index: 2, kind: input, shape index: {}]
  %s3 = inlined_call_operand.vmem [shape: bf16[512,128], index: 3, kind: output, shape index: {}]
  %s4 = sld [smem:[#allocation0]]
  $region22: #{nlayer_classifier_forward.7} parent=0
    _
  %s6 = ssub.s32 1, %s4
  %s7 = scalar_select 0, %s6, %s4
  // Predicated region
  $region2: #{nlayer_classifier_forward.7} parent=0 // pred_check
    _
  $region3: #{nlayer_classifier_forward.7} parent=0 // pred_check_branch
    %9 = sbr.rel (0) target = $region5
  $region4: #{nlayer_classifier_forward.7} parent=0 // pred_region
    _
  $region5: #{nlayer_classifier_forward.7} parent=0 // pred_fallthru
    _
  // Predicated region
  $region6: #{nlayer_classifier_forward.7} parent=0 // pred_check
    _
  $region7: #{nlayer_classifier_forward.7} parent=0 // pred_check_branch
    %11 = sbr.rel (0) target = $region9
  $region8: #{nlayer_classifier_forward.7} parent=0 // pred_region
    _
  $region9: #{nlayer_classifier_forward.7} parent=0 // pred_fallthru
    _
  // Predicated region
  $region10: #{nlayer_classifier_forward.7} parent=0 // pred_check
    _
  $region11: #{nlayer_classifier_forward.7} parent=0 // pred_check_branch
    %13 = sbr.rel (0) target = $region13
  $region12: #{nlayer_classifier_forward.7} parent=0 // pred_region
    _
  $region13: #{nlayer_classifier_forward.7} parent=0 // pred_fallthru
    _
  %v14 = vld [vmem:[%s0] sm:$0xf]
  %v15 = vld [vmem:[%s0 + $0x4] sm:$0xf]
  %v16 = vld [vmem:[%s0 + $0x8] sm:$0xf]
  %v17 = vld [vmem:[%s0 + $0xc] sm:$0xf]
  %v18 = vld [vmem:[%s0 + $0x10] sm:$0xf]
  %v19 = vld [vmem:[%s0 + $0x14] sm:$0xf]
  %v20 = vld [vmem:[%s0 + $0x18] sm:$0xf]
  %v21 = vld [vmem:[%s0 + $0x1c] sm:$0xf]
  %v22 = vld [vmem:[%s0 + $0x20] sm:$0xf]
  %v23 = vld [vmem:[%s0 + $0x24] sm:$0xf]
  %v24 = vld [vmem:[%s0 + $0x28] sm:$0xf]
  %v25 = vld [vmem:[%s0 + $0x2c] sm:$0xf]
  %v26 = vld [vmem:[%s0 + $0x30] sm:$0xf]
  %v27 = vld [vmem:[%s0 + $0x34] sm:$0xf]
  %v28 = vld [vmem:[%s0 + $0x38] sm:$0xf]
  %v29 = vld [vmem:[%s0 + $0x3c] sm:$0xf]
  %v30 = vld [vmem:[%s0 + $0x40] sm:$0xf]
  %v31 = vld [vmem:[%s0 + $0x44] sm:$0xf]
  %v32 = vld [vmem:[%s0 + $0x48] sm:$0xf]
  %v33 = vld [vmem:[%s0 + $0x4c] sm:$0xf]
  %v34 = vld [vmem:[%s0 + $0x50] sm:$0xf]
  %v35 = vld [vmem:[%s0 + $0x54] sm:$0xf]
  %v36 = vld [vmem:[%s0 + $0x58] sm:$0xf]
  %v37 = vld [vmem:[%s0 + $0x5c] sm:$0xf]
  %v38 = vld [vmem:[%s0 + $0x60] sm:$0xf]
  %v39 = vld [vmem:[%s0 + $0x64] sm:$0xf]
  %v40 = vld [vmem:[%s0 + $0x68] sm:$0xf]
  %v41 = vld [vmem:[%s0 + $0x6c] sm:$0xf]
  %v42 = vld [vmem:[%s0 + $0x70] sm:$0xf]
  %v43 = vld [vmem:[%s0 + $0x74] sm:$0xf]
  %v44 = vld [vmem:[%s0 + $0x78] sm:$0xf]
  %v45 = vld [vmem:[%s0 + $0x7c] sm:$0xf]
  %v46 = vld [vmem:[%s0 + $0x80] sm:$0xf]
  %v47 = vld [vmem:[%s0 + $0x84] sm:$0xf]
  %v48 = vld [vmem:[%s0 + $0x88] sm:$0xf]
  %v49 = vld [vmem:[%s0 + $0x8c] sm:$0xf]
  %v50 = vld [vmem:[%s0 + $0x90] sm:$0xf]
  %v51 = vld [vmem:[%s0 + $0x94] sm:$0xf]
  %v52 = vld [vmem:[%s0 + $0x98] sm:$0xf]
  %v53 = vld [vmem:[%s0 + $0x9c] sm:$0xf]
  %v54 = vld [vmem:[%s0 + $0xa0] sm:$0xf]
  %v55 = vld [vmem:[%s0 + $0xa4] sm:$0xf]
  %v56 = vld [vmem:[%s0 + $0xa8] sm:$0xf]
  %v57 = vld [vmem:[%s0 + $0xac] sm:$0xf]
  %v58 = vld [vmem:[%s0 + $0xb0] sm:$0xf]
  %v59 = vld [vmem:[%s0 + $0xb4] sm:$0xf]
  %v60 = vld [vmem:[%s0 + $0xb8] sm:$0xf]
  %v61 = vld [vmem:[%s0 + $0xbc] sm:$0xf]
  %v62 = vld [vmem:[%s0 + $0xc0] sm:$0xf]
  %v63 = vld [vmem:[%s0 + $0xc4] sm:$0xf]
  %v64 = vld [vmem:[%s0 + $0xc8] sm:$0xf]
  %v65 = vld [vmem:[%s0 + $0xcc] sm:$0xf]
  %v66 = vld [vmem:[%s0 + $0xd0] sm:$0xf]
  %v67 = vld [vmem:[%s0 + $0xd4] sm:$0xf]
  %v68 = vld [vmem:[%s0 + $0xd8] sm:$0xf]
  %v69 = vld [vmem:[%s0 + $0xdc] sm:$0xf]
  %v70 = vld [vmem:[%s0 + $0xe0] sm:$0xf]
  %v71 = vld [vmem:[%s0 + $0xe4] sm:$0xf]
  %v72 = vld [vmem:[%s0 + $0xe8] sm:$0xf]
  %v73 = vld [vmem:[%s0 + $0xec] sm:$0xf]
  %v74 = vld [vmem:[%s0 + $0xf0] sm:$0xf]
  %v75 = vld [vmem:[%s0 + $0xf4] sm:$0xf]
  %v76 = vld [vmem:[%s0 + $0xf8] sm:$0xf]
  %v77 = vld [vmem:[%s0 + $0xfc] sm:$0xf]
  %v78 = vld [vmem:[%s1] sm:$0xf]
  %v79 = vld [vmem:[%s1 + $0x4] sm:$0xf]
  %v80 = vld [vmem:[%s1 + $0x8] sm:$0xf]
  %v81 = vld [vmem:[%s1 + $0xc] sm:$0xf]
  %v82 = vld [vmem:[%s1 + $0x10] sm:$0xf]
  %v83 = vld [vmem:[%s1 + $0x14] sm:$0xf]
  %v84 = vld [vmem:[%s1 + $0x18] sm:$0xf]
  %v85 = vld [vmem:[%s1 + $0x1c] sm:$0xf]
  %v86 = vld [vmem:[%s1 + $0x20] sm:$0xf]
  %v87 = vld [vmem:[%s1 + $0x24] sm:$0xf]
  %v88 = vld [vmem:[%s1 + $0x28] sm:$0xf]
  %v89 = vld [vmem:[%s1 + $0x2c] sm:$0xf]
  %v90 = vld [vmem:[%s1 + $0x30] sm:$0xf]
  %v91 = vld [vmem:[%s1 + $0x34] sm:$0xf]
  %v92 = vld [vmem:[%s1 + $0x38] sm:$0xf]
  %v93 = vld [vmem:[%s1 + $0x3c] sm:$0xf]
  %v94 = vld [vmem:[%s2] sm:$0x1]
  %v96 = vperm.slane %v94, 0
  %v162 = vunpack.c.l.b16 %v14
  %v163 = vunpack.c.l.b16 %v15
  %v164 = vunpack.c.l.b16 %v16
  %v165 = vunpack.c.l.b16 %v17
  %v166 = vunpack.c.l.b16 %v18
  %v167 = vunpack.c.l.b16 %v19
  %v168 = vunpack.c.l.b16 %v20
  %v169 = vunpack.c.l.b16 %v21
  %v170 = vunpack.c.l.b16 %v22
  %v171 = vunpack.c.l.b16 %v23
  %v172 = vunpack.c.l.b16 %v24
  %v173 = vunpack.c.l.b16 %v25
  %v174 = vunpack.c.l.b16 %v26
  %v175 = vunpack.c.l.b16 %v27
  %v176 = vunpack.c.l.b16 %v28
  %v177 = vunpack.c.l.b16 %v29
  %v178 = vunpack.c.l.b16 %v30
  %v179 = vunpack.c.l.b16 %v31
  %v180 = vunpack.c.l.b16 %v32
  %v181 = vunpack.c.l.b16 %v33
  %v182 = vunpack.c.l.b16 %v34
  %v183 = vunpack.c.l.b16 %v35
  %v184 = vunpack.c.l.b16 %v36
  %v185 = vunpack.c.l.b16 %v37
  %v186 = vunpack.c.l.b16 %v38
  %v187 = vunpack.c.l.b16 %v39
  %v188 = vunpack.c.l.b16 %v40
  %v189 = vunpack.c.l.b16 %v41
  %v190 = vunpack.c.l.b16 %v42
  %v191 = vunpack.c.l.b16 %v43
  %v192 = vunpack.c.l.b16 %v44
  %v193 = vunpack.c.l.b16 %v45
  %v194 = vunpack.c.l.b16 %v46
  %v195 = vunpack.c.l.b16 %v47
  %v196 = vunpack.c.l.b16 %v48
  %v197 = vunpack.c.l.b16 %v49
  %v198 = vunpack.c.l.b16 %v50
  %v199 = vunpack.c.l.b16 %v51
  %v200 = vunpack.c.l.b16 %v52
  %v201 = vunpack.c.l.b16 %v53
  %v202 = vunpack.c.l.b16 %v54
  %v203 = vunpack.c.l.b16 %v55
  %v204 = vunpack.c.l.b16 %v56
  %v205 = vunpack.c.l.b16 %v57
  %v206 = vunpack.c.l.b16 %v58
  %v207 = vunpack.c.l.b16 %v59
  %v208 = vunpack.c.l.b16 %v60
  %v209 = vunpack.c.l.b16 %v61
  %v210 = vunpack.c.l.b16 %v62
  %v211 = vunpack.c.l.b16 %v63
  %v212 = vunpack.c.l.b16 %v64
  %v213 = vunpack.c.l.b16 %v65
  %v214 = vunpack.c.l.b16 %v66
  %v215 = vunpack.c.l.b16 %v67
  %v216 = vunpack.c.l.b16 %v68
  %v217 = vunpack.c.l.b16 %v69
  %v218 = vunpack.c.l.b16 %v70
  %v219 = vunpack.c.l.b16 %v71
  %v220 = vunpack.c.l.b16 %v72
  %v221 = vunpack.c.l.b16 %v73
  %v222 = vunpack.c.l.b16 %v74
  %v223 = vunpack.c.l.b16 %v75
  %v224 = vunpack.c.l.b16 %v76
  %v225 = vunpack.c.l.b16 %v77
  %v226 = vpack.c.b16 %v163, %v162
  %v227 = vpack.c.b16 %v165, %v164
  %v228 = vpack.c.b16 %v167, %v166
  %v229 = vpack.c.b16 %v169, %v168
  %v230 = vpack.c.b16 %v171, %v170
  %v231 = vpack.c.b16 %v173, %v172
  %v232 = vpack.c.b16 %v175, %v174
  %v233 = vpack.c.b16 %v177, %v176
  %v234 = vpack.c.b16 %v179, %v178
  %v235 = vpack.c.b16 %v181, %v180
  %v236 = vpack.c.b16 %v183, %v182
  %v237 = vpack.c.b16 %v185, %v184
  %v238 = vpack.c.b16 %v187, %v186
  %v239 = vpack.c.b16 %v189, %v188
  %v240 = vpack.c.b16 %v191, %v190
  %v241 = vpack.c.b16 %v193, %v192
  %v242 = vpack.c.b16 %v195, %v194
  %v243 = vpack.c.b16 %v197, %v196
  %v244 = vpack.c.b16 %v199, %v198
  %v245 = vpack.c.b16 %v201, %v200
  %v246 = vpack.c.b16 %v203, %v202
  %v247 = vpack.c.b16 %v205, %v204
  %v248 = vpack.c.b16 %v207, %v206
  %v249 = vpack.c.b16 %v209, %v208
  %v250 = vpack.c.b16 %v211, %v210
  %v251 = vpack.c.b16 %v213, %v212
  %v252 = vpack.c.b16 %v215, %v214
  %v253 = vpack.c.b16 %v217, %v216
  %v254 = vpack.c.b16 %v219, %v218
  %v255 = vpack.c.b16 %v221, %v220
  %v256 = vpack.c.b16 %v223, %v222
  %v257 = vpack.c.b16 %v225, %v224
  %v306 = vunpack.c.l.b16 %v78
  %v307 = vunpack.c.l.b16 %v79
  %v308 = vunpack.c.l.b16 %v80
  %v309 = vunpack.c.l.b16 %v81
  %v310 = vunpack.c.l.b16 %v82
  %v311 = vunpack.c.l.b16 %v83
  %v312 = vunpack.c.l.b16 %v84
  %v313 = vunpack.c.l.b16 %v85
  %v314 = vunpack.c.l.b16 %v86
  %v315 = vunpack.c.l.b16 %v87
  %v316 = vunpack.c.l.b16 %v88
  %v317 = vunpack.c.l.b16 %v89
  %v318 = vunpack.c.l.b16 %v90
  %v319 = vunpack.c.l.b16 %v91
  %v320 = vunpack.c.l.b16 %v92
  %v321 = vunpack.c.l.b16 %v93
  %v322 = vpack.c.b16 %v307, %v306
  %v323 = vpack.c.b16 %v309, %v308
  %v324 = vpack.c.b16 %v311, %v310
  %v325 = vpack.c.b16 %v313, %v312
  %v326 = vpack.c.b16 %v315, %v314
  %v327 = vpack.c.b16 %v317, %v316
  %v328 = vpack.c.b16 %v319, %v318
  %v329 = vpack.c.b16 %v321, %v320
  %338 = vmatpush.bf16.msra.mxu0 %v329
  %339 = vmatpush.bf16.msra.mxu0 %v328
  %340 = vmatpush.bf16.msra.mxu0 %v327
  %341 = vmatpush.bf16.msra.mxu0 %v326
  %342 = vmatpush.bf16.msra.mxu0 %v325
  %343 = vmatpush.bf16.msra.mxu0 %v324
  %344 = vmatpush.bf16.msra.mxu0 %v323
  %345 = vmatpush.bf16.msra.mxu0 %v322
  %346 = vmatmul.bf16.gmra.mxu0 %v226
  %v347 = vpop.f32.mrf.mxu0
  %v348 = vadd.f32 %v96, %v347
  %v349 = vpop.f32.mrf.mxu0
  %v350 = vadd.f32 %v96, %v349
  %351 = vmatmul.bf16.gmra.mxu0 %v227
  %v352 = vpop.f32.mrf.mxu0
  %v353 = vadd.f32 %v96, %v352
  %v354 = vpop.f32.mrf.mxu0
  %v355 = vadd.f32 %v96, %v354
  %356 = vmatmul.bf16.gmra.mxu0 %v228
  %v357 = vpop.f32.mrf.mxu0
  %v358 = vadd.f32 %v96, %v357
  %v359 = vpop.f32.mrf.mxu0
  %v360 = vadd.f32 %v96, %v359
  %361 = vmatmul.bf16.gmra.mxu0 %v229
  %v362 = vpop.f32.mrf.mxu0
  %v363 = vadd.f32 %v96, %v362
  %v364 = vpop.f32.mrf.mxu0
  %v365 = vadd.f32 %v96, %v364
  %366 = vmatmul.bf16.gmra.mxu0 %v230
  %v367 = vpop.f32.mrf.mxu0
  %v368 = vadd.f32 %v96, %v367
  %v369 = vpop.f32.mrf.mxu0
  %v370 = vadd.f32 %v96, %v369
  %371 = vmatmul.bf16.gmra.mxu0 %v231
  %v372 = vpop.f32.mrf.mxu0
  %v373 = vadd.f32 %v96, %v372
  %v374 = vpop.f32.mrf.mxu0
  %v375 = vadd.f32 %v96, %v374
  %376 = vmatmul.bf16.gmra.mxu0 %v232
  %v377 = vpop.f32.mrf.mxu0
  %v378 = vadd.f32 %v96, %v377
  %v379 = vpop.f32.mrf.mxu0
  %v380 = vadd.f32 %v96, %v379
  %381 = vmatmul.bf16.gmra.mxu0 %v233
  %v382 = vpop.f32.mrf.mxu0
  %v383 = vadd.f32 %v96, %v382
  %v384 = vpop.f32.mrf.mxu0
  %v385 = vadd.f32 %v96, %v384
  %386 = vmatmul.bf16.gmra.mxu0 %v234
  %v387 = vpop.f32.mrf.mxu0
  %v388 = vadd.f32 %v96, %v387
  %v389 = vpop.f32.mrf.mxu0
  %v390 = vadd.f32 %v96, %v389
  %391 = vmatmul.bf16.gmra.mxu0 %v235
  %v392 = vpop.f32.mrf.mxu0
  %v393 = vadd.f32 %v96, %v392
  %v394 = vpop.f32.mrf.mxu0
  %v395 = vadd.f32 %v96, %v394
  %396 = vmatmul.bf16.gmra.mxu0 %v236
  %v397 = vpop.f32.mrf.mxu0
  %v398 = vadd.f32 %v96, %v397
  %v399 = vpop.f32.mrf.mxu0
  %v400 = vadd.f32 %v96, %v399
  %401 = vmatmul.bf16.gmra.mxu0 %v237
  %v402 = vpop.f32.mrf.mxu0
  %v403 = vadd.f32 %v96, %v402
  %v404 = vpop.f32.mrf.mxu0
  %v405 = vadd.f32 %v96, %v404
  %406 = vmatmul.bf16.gmra.mxu0 %v238
  %v407 = vpop.f32.mrf.mxu0
  %v408 = vadd.f32 %v96, %v407
  %v409 = vpop.f32.mrf.mxu0
  %v410 = vadd.f32 %v96, %v409
  %411 = vmatmul.bf16.gmra.mxu0 %v239
  %v412 = vpop.f32.mrf.mxu0
  %v413 = vadd.f32 %v96, %v412
  %v414 = vpop.f32.mrf.mxu0
  %v415 = vadd.f32 %v96, %v414
  %416 = vmatmul.bf16.gmra.mxu0 %v240
  %v417 = vpop.f32.mrf.mxu0
  %v418 = vadd.f32 %v96, %v417
  %v419 = vpop.f32.mrf.mxu0
  %v420 = vadd.f32 %v96, %v419
  %421 = vmatmul.bf16.gmra.mxu0 %v241
  %v422 = vpop.f32.mrf.mxu0
  %v423 = vadd.f32 %v96, %v422
  %v424 = vpop.f32.mrf.mxu0
  %v425 = vadd.f32 %v96, %v424
  %426 = vmatmul.bf16.gmra.mxu0 %v242
  %v427 = vpop.f32.mrf.mxu0
  %v428 = vadd.f32 %v96, %v427
  %v429 = vpop.f32.mrf.mxu0
  %v430 = vadd.f32 %v96, %v429
  %431 = vmatmul.bf16.gmra.mxu0 %v243
  %v432 = vpop.f32.mrf.mxu0
  %v433 = vadd.f32 %v96, %v432
  %v434 = vpop.f32.mrf.mxu0
  %v435 = vadd.f32 %v96, %v434
  %436 = vmatmul.bf16.gmra.mxu0 %v244
  %v437 = vpop.f32.mrf.mxu0
  %v438 = vadd.f32 %v96, %v437
  %v439 = vpop.f32.mrf.mxu0
  %v440 = vadd.f32 %v96, %v439
  %441 = vmatmul.bf16.gmra.mxu0 %v245
  %v442 = vpop.f32.mrf.mxu0
  %v443 = vadd.f32 %v96, %v442
  %v444 = vpop.f32.mrf.mxu0
  %v445 = vadd.f32 %v96, %v444
  %446 = vmatmul.bf16.gmra.mxu0 %v246
  %v447 = vpop.f32.mrf.mxu0
  %v448 = vadd.f32 %v96, %v447
  %v449 = vpop.f32.mrf.mxu0
  %v450 = vadd.f32 %v96, %v449
  %451 = vmatmul.bf16.gmra.mxu0 %v247
  %v452 = vpop.f32.mrf.mxu0
  %v453 = vadd.f32 %v96, %v452
  %v454 = vpop.f32.mrf.mxu0
  %v455 = vadd.f32 %v96, %v454
  %456 = vmatmul.bf16.gmra.mxu0 %v248
  %v457 = vpop.f32.mrf.mxu0
  %v458 = vadd.f32 %v96, %v457
  %v459 = vpop.f32.mrf.mxu0
  %v460 = vadd.f32 %v96, %v459
  %461 = vmatmul.bf16.gmra.mxu0 %v249
  %v462 = vpop.f32.mrf.mxu0
  %v463 = vadd.f32 %v96, %v462
  %v464 = vpop.f32.mrf.mxu0
  %v465 = vadd.f32 %v96, %v464
  %466 = vmatmul.bf16.gmra.mxu0 %v250
  %v467 = vpop.f32.mrf.mxu0
  %v468 = vadd.f32 %v96, %v467
  %v469 = vpop.f32.mrf.mxu0
  %v470 = vadd.f32 %v96, %v469
  %471 = vmatmul.bf16.gmra.mxu0 %v251
  %v472 = vpop.f32.mrf.mxu0
  %v473 = vadd.f32 %v96, %v472
  %v474 = vpop.f32.mrf.mxu0
  %v475 = vadd.f32 %v96, %v474
  %476 = vmatmul.bf16.gmra.mxu0 %v252
  %v477 = vpop.f32.mrf.mxu0
  %v478 = vadd.f32 %v96, %v477
  %v479 = vpop.f32.mrf.mxu0
  %v480 = vadd.f32 %v96, %v479
  %481 = vmatmul.bf16.gmra.mxu0 %v253
  %v482 = vpop.f32.mrf.mxu0
  %v483 = vadd.f32 %v96, %v482
  %v484 = vpop.f32.mrf.mxu0
  %v485 = vadd.f32 %v96, %v484
  %486 = vmatmul.bf16.gmra.mxu0 %v254
  %v487 = vpop.f32.mrf.mxu0
  %v488 = vadd.f32 %v96, %v487
  %v489 = vpop.f32.mrf.mxu0
  %v490 = vadd.f32 %v96, %v489
  %491 = vmatmul.bf16.gmra.mxu0 %v255
  %v492 = vpop.f32.mrf.mxu0
  %v493 = vadd.f32 %v96, %v492
  %v494 = vpop.f32.mrf.mxu0
  %v495 = vadd.f32 %v96, %v494
  %496 = vmatmul.bf16.gmra.mxu0 %v256
  %v497 = vpop.f32.mrf.mxu0
  %v498 = vadd.f32 %v96, %v497
  %v499 = vpop.f32.mrf.mxu0
  %v500 = vadd.f32 %v96, %v499
  %501 = vmatmul.bf16.gmra.mxu0 %v257
  %v502 = vpop.f32.mrf.mxu0
  %v503 = vadd.f32 %v96, %v502
  %v504 = vpop.f32.mrf.mxu0
  %v505 = vadd.f32 %v96, %v504
  %506 = vdwg.mxu0
  %v507 = vmul.f32 %v348, 0.2
  %v508 = vmul.f32 %v350, 0.2
  %v509 = vmul.f32 %v353, 0.2
  %v510 = vmul.f32 %v355, 0.2
  %v511 = vmul.f32 %v358, 0.2
  %v512 = vmul.f32 %v360, 0.2
  %v513 = vmul.f32 %v363, 0.2
  %v514 = vmul.f32 %v365, 0.2
  %v515 = vmul.f32 %v368, 0.2
  %v516 = vmul.f32 %v370, 0.2
  %v517 = vmul.f32 %v373, 0.2
  %v518 = vmul.f32 %v375, 0.2
  %v519 = vmul.f32 %v378, 0.2
  %v520 = vmul.f32 %v380, 0.2
  %v521 = vmul.f32 %v383, 0.2
  %v522 = vmul.f32 %v385, 0.2
  %v523 = vmul.f32 %v388, 0.2
  %v524 = vmul.f32 %v390, 0.2
  %v525 = vmul.f32 %v393, 0.2
  %v526 = vmul.f32 %v395, 0.2
  %v527 = vmul.f32 %v398, 0.2
  %v528 = vmul.f32 %v400, 0.2
  %v529 = vmul.f32 %v403, 0.2
  %v530 = vmul.f32 %v405, 0.2
  %v531 = vmul.f32 %v408, 0.2
  %v532 = vmul.f32 %v410, 0.2
  %v533 = vmul.f32 %v413, 0.2
  %v534 = vmul.f32 %v415, 0.2
  %v535 = vmul.f32 %v418, 0.2
  %v536 = vmul.f32 %v420, 0.2
  %v537 = vmul.f32 %v423, 0.2
  %v538 = vmul.f32 %v425, 0.2
  %v539 = vmul.f32 %v428, 0.2
  %v540 = vmul.f32 %v430, 0.2
  %v541 = vmul.f32 %v433, 0.2
  %v542 = vmul.f32 %v435, 0.2
  %v543 = vmul.f32 %v438, 0.2
  %v544 = vmul.f32 %v440, 0.2
  %v545 = vmul.f32 %v443, 0.2
  %v546 = vmul.f32 %v445, 0.2
  %v547 = vmul.f32 %v448, 0.2
  %v548 = vmul.f32 %v450, 0.2
  %v549 = vmul.f32 %v453, 0.2
  %v550 = vmul.f32 %v455, 0.2
  %v551 = vmul.f32 %v458, 0.2
  %v552 = vmul.f32 %v460, 0.2
  %v553 = vmul.f32 %v463, 0.2
  %v554 = vmul.f32 %v465, 0.2
  %v555 = vmul.f32 %v468, 0.2
  %v556 = vmul.f32 %v470, 0.2
  %v557 = vmul.f32 %v473, 0.2
  %v558 = vmul.f32 %v475, 0.2
  %v559 = vmul.f32 %v478, 0.2
  %v560 = vmul.f32 %v480, 0.2
  %v561 = vmul.f32 %v483, 0.2
  %v562 = vmul.f32 %v485, 0.2
  %v563 = vmul.f32 %v488, 0.2
  %v564 = vmul.f32 %v490, 0.2
  %v565 = vmul.f32 %v493, 0.2
  %v566 = vmul.f32 %v495, 0.2
  %v567 = vmul.f32 %v498, 0.2
  %v568 = vmul.f32 %v500, 0.2
  %v569 = vmul.f32 %v503, 0.2
  %v570 = vmul.f32 %v505, 0.2
  %v571 = vmax.f32 %v348, %v507
  %v572 = vmax.f32 %v350, %v508
  %v573 = vmax.f32 %v353, %v509
  %v574 = vmax.f32 %v355, %v510
  %v575 = vmax.f32 %v358, %v511
  %v576 = vmax.f32 %v360, %v512
  %v577 = vmax.f32 %v363, %v513
  %v578 = vmax.f32 %v365, %v514
  %v579 = vmax.f32 %v368, %v515
  %v580 = vmax.f32 %v370, %v516
  %v581 = vmax.f32 %v373, %v517
  %v582 = vmax.f32 %v375, %v518
  %v583 = vmax.f32 %v378, %v519
  %v584 = vmax.f32 %v380, %v520
  %v585 = vmax.f32 %v383, %v521
  %v586 = vmax.f32 %v385, %v522
  %v587 = vmax.f32 %v388, %v523
  %v588 = vmax.f32 %v390, %v524
  %v589 = vmax.f32 %v393, %v525
  %v590 = vmax.f32 %v395, %v526
  %v591 = vmax.f32 %v398, %v527
  %v592 = vmax.f32 %v400, %v528
  %v593 = vmax.f32 %v403, %v529
  %v594 = vmax.f32 %v405, %v530
  %v595 = vmax.f32 %v408, %v531
  %v596 = vmax.f32 %v410, %v532
  %v597 = vmax.f32 %v413, %v533
  %v598 = vmax.f32 %v415, %v534
  %v599 = vmax.f32 %v418, %v535
  %v600 = vmax.f32 %v420, %v536
  %v601 = vmax.f32 %v423, %v537
  %v602 = vmax.f32 %v425, %v538
  %v603 = vmax.f32 %v428, %v539
  %v604 = vmax.f32 %v430, %v540
  %v605 = vmax.f32 %v433, %v541
  %v606 = vmax.f32 %v435, %v542
  %v607 = vmax.f32 %v438, %v543
  %v608 = vmax.f32 %v440, %v544
  %v609 = vmax.f32 %v443, %v545
  %v610 = vmax.f32 %v445, %v546
  %v611 = vmax.f32 %v448, %v547
  %v612 = vmax.f32 %v450, %v548
  %v613 = vmax.f32 %v453, %v549
  %v614 = vmax.f32 %v455, %v550
  %v615 = vmax.f32 %v458, %v551
  %v616 = vmax.f32 %v460, %v552
  %v617 = vmax.f32 %v463, %v553
  %v618 = vmax.f32 %v465, %v554
  %v619 = vmax.f32 %v468, %v555
  %v620 = vmax.f32 %v470, %v556
  %v621 = vmax.f32 %v473, %v557
  %v622 = vmax.f32 %v475, %v558
  %v623 = vmax.f32 %v478, %v559
  %v624 = vmax.f32 %v480, %v560
  %v625 = vmax.f32 %v483, %v561
  %v626 = vmax.f32 %v485, %v562
  %v627 = vmax.f32 %v488, %v563
  %v628 = vmax.f32 %v490, %v564
  %v629 = vmax.f32 %v493, %v565
  %v630 = vmax.f32 %v495, %v566
  %v631 = vmax.f32 %v498, %v567
  %v632 = vmax.f32 %v500, %v568
  %v633 = vmax.f32 %v503, %v569
  %v634 = vmax.f32 %v505, %v570
  %v635 = vpack.c.bf16 %v571, %v571
  %v636 = vpack.c.bf16 %v572, %v572
  %v637 = vpack.c.bf16 %v573, %v573
  %v638 = vpack.c.bf16 %v574, %v574
  %v639 = vpack.c.bf16 %v575, %v575
  %v640 = vpack.c.bf16 %v576, %v576
  %v641 = vpack.c.bf16 %v577, %v577
  %v642 = vpack.c.bf16 %v578, %v578
  %v643 = vpack.c.bf16 %v579, %v579
  %v644 = vpack.c.bf16 %v580, %v580
  %v645 = vpack.c.bf16 %v581, %v581
  %v646 = vpack.c.bf16 %v582, %v582
  %v647 = vpack.c.bf16 %v583, %v583
  %v648 = vpack.c.bf16 %v584, %v584
  %v649 = vpack.c.bf16 %v585, %v585
  %v650 = vpack.c.bf16 %v586, %v586
  %v651 = vpack.c.bf16 %v587, %v587
  %v652 = vpack.c.bf16 %v588, %v588
  %v653 = vpack.c.bf16 %v589, %v589
  %v654 = vpack.c.bf16 %v590, %v590
  %v655 = vpack.c.bf16 %v591, %v591
  %v656 = vpack.c.bf16 %v592, %v592
  %v657 = vpack.c.bf16 %v593, %v593
  %v658 = vpack.c.bf16 %v594, %v594
  %v659 = vpack.c.bf16 %v595, %v595
  %v660 = vpack.c.bf16 %v596, %v596
  %v661 = vpack.c.bf16 %v597, %v597
  %v662 = vpack.c.bf16 %v598, %v598
  %v663 = vpack.c.bf16 %v599, %v599
  %v664 = vpack.c.bf16 %v600, %v600
  %v665 = vpack.c.bf16 %v601, %v601
  %v666 = vpack.c.bf16 %v602, %v602
  %v667 = vpack.c.bf16 %v603, %v603
  %v668 = vpack.c.bf16 %v604, %v604
  %v669 = vpack.c.bf16 %v605, %v605
  %v670 = vpack.c.bf16 %v606, %v606
  %v671 = vpack.c.bf16 %v607, %v607
  %v672 = vpack.c.bf16 %v608, %v608
  %v673 = vpack.c.bf16 %v609, %v609
  %v674 = vpack.c.bf16 %v610, %v610
  %v675 = vpack.c.bf16 %v611, %v611
  %v676 = vpack.c.bf16 %v612, %v612
  %v677 = vpack.c.bf16 %v613, %v613
  %v678 = vpack.c.bf16 %v614, %v614
  %v679 = vpack.c.bf16 %v615, %v615
  %v680 = vpack.c.bf16 %v616, %v616
  %v681 = vpack.c.bf16 %v617, %v617
  %v682 = vpack.c.bf16 %v618, %v618
  %v683 = vpack.c.bf16 %v619, %v619
  %v684 = vpack.c.bf16 %v620, %v620
  %v685 = vpack.c.bf16 %v621, %v621
  %v686 = vpack.c.bf16 %v622, %v622
  %v687 = vpack.c.bf16 %v623, %v623
  %v688 = vpack.c.bf16 %v624, %v624
  %v689 = vpack.c.bf16 %v625, %v625
  %v690 = vpack.c.bf16 %v626, %v626
  %v691 = vpack.c.bf16 %v627, %v627
  %v692 = vpack.c.bf16 %v628, %v628
  %v693 = vpack.c.bf16 %v629, %v629
  %v694 = vpack.c.bf16 %v630, %v630
  %v695 = vpack.c.bf16 %v631, %v631
  %v696 = vpack.c.bf16 %v632, %v632
  %v697 = vpack.c.bf16 %v633, %v633
  %v698 = vpack.c.bf16 %v634, %v634
  %699 = vst [vmem:[%s3] sm:$0xf] %v635
  %700 = vst [vmem:[%s3 + $0x4] sm:$0xf] %v636
  %701 = vst [vmem:[%s3 + $0x8] sm:$0xf] %v637
  %702 = vst [vmem:[%s3 + $0xc] sm:$0xf] %v638
  %703 = vst [vmem:[%s3 + $0x10] sm:$0xf] %v639
  %704 = vst [vmem:[%s3 + $0x14] sm:$0xf] %v640
  %705 = vst [vmem:[%s3 + $0x18] sm:$0xf] %v641
  %706 = vst [vmem:[%s3 + $0x1c] sm:$0xf] %v642
  %707 = vst [vmem:[%s3 + $0x20] sm:$0xf] %v643
  %708 = vst [vmem:[%s3 + $0x24] sm:$0xf] %v644
  %709 = vst [vmem:[%s3 + $0x28] sm:$0xf] %v645
  %710 = vst [vmem:[%s3 + $0x2c] sm:$0xf] %v646
  %711 = vst [vmem:[%s3 + $0x30] sm:$0xf] %v647
  %712 = vst [vmem:[%s3 + $0x34] sm:$0xf] %v648
  %713 = vst [vmem:[%s3 + $0x38] sm:$0xf] %v649
  %714 = vst [vmem:[%s3 + $0x3c] sm:$0xf] %v650
  %715 = vst [vmem:[%s3 + $0x40] sm:$0xf] %v651
  %716 = vst [vmem:[%s3 + $0x44] sm:$0xf] %v652
  %717 = vst [vmem:[%s3 + $0x48] sm:$0xf] %v653
  %718 = vst [vmem:[%s3 + $0x4c] sm:$0xf] %v654
  %719 = vst [vmem:[%s3 + $0x50] sm:$0xf] %v655
  %720 = vst [vmem:[%s3 + $0x54] sm:$0xf] %v656
  %721 = vst [vmem:[%s3 + $0x58] sm:$0xf] %v657
  %722 = vst [vmem:[%s3 + $0x5c] sm:$0xf] %v658
  %723 = vst [vmem:[%s3 + $0x60] sm:$0xf] %v659
  %724 = vst [vmem:[%s3 + $0x64] sm:$0xf] %v660
  %725 = vst [vmem:[%s3 + $0x68] sm:$0xf] %v661
  %726 = vst [vmem:[%s3 + $0x6c] sm:$0xf] %v662
  %727 = vst [vmem:[%s3 + $0x70] sm:$0xf] %v663
  %728 = vst [vmem:[%s3 + $0x74] sm:$0xf] %v664
  %729 = vst [vmem:[%s3 + $0x78] sm:$0xf] %v665
  %730 = vst [vmem:[%s3 + $0x7c] sm:$0xf] %v666
  %731 = vst [vmem:[%s3 + $0x80] sm:$0xf] %v667
  %732 = vst [vmem:[%s3 + $0x84] sm:$0xf] %v668
  %733 = vst [vmem:[%s3 + $0x88] sm:$0xf] %v669
  %734 = vst [vmem:[%s3 + $0x8c] sm:$0xf] %v670
  %735 = vst [vmem:[%s3 + $0x90] sm:$0xf] %v671
  %736 = vst [vmem:[%s3 + $0x94] sm:$0xf] %v672
  %737 = vst [vmem:[%s3 + $0x98] sm:$0xf] %v673
  %738 = vst [vmem:[%s3 + $0x9c] sm:$0xf] %v674
  %739 = vst [vmem:[%s3 + $0xa0] sm:$0xf] %v675
  %740 = vst [vmem:[%s3 + $0xa4] sm:$0xf] %v676
  %741 = vst [vmem:[%s3 + $0xa8] sm:$0xf] %v677
  %742 = vst [vmem:[%s3 + $0xac] sm:$0xf] %v678
  %743 = vst [vmem:[%s3 + $0xb0] sm:$0xf] %v679
  %744 = vst [vmem:[%s3 + $0xb4] sm:$0xf] %v680
  %745 = vst [vmem:[%s3 + $0xb8] sm:$0xf] %v681
  %746 = vst [vmem:[%s3 + $0xbc] sm:$0xf] %v682
  %747 = vst [vmem:[%s3 + $0xc0] sm:$0xf] %v683
  %748 = vst [vmem:[%s3 + $0xc4] sm:$0xf] %v684
  %749 = vst [vmem:[%s3 + $0xc8] sm:$0xf] %v685
  %750 = vst [vmem:[%s3 + $0xcc] sm:$0xf] %v686
  %751 = vst [vmem:[%s3 + $0xd0] sm:$0xf] %v687
  %752 = vst [vmem:[%s3 + $0xd4] sm:$0xf] %v688
  %753 = vst [vmem:[%s3 + $0xd8] sm:$0xf] %v689
  %754 = vst [vmem:[%s3 + $0xdc] sm:$0xf] %v690
  %755 = vst [vmem:[%s3 + $0xe0] sm:$0xf] %v691
  %756 = vst [vmem:[%s3 + $0xe4] sm:$0xf] %v692
  %757 = vst [vmem:[%s3 + $0xe8] sm:$0xf] %v693
  %758 = vst [vmem:[%s3 + $0xec] sm:$0xf] %v694
  %759 = vst [vmem:[%s3 + $0xf0] sm:$0xf] %v695
  %760 = vst [vmem:[%s3 + $0xf4] sm:$0xf] %v696
  %761 = vst [vmem:[%s3 + $0xf8] sm:$0xf] %v697
  %762 = vst [vmem:[%s3 + $0xfc] sm:$0xf] %v698
  // Predicated region
  $region14: #{nlayer_classifier_forward.7} parent=0 // pred_check
    _
  $region15: #{nlayer_classifier_forward.7} parent=0 // pred_check_branch
    %764 = sbr.rel (0) target = $region17
  $region16: #{nlayer_classifier_forward.7} parent=0 // pred_region
    _
  $region17: #{nlayer_classifier_forward.7} parent=0 // pred_fallthru
    _
  // Predicated region
  $region18: #{nlayer_classifier_forward.7} parent=0 // pred_check
    _
  $region19: #{nlayer_classifier_forward.7} parent=0 // pred_check_branch
    %766 = sbr.rel (0) target = $region21
  $region20: #{nlayer_classifier_forward.7} parent=0 // pred_region
    _
  $region21: #{nlayer_classifier_forward.7} parent=0 // pred_fallthru
    _

// kernel: nlayer_classifier_forward.8
$region0: #{nlayer_classifier_forward.8}
  #allocation0 [shape = 'u32[]', space=smem, size = 0x4, offset = 0x4, fixed_abs, tag = 'smem constant byte address 0x4 - core index']
  #allocation1 [shape = 'u32[72,128]{1,0:T(1,128)}', space=vmem, size = 0x9000, scoped, tag = 'internal scratch']
  %s0 = inlined_call_operand.vmem [shape: bf16[128,128], index: 0, kind: input, shape index: {}]
  %s1 = inlined_call_operand.vmem [shape: bf16[128,128], index: 1, kind: input, shape index: {}]
  %s2 = inlined_call_operand.vmem [shape: f32[128,128], index: 2, kind: output, shape index: {0}]
  %s3 = inlined_call_operand.vmem [shape: f32[1,128], index: 3, kind: output, shape index: {1}]
  %s4 = inlined_call_operand.vmem [shape: f32[1,128], index: 4, kind: output, shape index: {2}]
  %5 = xla_tuple %s2, %s3, %s4
  %s6 = sld [smem:[#allocation0]]
  $region38: #{nlayer_classifier_forward.8} parent=0
    _
  %s8 = ssub.s32 1, %s6
  %s9 = scalar_select 0, %s8, %s6
  // Predicated region
  $region2: #{nlayer_classifier_forward.8} parent=0 // pred_check
    _
  $region3: #{nlayer_classifier_forward.8} parent=0 // pred_check_branch
    %11 = sbr.rel (0) target = $region5
  $region4: #{nlayer_classifier_forward.8} parent=0 // pred_region
    _
  $region5: #{nlayer_classifier_forward.8} parent=0 // pred_fallthru
    _
  // Predicated region
  $region6: #{nlayer_classifier_forward.8} parent=0 // pred_check
    _
  $region7: #{nlayer_classifier_forward.8} parent=0 // pred_check_branch
    %13 = sbr.rel (0) target = $region9
  $region8: #{nlayer_classifier_forward.8} parent=0 // pred_region
    _
  $region9: #{nlayer_classifier_forward.8} parent=0 // pred_fallthru
    _
  %v14 = vld [vmem:[%s0] sm:$0xf]
  %v15 = vld [vmem:[%s0 + $0x4] sm:$0xf]
  %v16 = vld [vmem:[%s0 + $0x8] sm:$0xf]
  %v17 = vld [vmem:[%s0 + $0xc] sm:$0xf]
  %v18 = vld [vmem:[%s0 + $0x10] sm:$0xf]
  %v19 = vld [vmem:[%s0 + $0x14] sm:$0xf]
  %v20 = vld [vmem:[%s0 + $0x18] sm:$0xf]
  %v21 = vld [vmem:[%s0 + $0x1c] sm:$0xf]
  %v22 = vld [vmem:[%s0 + $0x20] sm:$0xf]
  %v23 = vld [vmem:[%s0 + $0x24] sm:$0xf]
  %v24 = vld [vmem:[%s0 + $0x28] sm:$0xf]
  %v25 = vld [vmem:[%s0 + $0x2c] sm:$0xf]
  %v26 = vld [vmem:[%s0 + $0x30] sm:$0xf]
  %v27 = vld [vmem:[%s0 + $0x34] sm:$0xf]
  %v28 = vld [vmem:[%s0 + $0x38] sm:$0xf]
  %v29 = vld [vmem:[%s0 + $0x3c] sm:$0xf]
  %v30 = vld [vmem:[%s1] sm:$0xf]
  %v31 = vld [vmem:[%s1 + $0x4] sm:$0xf]
  %v32 = vld [vmem:[%s1 + $0x8] sm:$0xf]
  %v33 = vld [vmem:[%s1 + $0xc] sm:$0xf]
  %v34 = vld [vmem:[%s1 + $0x10] sm:$0xf]
  %v35 = vld [vmem:[%s1 + $0x14] sm:$0xf]
  %v36 = vld [vmem:[%s1 + $0x18] sm:$0xf]
  %v37 = vld [vmem:[%s1 + $0x1c] sm:$0xf]
  %v38 = vld [vmem:[%s1 + $0x20] sm:$0xf]
  %v39 = vld [vmem:[%s1 + $0x24] sm:$0xf]
  %v40 = vld [vmem:[%s1 + $0x28] sm:$0xf]
  %v41 = vld [vmem:[%s1 + $0x2c] sm:$0xf]
  %v42 = vld [vmem:[%s1 + $0x30] sm:$0xf]
  %v43 = vld [vmem:[%s1 + $0x34] sm:$0xf]
  %v44 = vld [vmem:[%s1 + $0x38] sm:$0xf]
  %v45 = vld [vmem:[%s1 + $0x3c] sm:$0xf]
  %v62 = vunpack.c.l.b16 %v14
  %v63 = vunpack.c.l.b16 %v15
  %v64 = vunpack.c.l.b16 %v16
  %v65 = vunpack.c.l.b16 %v17
  %v66 = vunpack.c.l.b16 %v18
  %v67 = vunpack.c.l.b16 %v19
  %v68 = vunpack.c.l.b16 %v20
  %v69 = vunpack.c.l.b16 %v21
  %v70 = vunpack.c.l.b16 %v22
  %v71 = vunpack.c.l.b16 %v23
  %v72 = vunpack.c.l.b16 %v24
  %v73 = vunpack.c.l.b16 %v25
  %v74 = vunpack.c.l.b16 %v26
  %v75 = vunpack.c.l.b16 %v27
  %v76 = vunpack.c.l.b16 %v28
  %v77 = vunpack.c.l.b16 %v29
  %v78 = vpack.c.b16 %v63, %v62
  %v79 = vpack.c.b16 %v65, %v64
  %v80 = vpack.c.b16 %v67, %v66
  %v81 = vpack.c.b16 %v69, %v68
  %v82 = vpack.c.b16 %v71, %v70
  %v83 = vpack.c.b16 %v73, %v72
  %v84 = vpack.c.b16 %v75, %v74
  %v85 = vpack.c.b16 %v77, %v76
  %v110 = vunpack.c.l.b16 %v30
  %v111 = vunpack.c.l.b16 %v31
  %v112 = vunpack.c.l.b16 %v32
  %v113 = vunpack.c.l.b16 %v33
  %v114 = vunpack.c.l.b16 %v34
  %v115 = vunpack.c.l.b16 %v35
  %v116 = vunpack.c.l.b16 %v36
  %v117 = vunpack.c.l.b16 %v37
  %v118 = vunpack.c.l.b16 %v38
  %v119 = vunpack.c.l.b16 %v39
  %v120 = vunpack.c.l.b16 %v40
  %v121 = vunpack.c.l.b16 %v41
  %v122 = vunpack.c.l.b16 %v42
  %v123 = vunpack.c.l.b16 %v43
  %v124 = vunpack.c.l.b16 %v44
  %v125 = vunpack.c.l.b16 %v45
  %v126 = vpack.c.b16 %v111, %v110
  %v127 = vpack.c.b16 %v113, %v112
  %v128 = vpack.c.b16 %v115, %v114
  %v129 = vpack.c.b16 %v117, %v116
  %v130 = vpack.c.b16 %v119, %v118
  %v131 = vpack.c.b16 %v121, %v120
  %v132 = vpack.c.b16 %v123, %v122
  %v133 = vpack.c.b16 %v125, %v124
  %142 = vmatpush.bf16.msra.mxu0 %v133
  %143 = vmatpush.bf16.msra.mxu0 %v132
  %144 = vmatpush.bf16.msra.mxu0 %v131
  %145 = vmatpush.bf16.msra.mxu0 %v130
  %146 = vmatpush.bf16.msra.mxu0 %v129
  %147 = vmatpush.bf16.msra.mxu0 %v128
  %148 = vmatpush.bf16.msra.mxu0 %v127
  %149 = vmatpush.bf16.msra.mxu0 %v126
  %150 = vmatmul.bf16.gmra.mxu0 %v78
  %v151 = vpop.f32.mrf.mxu0
  %v152 = vadd.f32 0.0, %v151
  %v153 = vpop.f32.mrf.mxu0
  %v154 = vadd.f32 0.0, %v153
  %155 = vmatmul.bf16.gmra.mxu0 %v79
  %v156 = vpop.f32.mrf.mxu0
  %v157 = vadd.f32 0.0, %v156
  %v158 = vpop.f32.mrf.mxu0
  %v159 = vadd.f32 0.0, %v158
  %160 = vmatmul.bf16.gmra.mxu0 %v80
  %v161 = vpop.f32.mrf.mxu0
  %v162 = vadd.f32 0.0, %v161
  %v163 = vpop.f32.mrf.mxu0
  %v164 = vadd.f32 0.0, %v163
  %165 = vmatmul.bf16.gmra.mxu0 %v81
  %v166 = vpop.f32.mrf.mxu0
  %v167 = vadd.f32 0.0, %v166
  %v168 = vpop.f32.mrf.mxu0
  %v169 = vadd.f32 0.0, %v168
  %170 = vmatmul.bf16.gmra.mxu0 %v82
  %v171 = vpop.f32.mrf.mxu0
  %v172 = vadd.f32 0.0, %v171
  %v173 = vpop.f32.mrf.mxu0
  %v174 = vadd.f32 0.0, %v173
  %175 = vmatmul.bf16.gmra.mxu0 %v83
  %v176 = vpop.f32.mrf.mxu0
  %v177 = vadd.f32 0.0, %v176
  %v178 = vpop.f32.mrf.mxu0
  %v179 = vadd.f32 0.0, %v178
  %180 = vmatmul.bf16.gmra.mxu0 %v84
  %v181 = vpop.f32.mrf.mxu0
  %v182 = vadd.f32 0.0, %v181
  %v183 = vpop.f32.mrf.mxu0
  %v184 = vadd.f32 0.0, %v183
  %185 = vmatmul.bf16.gmra.mxu0 %v85
  %v186 = vpop.f32.mrf.mxu0
  %v187 = vadd.f32 0.0, %v186
  %v188 = vpop.f32.mrf.mxu0
  %v189 = vadd.f32 0.0, %v188
  %190 = vdwg.mxu0
  %191 = vst [vmem:[%s2] sm:$0xff] %v152
  %192 = vst [vmem:[%s2 + $0x8] sm:$0xff] %v154
  %193 = vst [vmem:[%s2 + $0x10] sm:$0xff] %v157
  %194 = vst [vmem:[%s2 + $0x18] sm:$0xff] %v159
  %195 = vst [vmem:[%s2 + $0x20] sm:$0xff] %v162
  %196 = vst [vmem:[%s2 + $0x28] sm:$0xff] %v164
  %197 = vst [vmem:[%s2 + $0x30] sm:$0xff] %v167
  %198 = vst [vmem:[%s2 + $0x38] sm:$0xff] %v169
  %199 = vst [vmem:[%s2 + $0x40] sm:$0xff] %v172
  %200 = vst [vmem:[%s2 + $0x48] sm:$0xff] %v174
  %201 = vst [vmem:[%s2 + $0x50] sm:$0xff] %v177
  %202 = vst [vmem:[%s2 + $0x58] sm:$0xff] %v179
  %203 = vst [vmem:[%s2 + $0x60] sm:$0xff] %v182
  %204 = vst [vmem:[%s2 + $0x68] sm:$0xff] %v184
  %205 = vst [vmem:[%s2 + $0x70] sm:$0xff] %v187
  %206 = vst [vmem:[%s2 + $0x78] sm:$0xff] %v189
  %p207 = scmp.eq.s32.totalorder 0, 0
  // Predicated region
  $region10: #{nlayer_classifier_forward.8} parent=0 // pred_check
    %p208 = pneg %p207
  $region11: #{nlayer_classifier_forward.8} parent=0 // pred_check_branch
    %210 = sbr.rel (%p208) target = $region13
  $region12: #{nlayer_classifier_forward.8} parent=0 // pred_region
    %211 = vst [vmem:[%s3] sm:$0x1] 0.0
    %212 = vst [vmem:[%s4] sm:$0x1] 0.0
  $region13: #{nlayer_classifier_forward.8} parent=0 // pred_fallthru
    _
  %v213 = vld [vmem:[%s3] sm:$0x1]
  %v214 = vadd.f32 %v152, %v154
  %v215 = vadd.f32 %v214, %v157
  %v216 = vadd.f32 %v215, %v159
  %v217 = vadd.f32 %v216, %v162
  %v218 = vadd.f32 %v217, %v164
  %v219 = vadd.f32 %v218, %v167
  %v220 = vadd.f32 %v219, %v169
  %v221 = vadd.f32 %v220, %v172
  %v222 = vadd.f32 %v221, %v174
  %v223 = vadd.f32 %v222, %v177
  %v224 = vadd.f32 %v223, %v179
  %v225 = vadd.f32 %v224, %v182
  %v226 = vadd.f32 %v225, %v184
  %v227 = vadd.f32 %v226, %v187
  %v228 = vadd.f32 %v227, %v189
  %v229 = vrot.slane %v228, 4
  %v230 = vadd.f32 %v228, %v229
  %v231 = vrot.slane %v230, 2
  %v232 = vadd.f32 %v230, %v231
  %v233 = vrot.slane %v232, 1
  %v234 = vadd.f32 %v232, %v233
  %v235 = vadd.f32 %v213, %v234
  %236 = vst [vmem:[%s3] sm:$0x1] %v235
  %v237 = vld [vmem:[%s4] sm:$0x1]
  %v238 = vmul.f32 %v152, %v152
  %v239 = vmul.f32 %v154, %v154
  %v240 = vmul.f32 %v157, %v157
  %v241 = vmul.f32 %v159, %v159
  %v242 = vmul.f32 %v162, %v162
  %v243 = vmul.f32 %v164, %v164
  %v244 = vmul.f32 %v167, %v167
  %v245 = vmul.f32 %v169, %v169
  %v246 = vmul.f32 %v172, %v172
  %v247 = vmul.f32 %v174, %v174
  %v248 = vmul.f32 %v177, %v177
  %v249 = vmul.f32 %v179, %v179
  %v250 = vmul.f32 %v182, %v182
  %v251 = vmul.f32 %v184, %v184
  %v252 = vmul.f32 %v187, %v187
  %v253 = vmul.f32 %v189, %v189
  %v254 = vadd.f32 %v238, %v239
  %v255 = vadd.f32 %v254, %v240
  %v256 = vadd.f32 %v255, %v241
  %v257 = vadd.f32 %v256, %v242
  %v258 = vadd.f32 %v257, %v243
  %v259 = vadd.f32 %v258, %v244
  %v260 = vadd.f32 %v259, %v245
  %v261 = vadd.f32 %v260, %v246
  %v262 = vadd.f32 %v261, %v247
  %v263 = vadd.f32 %v262, %v248
  %v264 = vadd.f32 %v263, %v249
  %v265 = vadd.f32 %v264, %v250
  %v266 = vadd.f32 %v265, %v251
  %v267 = vadd.f32 %v266, %v252
  %v268 = vadd.f32 %v267, %v253
  %v269 = vrot.slane %v268, 4
  %v270 = vadd.f32 %v268, %v269
  %v271 = vrot.slane %v270, 2
  %v272 = vadd.f32 %v270, %v271
  %v273 = vrot.slane %v272, 1
  %v274 = vadd.f32 %v272, %v273
  %v275 = vadd.f32 %v237, %v274
  %276 = vst [vmem:[%s4] sm:$0x1] %v275
  // Predicated region
  $region14: #{nlayer_classifier_forward.8} parent=0 // pred_check
    _
  $region15: #{nlayer_classifier_forward.8} parent=0 // pred_check_branch
    %278 = sbr.rel (0) target = $region17
  $region16: #{nlayer_classifier_forward.8} parent=0 // pred_region
    _
  $region17: #{nlayer_classifier_forward.8} parent=0 // pred_fallthru
    _
  // Predicated region
  $region18: #{nlayer_classifier_forward.8} parent=0 // pred_check
    _
  $region19: #{nlayer_classifier_forward.8} parent=0 // pred_check_branch
    %280 = sbr.rel (0) target = $region21
  $region20: #{nlayer_classifier_forward.8} parent=0 // pred_region
    _
  $region21: #{nlayer_classifier_forward.8} parent=0 // pred_fallthru
    _
  // Predicated region
  $region22: #{nlayer_classifier_forward.8} parent=0 // pred_check
    _
  $region23: #{nlayer_classifier_forward.8} parent=0 // pred_check_branch
    %282 = sbr.rel (0) target = $region25
  $region24: #{nlayer_classifier_forward.8} parent=0 // pred_region
    _
  $region25: #{nlayer_classifier_forward.8} parent=0 // pred_fallthru
    _
  // Predicated region
  $region26: #{nlayer_classifier_forward.8} parent=0 // pred_check
    _
  $region27: #{nlayer_classifier_forward.8} parent=0 // pred_check_branch
    %284 = sbr.rel (0) target = $region29
  $region28: #{nlayer_classifier_forward.8} parent=0 // pred_region
    _
  $region29: #{nlayer_classifier_forward.8} parent=0 // pred_fallthru
    _
  // Predicated region
  $region30: #{nlayer_classifier_forward.8} parent=0 // pred_check
    _
  $region31: #{nlayer_classifier_forward.8} parent=0 // pred_check_branch
    %286 = sbr.rel (0) target = $region33
  $region32: #{nlayer_classifier_forward.8} parent=0 // pred_region
    _
  $region33: #{nlayer_classifier_forward.8} parent=0 // pred_fallthru
    _
  // Predicated region
  $region34: #{nlayer_classifier_forward.8} parent=0 // pred_check
    _
  $region35: #{nlayer_classifier_forward.8} parent=0 // pred_check_branch
    %288 = sbr.rel (0) target = $region37
  $region36: #{nlayer_classifier_forward.8} parent=0 // pred_region
    _
  $region37: #{nlayer_classifier_forward.8} parent=0 // pred_fallthru
    _

// kernel: nlayer_classifier_forward.9
$region0: #{nlayer_classifier_forward.9}
  #allocation0 [shape = 'u32[]', space=smem, size = 0x4, offset = 0x4, fixed_abs, tag = 'smem constant byte address 0x4 - core index']
  #allocation1 [shape = 'u32[72,128]{1,0:T(1,128)}', space=vmem, size = 0x9000, scoped, tag = 'internal scratch']
  %s0 = inlined_call_operand.vmem [shape: f32[128,128], index: 0, kind: input, shape index: {}]
  %s1 = inlined_call_operand.vmem [shape: f32[1,128], index: 1, kind: input, shape index: {}]
  %s2 = inlined_call_operand.vmem [shape: f32[1,128], index: 2, kind: input, shape index: {}]
  %s3 = inlined_call_operand.vmem [shape: f32[1,128], index: 3, kind: input, shape index: {}]
  %s4 = inlined_call_operand.vmem [shape: f32[1,128], index: 4, kind: input, shape index: {}]
  %s5 = inlined_call_operand.vmem [shape: bf16[128,128], index: 5, kind: output, shape index: {}]
  %s6 = sld [smem:[#allocation0]]
  $region30: #{nlayer_classifier_forward.9} parent=0
    _
  %s8 = ssub.s32 1, %s6
  %s9 = scalar_select 0, %s8, %s6
  // Predicated region
  $region2: #{nlayer_classifier_forward.9} parent=0 // pred_check
    _
  $region3: #{nlayer_classifier_forward.9} parent=0 // pred_check_branch
    %11 = sbr.rel (0) target = $region5
  $region4: #{nlayer_classifier_forward.9} parent=0 // pred_region
    _
  $region5: #{nlayer_classifier_forward.9} parent=0 // pred_fallthru
    _
  // Predicated region
  $region6: #{nlayer_classifier_forward.9} parent=0 // pred_check
    _
  $region7: #{nlayer_classifier_forward.9} parent=0 // pred_check_branch
    %13 = sbr.rel (0) target = $region9
  $region8: #{nlayer_classifier_forward.9} parent=0 // pred_region
    _
  $region9: #{nlayer_classifier_forward.9} parent=0 // pred_fallthru
    _
  // Predicated region
  $region10: #{nlayer_classifier_forward.9} parent=0 // pred_check
    _
  $region11: #{nlayer_classifier_forward.9} parent=0 // pred_check_branch
    %15 = sbr.rel (0) target = $region13
  $region12: #{nlayer_classifier_forward.9} parent=0 // pred_region
    _
  $region13: #{nlayer_classifier_forward.9} parent=0 // pred_fallthru
    _
  // Predicated region
  $region14: #{nlayer_classifier_forward.9} parent=0 // pred_check
    _
  $region15: #{nlayer_classifier_forward.9} parent=0 // pred_check_branch
    %17 = sbr.rel (0) target = $region17
  $region16: #{nlayer_classifier_forward.9} parent=0 // pred_region
    _
  $region17: #{nlayer_classifier_forward.9} parent=0 // pred_fallthru
    _
  // Predicated region
  $region18: #{nlayer_classifier_forward.9} parent=0 // pred_check
    _
  $region19: #{nlayer_classifier_forward.9} parent=0 // pred_check_branch
    %19 = sbr.rel (0) target = $region21
  $region20: #{nlayer_classifier_forward.9} parent=0 // pred_region
    _
  $region21: #{nlayer_classifier_forward.9} parent=0 // pred_fallthru
    _
  %v20 = vld [vmem:[%s1] sm:$0x1]
  %v21 = vmul.f32 %v20, 0.0078125
  %v22 = vld [vmem:[%s2] sm:$0x1]
  %v23 = vmul.f32 %v22, 0.0078125
  %v24 = vmul.f32 %v21, %v21
  %v25 = vsub.f32 %v23, %v24
  %v26 = vld [vmem:[%s3] sm:$0x1]
  %v27 = vadd.f32 %v25, 1e-05
  %v28 = vrsqrt.pop %v27
  %v29 = vmul.f32 %v28, %v27
  %v30 = vmul.f32 %v29, %v28
  %v31 = vmul.f32 0.5, %v30
  %v32 = vsub.f32 1.5, %v31
  %v33 = vmul.f32 %v28, %v32
  %vm34 = vweird.f32 %v27
  %vm35 = vweird.f32 %v28
  %vm36 = vmor %vm34, %vm35
  %v37 = vsel %vm36, %v28, %v33
  %v38 = vmul.f32 %v26, %v37
  %v39 = vld [vmem:[%s4] sm:$0x1]
  %v40 = vmul.f32 %v21, %v38
  %v41 = vsub.f32 %v39, %v40
  %v42 = vld [vmem:[%s0] sm:$0xff]
  %v43 = vld [vmem:[%s0 + $0x8] sm:$0xff]
  %v44 = vld [vmem:[%s0 + $0x10] sm:$0xff]
  %v45 = vld [vmem:[%s0 + $0x18] sm:$0xff]
  %v46 = vld [vmem:[%s0 + $0x20] sm:$0xff]
  %v47 = vld [vmem:[%s0 + $0x28] sm:$0xff]
  %v48 = vld [vmem:[%s0 + $0x30] sm:$0xff]
  %v49 = vld [vmem:[%s0 + $0x38] sm:$0xff]
  %v50 = vld [vmem:[%s0 + $0x40] sm:$0xff]
  %v51 = vld [vmem:[%s0 + $0x48] sm:$0xff]
  %v52 = vld [vmem:[%s0 + $0x50] sm:$0xff]
  %v53 = vld [vmem:[%s0 + $0x58] sm:$0xff]
  %v54 = vld [vmem:[%s0 + $0x60] sm:$0xff]
  %v55 = vld [vmem:[%s0 + $0x68] sm:$0xff]
  %v56 = vld [vmem:[%s0 + $0x70] sm:$0xff]
  %v57 = vld [vmem:[%s0 + $0x78] sm:$0xff]
  %v59 = vperm.slane %v38, 0
  %v61 = vmul.f32 %v42, %v59
  %v62 = vmul.f32 %v43, %v59
  %v63 = vmul.f32 %v44, %v59
  %v64 = vmul.f32 %v45, %v59
  %v65 = vmul.f32 %v46, %v59
  %v66 = vmul.f32 %v47, %v59
  %v67 = vmul.f32 %v48, %v59
  %v68 = vmul.f32 %v49, %v59
  %v69 = vmul.f32 %v50, %v59
  %v70 = vmul.f32 %v51, %v59
  %v71 = vmul.f32 %v52, %v59
  %v72 = vmul.f32 %v53, %v59
  %v73 = vmul.f32 %v54, %v59
  %v74 = vmul.f32 %v55, %v59
  %v75 = vmul.f32 %v56, %v59
  %v76 = vmul.f32 %v57, %v59
  %v78 = vperm.slane %v41, 0
  %v80 = vadd.f32 %v61, %v78
  %v81 = vadd.f32 %v62, %v78
  %v82 = vadd.f32 %v63, %v78
  %v83 = vadd.f32 %v64, %v78
  %v84 = vadd.f32 %v65, %v78
  %v85 = vadd.f32 %v66, %v78
  %v86 = vadd.f32 %v67, %v78
  %v87 = vadd.f32 %v68, %v78
  %v88 = vadd.f32 %v69, %v78
  %v89 = vadd.f32 %v70, %v78
  %v90 = vadd.f32 %v71, %v78
  %v91 = vadd.f32 %v72, %v78
  %v92 = vadd.f32 %v73, %v78
  %v93 = vadd.f32 %v74, %v78
  %v94 = vadd.f32 %v75, %v78
  %v95 = vadd.f32 %v76, %v78
  %v96 = vmul.f32 %v80, 0.2
  %v97 = vmul.f32 %v81, 0.2
  %v98 = vmul.f32 %v82, 0.2
  %v99 = vmul.f32 %v83, 0.2
  %v100 = vmul.f32 %v84, 0.2
  %v101 = vmul.f32 %v85, 0.2
  %v102 = vmul.f32 %v86, 0.2
  %v103 = vmul.f32 %v87, 0.2
  %v104 = vmul.f32 %v88, 0.2
  %v105 = vmul.f32 %v89, 0.2
  %v106 = vmul.f32 %v90, 0.2
  %v107 = vmul.f32 %v91, 0.2
  %v108 = vmul.f32 %v92, 0.2
  %v109 = vmul.f32 %v93, 0.2
  %v110 = vmul.f32 %v94, 0.2
  %v111 = vmul.f32 %v95, 0.2
  %v112 = vmax.f32 %v80, %v96
  %v113 = vmax.f32 %v81, %v97
  %v114 = vmax.f32 %v82, %v98
  %v115 = vmax.f32 %v83, %v99
  %v116 = vmax.f32 %v84, %v100
  %v117 = vmax.f32 %v85, %v101
  %v118 = vmax.f32 %v86, %v102
  %v119 = vmax.f32 %v87, %v103
  %v120 = vmax.f32 %v88, %v104
  %v121 = vmax.f32 %v89, %v105
  %v122 = vmax.f32 %v90, %v106
  %v123 = vmax.f32 %v91, %v107
  %v124 = vmax.f32 %v92, %v108
  %v125 = vmax.f32 %v93, %v109
  %v126 = vmax.f32 %v94, %v110
  %v127 = vmax.f32 %v95, %v111
  %v128 = vpack.c.bf16 %v112, %v112
  %v129 = vpack.c.bf16 %v113, %v113
  %v130 = vpack.c.bf16 %v114, %v114
  %v131 = vpack.c.bf16 %v115, %v115
  %v132 = vpack.c.bf16 %v116, %v116
  %v133 = vpack.c.bf16 %v117, %v117
  %v134 = vpack.c.bf16 %v118, %v118
  %v135 = vpack.c.bf16 %v119, %v119
  %v136 = vpack.c.bf16 %v120, %v120
  %v137 = vpack.c.bf16 %v121, %v121
  %v138 = vpack.c.bf16 %v122, %v122
  %v139 = vpack.c.bf16 %v123, %v123
  %v140 = vpack.c.bf16 %v124, %v124
  %v141 = vpack.c.bf16 %v125, %v125
  %v142 = vpack.c.bf16 %v126, %v126
  %v143 = vpack.c.bf16 %v127, %v127
  %144 = vst [vmem:[%s5] sm:$0xf] %v128
  %145 = vst [vmem:[%s5 + $0x4] sm:$0xf] %v129
  %146 = vst [vmem:[%s5 + $0x8] sm:$0xf] %v130
  %147 = vst [vmem:[%s5 + $0xc] sm:$0xf] %v131
  %148 = vst [vmem:[%s5 + $0x10] sm:$0xf] %v132
  %149 = vst [vmem:[%s5 + $0x14] sm:$0xf] %v133
  %150 = vst [vmem:[%s5 + $0x18] sm:$0xf] %v134
  %151 = vst [vmem:[%s5 + $0x1c] sm:$0xf] %v135
  %152 = vst [vmem:[%s5 + $0x20] sm:$0xf] %v136
  %153 = vst [vmem:[%s5 + $0x24] sm:$0xf] %v137
  %154 = vst [vmem:[%s5 + $0x28] sm:$0xf] %v138
  %155 = vst [vmem:[%s5 + $0x2c] sm:$0xf] %v139
  %156 = vst [vmem:[%s5 + $0x30] sm:$0xf] %v140
  %157 = vst [vmem:[%s5 + $0x34] sm:$0xf] %v141
  %158 = vst [vmem:[%s5 + $0x38] sm:$0xf] %v142
  %159 = vst [vmem:[%s5 + $0x3c] sm:$0xf] %v143
  // Predicated region
  $region22: #{nlayer_classifier_forward.9} parent=0 // pred_check
    _
  $region23: #{nlayer_classifier_forward.9} parent=0 // pred_check_branch
    %161 = sbr.rel (0) target = $region25
  $region24: #{nlayer_classifier_forward.9} parent=0 // pred_region
    _
  $region25: #{nlayer_classifier_forward.9} parent=0 // pred_fallthru
    _
  // Predicated region
  $region26: #{nlayer_classifier_forward.9} parent=0 // pred_check
    _
  $region27: #{nlayer_classifier_forward.9} parent=0 // pred_check_branch
    %163 = sbr.rel (0) target = $region29
  $region28: #{nlayer_classifier_forward.9} parent=0 // pred_region
    _
  $region29: #{nlayer_classifier_forward.9} parent=0 // pred_fallthru
    _

// kernel: nlayer_classifier_forward.10
$region0: #{nlayer_classifier_forward.10}
  #allocation0 [shape = 'u32[]', space=smem, size = 0x4, offset = 0x4, fixed_abs, tag = 'smem constant byte address 0x4 - core index']
  #allocation1 [shape = 'u32[72,128]{1,0:T(1,128)}', space=vmem, size = 0x9000, scoped, tag = 'internal scratch']
  %s0 = inlined_call_operand.vmem [shape: bf16[32,256], index: 0, kind: input, shape index: {}]
  %s1 = inlined_call_operand.vmem [shape: bf16[256,128], index: 1, kind: input, shape index: {}]
  %s2 = inlined_call_operand.vmem [shape: f32[32,128], index: 2, kind: output, shape index: {0}]
  %s3 = inlined_call_operand.vmem [shape: f32[1,128], index: 3, kind: output, shape index: {1}]
  %s4 = inlined_call_operand.vmem [shape: f32[1,128], index: 4, kind: output, shape index: {2}]
  %5 = xla_tuple %s2, %s3, %s4
  %s6 = sld [smem:[#allocation0]]
  $region38: #{nlayer_classifier_forward.10} parent=0
    _
  %s8 = ssub.s32 1, %s6
  %s9 = scalar_select 0, %s8, %s6
  // Predicated region
  $region2: #{nlayer_classifier_forward.10} parent=0 // pred_check
    _
  $region3: #{nlayer_classifier_forward.10} parent=0 // pred_check_branch
    %11 = sbr.rel (0) target = $region5
  $region4: #{nlayer_classifier_forward.10} parent=0 // pred_region
    _
  $region5: #{nlayer_classifier_forward.10} parent=0 // pred_fallthru
    _
  // Predicated region
  $region6: #{nlayer_classifier_forward.10} parent=0 // pred_check
    _
  $region7: #{nlayer_classifier_forward.10} parent=0 // pred_check_branch
    %13 = sbr.rel (0) target = $region9
  $region8: #{nlayer_classifier_forward.10} parent=0 // pred_region
    _
  $region9: #{nlayer_classifier_forward.10} parent=0 // pred_fallthru
    _
  %v14 = vld [vmem:[%s0] sm:$0xff]
  %v15 = vld [vmem:[%s0 + $0x8] sm:$0xff]
  %v16 = vld [vmem:[%s0 + $0x10] sm:$0xff]
  %v17 = vld [vmem:[%s0 + $0x18] sm:$0xff]
  %v18 = vld [vmem:[%s1] sm:$0xf]
  %v19 = vld [vmem:[%s1 + $0x4] sm:$0xf]
  %v20 = vld [vmem:[%s1 + $0x8] sm:$0xf]
  %v21 = vld [vmem:[%s1 + $0xc] sm:$0xf]
  %v22 = vld [vmem:[%s1 + $0x10] sm:$0xf]
  %v23 = vld [vmem:[%s1 + $0x14] sm:$0xf]
  %v24 = vld [vmem:[%s1 + $0x18] sm:$0xf]
  %v25 = vld [vmem:[%s1 + $0x1c] sm:$0xf]
  %v26 = vld [vmem:[%s1 + $0x20] sm:$0xf]
  %v27 = vld [vmem:[%s1 + $0x24] sm:$0xf]
  %v28 = vld [vmem:[%s1 + $0x28] sm:$0xf]
  %v29 = vld [vmem:[%s1 + $0x2c] sm:$0xf]
  %v30 = vld [vmem:[%s1 + $0x30] sm:$0xf]
  %v31 = vld [vmem:[%s1 + $0x34] sm:$0xf]
  %v32 = vld [vmem:[%s1 + $0x38] sm:$0xf]
  %v33 = vld [vmem:[%s1 + $0x3c] sm:$0xf]
  %v34 = vld [vmem:[%s1 + $0x40] sm:$0xf]
  %v35 = vld [vmem:[%s1 + $0x44] sm:$0xf]
  %v36 = vld [vmem:[%s1 + $0x48] sm:$0xf]
  %v37 = vld [vmem:[%s1 + $0x4c] sm:$0xf]
  %v38 = vld [vmem:[%s1 + $0x50] sm:$0xf]
  %v39 = vld [vmem:[%s1 + $0x54] sm:$0xf]
  %v40 = vld [vmem:[%s1 + $0x58] sm:$0xf]
  %v41 = vld [vmem:[%s1 + $0x5c] sm:$0xf]
  %v42 = vld [vmem:[%s1 + $0x60] sm:$0xf]
  %v43 = vld [vmem:[%s1 + $0x64] sm:$0xf]
  %v44 = vld [vmem:[%s1 + $0x68] sm:$0xf]
  %v45 = vld [vmem:[%s1 + $0x6c] sm:$0xf]
  %v46 = vld [vmem:[%s1 + $0x70] sm:$0xf]
  %v47 = vld [vmem:[%s1 + $0x74] sm:$0xf]
  %v48 = vld [vmem:[%s1 + $0x78] sm:$0xf]
  %v49 = vld [vmem:[%s1 + $0x7c] sm:$0xf]
  %v54 = vunpack.c.l.b16 %v14
  %v55 = vunpack.c.h.b16 %v14
  %v56 = vunpack.c.l.b16 %v15
  %v57 = vunpack.c.h.b16 %v15
  %v58 = vunpack.c.l.b16 %v16
  %v59 = vunpack.c.h.b16 %v16
  %v60 = vunpack.c.l.b16 %v17
  %v61 = vunpack.c.h.b16 %v17
  %v62 = vpack.c.b16 %v56, %v54
  %v63 = vpack.c.b16 %v57, %v55
  %v64 = vpack.c.b16 %v60, %v58
  %v65 = vpack.c.b16 %v61, %v59
  %v102 = vunpack.c.l.b16 %v18
  %v103 = vunpack.c.l.b16 %v19
  %v104 = vunpack.c.l.b16 %v20
  %v105 = vunpack.c.l.b16 %v21
  %v106 = vunpack.c.l.b16 %v22
  %v107 = vunpack.c.l.b16 %v23
  %v108 = vunpack.c.l.b16 %v24
  %v109 = vunpack.c.l.b16 %v25
  %v110 = vunpack.c.l.b16 %v26
  %v111 = vunpack.c.l.b16 %v27
  %v112 = vunpack.c.l.b16 %v28
  %v113 = vunpack.c.l.b16 %v29
  %v114 = vunpack.c.l.b16 %v30
  %v115 = vunpack.c.l.b16 %v31
  %v116 = vunpack.c.l.b16 %v32
  %v117 = vunpack.c.l.b16 %v33
  %v118 = vunpack.c.l.b16 %v34
  %v119 = vunpack.c.l.b16 %v35
  %v120 = vunpack.c.l.b16 %v36
  %v121 = vunpack.c.l.b16 %v37
  %v122 = vunpack.c.l.b16 %v38
  %v123 = vunpack.c.l.b16 %v39
  %v124 = vunpack.c.l.b16 %v40
  %v125 = vunpack.c.l.b16 %v41
  %v126 = vunpack.c.l.b16 %v42
  %v127 = vunpack.c.l.b16 %v43
  %v128 = vunpack.c.l.b16 %v44
  %v129 = vunpack.c.l.b16 %v45
  %v130 = vunpack.c.l.b16 %v46
  %v131 = vunpack.c.l.b16 %v47
  %v132 = vunpack.c.l.b16 %v48
  %v133 = vunpack.c.l.b16 %v49
  %v134 = vpack.c.b16 %v103, %v102
  %v135 = vpack.c.b16 %v105, %v104
  %v136 = vpack.c.b16 %v107, %v106
  %v137 = vpack.c.b16 %v109, %v108
  %v138 = vpack.c.b16 %v111, %v110
  %v139 = vpack.c.b16 %v113, %v112
  %v140 = vpack.c.b16 %v115, %v114
  %v141 = vpack.c.b16 %v117, %v116
  %v142 = vpack.c.b16 %v119, %v118
  %v143 = vpack.c.b16 %v121, %v120
  %v144 = vpack.c.b16 %v123, %v122
  %v145 = vpack.c.b16 %v125, %v124
  %v146 = vpack.c.b16 %v127, %v126
  %v147 = vpack.c.b16 %v129, %v128
  %v148 = vpack.c.b16 %v131, %v130
  %v149 = vpack.c.b16 %v133, %v132
  %166 = vmatpush.bf16.msra.mxu0 %v141
  %167 = vmatpush.bf16.msra.mxu0 %v140
  %168 = vmatpush.bf16.msra.mxu0 %v139
  %169 = vmatpush.bf16.msra.mxu0 %v138
  %170 = vmatpush.bf16.msra.mxu0 %v137
  %171 = vmatpush.bf16.msra.mxu0 %v136
  %172 = vmatpush.bf16.msra.mxu0 %v135
  %173 = vmatpush.bf16.msra.mxu0 %v134
  %174 = vmatmul.bf16.gmra.mxu0 %v62
  %v175 = vpop.f32.mrf.mxu0
  %v176 = vadd.f32 0.0, %v175
  %v177 = vpop.f32.mrf.mxu0
  %v178 = vadd.f32 0.0, %v177
  %179 = vmatmul.bf16.gmra.mxu0 %v64
  %v180 = vpop.f32.mrf.mxu0
  %v181 = vadd.f32 0.0, %v180
  %v182 = vpop.f32.mrf.mxu0
  %v183 = vadd.f32 0.0, %v182
  %184 = vdwg.mxu0
  %185 = vmatpush.bf16.msra.mxu0 %v149
  %186 = vmatpush.bf16.msra.mxu0 %v148
  %187 = vmatpush.bf16.msra.mxu0 %v147
  %188 = vmatpush.bf16.msra.mxu0 %v146
  %189 = vmatpush.bf16.msra.mxu0 %v145
  %190 = vmatpush.bf16.msra.mxu0 %v144
  %191 = vmatpush.bf16.msra.mxu0 %v143
  %192 = vmatpush.bf16.msra.mxu0 %v142
  %193 = vmatmul.bf16.gmra.mxu0 %v63
  %v194 = vpop.f32.mrf.mxu0
  %v195 = vadd.f32 %v176, %v194
  %v196 = vpop.f32.mrf.mxu0
  %v197 = vadd.f32 %v178, %v196
  %198 = vmatmul.bf16.gmra.mxu0 %v65
  %v199 = vpop.f32.mrf.mxu0
  %v200 = vadd.f32 %v181, %v199
  %v201 = vpop.f32.mrf.mxu0
  %v202 = vadd.f32 %v183, %v201
  %203 = vdwg.mxu0
  %204 = vst [vmem:[%s2] sm:$0xff] %v195
  %205 = vst [vmem:[%s2 + $0x8] sm:$0xff] %v197
  %206 = vst [vmem:[%s2 + $0x10] sm:$0xff] %v200
  %207 = vst [vmem:[%s2 + $0x18] sm:$0xff] %v202
  %p208 = scmp.eq.s32.totalorder 0, 0
  // Predicated region
  $region10: #{nlayer_classifier_forward.10} parent=0 // pred_check
    %p209 = pneg %p208
  $region11: #{nlayer_classifier_forward.10} parent=0 // pred_check_branch
    %211 = sbr.rel (%p209) target = $region13
  $region12: #{nlayer_classifier_forward.10} parent=0 // pred_region
    %212 = vst [vmem:[%s3] sm:$0x1] 0.0
    %213 = vst [vmem:[%s4] sm:$0x1] 0.0
  $region13: #{nlayer_classifier_forward.10} parent=0 // pred_fallthru
    _
  %v214 = vld [vmem:[%s3] sm:$0x1]
  %v215 = vadd.f32 %v195, %v197
  %v216 = vadd.f32 %v215, %v200
  %v217 = vadd.f32 %v216, %v202
  %v218 = vrot.slane %v217, 4
  %v219 = vadd.f32 %v217, %v218
  %v220 = vrot.slane %v219, 2
  %v221 = vadd.f32 %v219, %v220
  %v222 = vrot.slane %v221, 1
  %v223 = vadd.f32 %v221, %v222
  %v224 = vadd.f32 %v214, %v223
  %225 = vst [vmem:[%s3] sm:$0x1] %v224
  %v226 = vld [vmem:[%s4] sm:$0x1]
  %v227 = vmul.f32 %v195, %v195
  %v228 = vmul.f32 %v197, %v197
  %v229 = vmul.f32 %v200, %v200
  %v230 = vmul.f32 %v202, %v202
  %v231 = vadd.f32 %v227, %v228
  %v232 = vadd.f32 %v231, %v229
  %v233 = vadd.f32 %v232, %v230
  %v234 = vrot.slane %v233, 4
  %v235 = vadd.f32 %v233, %v234
  %v236 = vrot.slane %v235, 2
  %v237 = vadd.f32 %v235, %v236
  %v238 = vrot.slane %v237, 1
  %v239 = vadd.f32 %v237, %v238
  %v240 = vadd.f32 %v226, %v239
  %241 = vst [vmem:[%s4] sm:$0x1] %v240
  // Predicated region
  $region14: #{nlayer_classifier_forward.10} parent=0 // pred_check
    _
  $region15: #{nlayer_classifier_forward.10} parent=0 // pred_check_branch
    %243 = sbr.rel (0) target = $region17
  $region16: #{nlayer_classifier_forward.10} parent=0 // pred_region
    _
  $region17: #{nlayer_classifier_forward.10} parent=0 // pred_fallthru
    _
  // Predicated region
  $region18: #{nlayer_classifier_forward.10} parent=0 // pred_check
    _
  $region19: #{nlayer_classifier_forward.10} parent=0 // pred_check_branch
    %245 = sbr.rel (0) target = $region21
  $region20: #{nlayer_classifier_forward.10} parent=0 // pred_region
    _
  $region21: #{nlayer_classifier_forward.10} parent=0 // pred_fallthru
    _
  // Predicated region
  $region22: #{nlayer_classifier_forward.10} parent=0 // pred_check
    _
  $region23: #{nlayer_classifier_forward.10} parent=0 // pred_check_branch
    %247 = sbr.rel (0) target = $region25
  $region24: #{nlayer_classifier_forward.10} parent=0 // pred_region
    _
  $region25: #{nlayer_classifier_forward.10} parent=0 // pred_fallthru
    _
  // Predicated region
  $region26: #{nlayer_classifier_forward.10} parent=0 // pred_check
    _
  $region27: #{nlayer_classifier_forward.10} parent=0 // pred_check_branch
    %249 = sbr.rel (0) target = $region29
  $region28: #{nlayer_classifier_forward.10} parent=0 // pred_region
    _
  $region29: #{nlayer_classifier_forward.10} parent=0 // pred_fallthru
    _
  // Predicated region
  $region30: #{nlayer_classifier_forward.10} parent=0 // pred_check
    _
  $region31: #{nlayer_classifier_forward.10} parent=0 // pred_check_branch
    %251 = sbr.rel (0) target = $region33
  $region32: #{nlayer_classifier_forward.10} parent=0 // pred_region
    _
  $region33: #{nlayer_classifier_forward.10} parent=0 // pred_fallthru
    _
  // Predicated region
  $region34: #{nlayer_classifier_forward.10} parent=0 // pred_check
    _
  $region35: #{nlayer_classifier_forward.10} parent=0 // pred_check_branch
    %253 = sbr.rel (0) target = $region37
  $region36: #{nlayer_classifier_forward.10} parent=0 // pred_region
    _
  $region37: #{nlayer_classifier_forward.10} parent=0 // pred_fallthru
    _

// kernel: nlayer_classifier_forward.11
$region0: #{nlayer_classifier_forward.11}
  #allocation0 [shape = 'u32[]', space=smem, size = 0x4, offset = 0x4, fixed_abs, tag = 'smem constant byte address 0x4 - core index']
  #allocation1 [shape = 'u32[72,128]{1,0:T(1,128)}', space=vmem, size = 0x9000, scoped, tag = 'internal scratch']
  %s0 = inlined_call_operand.vmem [shape: f32[32,128], index: 0, kind: input, shape index: {}]
  %s1 = inlined_call_operand.vmem [shape: f32[1,128], index: 1, kind: input, shape index: {}]
  %s2 = inlined_call_operand.vmem [shape: f32[1,128], index: 2, kind: input, shape index: {}]
  %s3 = inlined_call_operand.vmem [shape: f32[1,128], index: 3, kind: input, shape index: {}]
  %s4 = inlined_call_operand.vmem [shape: f32[1,128], index: 4, kind: input, shape index: {}]
  %s5 = inlined_call_operand.vmem [shape: bf16[32,128], index: 5, kind: output, shape index: {}]
  %s6 = sld [smem:[#allocation0]]
  $region30: #{nlayer_classifier_forward.11} parent=0
    _
  %s8 = ssub.s32 1, %s6
  %s9 = scalar_select 0, %s8, %s6
  // Predicated region
  $region2: #{nlayer_classifier_forward.11} parent=0 // pred_check
    _
  $region3: #{nlayer_classifier_forward.11} parent=0 // pred_check_branch
    %11 = sbr.rel (0) target = $region5
  $region4: #{nlayer_classifier_forward.11} parent=0 // pred_region
    _
  $region5: #{nlayer_classifier_forward.11} parent=0 // pred_fallthru
    _
  // Predicated region
  $region6: #{nlayer_classifier_forward.11} parent=0 // pred_check
    _
  $region7: #{nlayer_classifier_forward.11} parent=0 // pred_check_branch
    %13 = sbr.rel (0) target = $region9
  $region8: #{nlayer_classifier_forward.11} parent=0 // pred_region
    _
  $region9: #{nlayer_classifier_forward.11} parent=0 // pred_fallthru
    _
  // Predicated region
  $region10: #{nlayer_classifier_forward.11} parent=0 // pred_check
    _
  $region11: #{nlayer_classifier_forward.11} parent=0 // pred_check_branch
    %15 = sbr.rel (0) target = $region13
  $region12: #{nlayer_classifier_forward.11} parent=0 // pred_region
    _
  $region13: #{nlayer_classifier_forward.11} parent=0 // pred_fallthru
    _
  // Predicated region
  $region14: #{nlayer_classifier_forward.11} parent=0 // pred_check
    _
  $region15: #{nlayer_classifier_forward.11} parent=0 // pred_check_branch
    %17 = sbr.rel (0) target = $region17
  $region16: #{nlayer_classifier_forward.11} parent=0 // pred_region
    _
  $region17: #{nlayer_classifier_forward.11} parent=0 // pred_fallthru
    _
  // Predicated region
  $region18: #{nlayer_classifier_forward.11} parent=0 // pred_check
    _
  $region19: #{nlayer_classifier_forward.11} parent=0 // pred_check_branch
    %19 = sbr.rel (0) target = $region21
  $region20: #{nlayer_classifier_forward.11} parent=0 // pred_region
    _
  $region21: #{nlayer_classifier_forward.11} parent=0 // pred_fallthru
    _
  %v20 = vld [vmem:[%s1] sm:$0x1]
  %v21 = vmul.f32 %v20, 0.03125
  %v22 = vld [vmem:[%s2] sm:$0x1]
  %v23 = vmul.f32 %v22, 0.03125
  %v24 = vmul.f32 %v21, %v21
  %v25 = vsub.f32 %v23, %v24
  %v26 = vld [vmem:[%s3] sm:$0x1]
  %v27 = vadd.f32 %v25, 1e-05
  %v28 = vrsqrt.pop %v27
  %v29 = vmul.f32 %v28, %v27
  %v30 = vmul.f32 %v29, %v28
  %v31 = vmul.f32 0.5, %v30
  %v32 = vsub.f32 1.5, %v31
  %v33 = vmul.f32 %v28, %v32
  %vm34 = vweird.f32 %v27
  %vm35 = vweird.f32 %v28
  %vm36 = vmor %vm34, %vm35
  %v37 = vsel %vm36, %v28, %v33
  %v38 = vmul.f32 %v26, %v37
  %v39 = vld [vmem:[%s4] sm:$0x1]
  %v40 = vmul.f32 %v21, %v38
  %v41 = vsub.f32 %v39, %v40
  %v42 = vld [vmem:[%s0] sm:$0xff]
  %v43 = vld [vmem:[%s0 + $0x8] sm:$0xff]
  %v44 = vld [vmem:[%s0 + $0x10] sm:$0xff]
  %v45 = vld [vmem:[%s0 + $0x18] sm:$0xff]
  %v47 = vperm.slane %v38, 0
  %v49 = vmul.f32 %v42, %v47
  %v50 = vmul.f32 %v43, %v47
  %v51 = vmul.f32 %v44, %v47
  %v52 = vmul.f32 %v45, %v47
  %v54 = vperm.slane %v41, 0
  %v56 = vadd.f32 %v49, %v54
  %v57 = vadd.f32 %v50, %v54
  %v58 = vadd.f32 %v51, %v54
  %v59 = vadd.f32 %v52, %v54
  %v60 = vmul.f32 %v56, 0.2
  %v61 = vmul.f32 %v57, 0.2
  %v62 = vmul.f32 %v58, 0.2
  %v63 = vmul.f32 %v59, 0.2
  %v64 = vmax.f32 %v56, %v60
  %v65 = vmax.f32 %v57, %v61
  %v66 = vmax.f32 %v58, %v62
  %v67 = vmax.f32 %v59, %v63
  %v68 = vpack.c.bf16 %v64, %v64
  %v69 = vpack.c.bf16 %v65, %v65
  %v70 = vpack.c.bf16 %v66, %v66
  %v71 = vpack.c.bf16 %v67, %v67
  %72 = vst [vmem:[%s5] sm:$0xf] %v68
  %73 = vst [vmem:[%s5 + $0x4] sm:$0xf] %v69
  %74 = vst [vmem:[%s5 + $0x8] sm:$0xf] %v70
  %75 = vst [vmem:[%s5 + $0xc] sm:$0xf] %v71
  // Predicated region
  $region22: #{nlayer_classifier_forward.11} parent=0 // pred_check
    _
  $region23: #{nlayer_classifier_forward.11} parent=0 // pred_check_branch
    %77 = sbr.rel (0) target = $region25
  $region24: #{nlayer_classifier_forward.11} parent=0 // pred_region
    _
  $region25: #{nlayer_classifier_forward.11} parent=0 // pred_fallthru
    _
  // Predicated region
  $region26: #{nlayer_classifier_forward.11} parent=0 // pred_check
    _
  $region27: #{nlayer_classifier_forward.11} parent=0 // pred_check_branch
    %79 = sbr.rel (0) target = $region29
  $region28: #{nlayer_classifier_forward.11} parent=0 // pred_region
    _
  $region29: #{nlayer_classifier_forward.11} parent=0 // pred_fallthru
    _

// kernel: nlayer_classifier_forward.13
$region0: #{nlayer_classifier_forward.13}
  #allocation0 [shape = 'u32[]', space=smem, size = 0x4, offset = 0x4, fixed_abs, tag = 'smem constant byte address 0x4 - core index']
  #allocation1 [shape = 'u32[72,128]{1,0:T(1,128)}', space=vmem, size = 0x9000, scoped, tag = 'internal scratch']
  %s0 = inlined_call_operand.vmem [shape: f32[2,9,128], index: 0, kind: input, shape index: {}]
  %s1 = inlined_call_operand.vmem [shape: f32[1,128], index: 1, kind: input, shape index: {}]
  %s2 = inlined_call_operand.vmem [shape: f32[1,128], index: 2, kind: input, shape index: {}]
  %s3 = inlined_call_operand.vmem [shape: f32[1,128], index: 3, kind: input, shape index: {}]
  %s4 = inlined_call_operand.vmem [shape: f32[1,128], index: 4, kind: input, shape index: {}]
  %s5 = inlined_call_operand.vmem [shape: f32[128,128], index: 5, kind: input, shape index: {}]
  %s6 = inlined_call_operand.vmem [shape: f32[1,128], index: 6, kind: input, shape index: {}]
  %s7 = inlined_call_operand.hbm [shape: f32[2,1,128], index: 7, kind: output, shape index: {}]
  %s8 = sld [smem:[#allocation0]]
  $region61: #{nlayer_classifier_forward.13} parent=0
    _
  %s10 = ssub.s32 1, %s8
  %s11 = scalar_select 0, %s10, %s8
  $region1: #{nlayer_classifier_forward.13} parent=0
    #allocation2 [shape = 'u8[1024]{0}', space=vmem, size = 0x400, scoped, tag = 'output window, operand 0']
    #allocation3 [shape = 's32[2]{0}', space=sflag, size = 0x8, scoped, tag = 'scoped memory for nlayer_classifier_forward.13']
    %12 = vsyncpa [#allocation3], 0
    %s13 = scalar_lea.sflag [#allocation3], 1
    %14 = vsyncpa %s13, 0
    loop: start=0, step=1, limit=4
    $region2: #{nlayer_classifier_forward.13} parent=1 // loop_pre_header
      _
    $region3: #{nlayer_classifier_forward.13} parent=1 // loop_header
      %s16 = sphi 0, %s20
      %p17 = scmp.ge.s32.totalorder %s16, 4
      %s26 = sphi 0, %s28
      %s29 = sphi 0, %s26
      %s30 = sphi 0, %s29
      %s46 = sphi 0, %s30
      %s50 = sphi 0, %s50
      %s52 = sphi 0, %s50
      %s53 = sphi 0, %s52
      %s67 = sphi 0, %s53
      %s71 = sphi 0, %s71
      %s73 = sphi 0, %s71
      %s74 = sphi 0, %s73
      %s88 = sphi 0, %s74
      %s92 = sphi 0, %s92
      %s94 = sphi 0, %s92
      %s95 = sphi 0, %s94
      %s109 = sphi 0, %s95
      %s113 = sphi 0, %s113
      %s115 = sphi 0, %s113
      %s116 = sphi 0, %s115
      %s130 = sphi 0, %s116
      %s134 = sphi 0, %s134
      %s136 = sphi 0, %s134
      %s137 = sphi 0, %s136
      %s151 = sphi 0, %s137
      %s155 = sphi 0, %s155
      %s157 = sphi 0, %s155
      %s158 = sphi 0, %s157
      %s172 = sphi 0, %s158
      %s178 = sphi 0, %s180
      %s181 = sphi 0, %s178
      %s182 = sphi 0, %s181
      %s198 = sphi 0, %s182
    $region4: #{nlayer_classifier_forward.13} parent=1 // loop_header_branch
      %19 = sbr.rel (%p17) target = $region8
    $region5: #{nlayer_classifier_forward.13} parent=1 // loop_body
      %s21 = ssub.s32 %s16, 1
      %s22 = ssub.s32 %s16, 2
      %s23 = sadd.s32 %s16, 1
      %s24 = ssub.s32 %s16, %s23
      %p25 = scmp.eq.s32.totalorder %s24, 0
      %s27 = sadd.s32 %s26, 1
      %s28 = scalar_select %p25, %s26, %s27
      %p31 = pneg %p25
      %p32 = scmp.eq.s32.totalorder %s16, 1
      %p33 = por %p31, %p32
      %p34 = scmp.ne.s32.totalorder %s26, %s29
      %p35 = scmp.eq.s32.totalorder %s16, 0
      %p36 = por %p34, %p35
      %p37 = scmp.ne.s32.totalorder %s26, %s29
      %p38 = scmp.eq.s32.totalorder %s21, 1
      %p39 = por %p37, %p38
      %p40 = scmp.ne.s32.totalorder %s29, %s30
      %p41 = scmp.eq.s32.totalorder %s21, 0
      %p42 = por %p40, %p41
      %p43 = scmp.ne.s32.totalorder %s29, %s30
      %p44 = scmp.eq.s32.totalorder %s22, 1
      %p45 = por %p43, %p44
      %p47 = scmp.ne.s32.totalorder %s30, %s46
      %p48 = scmp.eq.s32.totalorder %s22, 0
      %p49 = por %p47, %p48
      %s51 = sadd.s32 %s50, 1
      %p54 = scmp.eq.s32.totalorder %s16, 1
      %p55 = scmp.ne.s32.totalorder %s50, %s52
      %p56 = scmp.eq.s32.totalorder %s16, 0
      %p57 = por %p55, %p56
      %p58 = scmp.ne.s32.totalorder %s50, %s52
      %p59 = scmp.eq.s32.totalorder %s21, 1
      %p60 = por %p58, %p59
      %p61 = scmp.ne.s32.totalorder %s52, %s53
      %p62 = scmp.eq.s32.totalorder %s21, 0
      %p63 = por %p61, %p62
      %p64 = scmp.ne.s32.totalorder %s52, %s53
      %p65 = scmp.eq.s32.totalorder %s22, 1
      %p66 = por %p64, %p65
      %p68 = scmp.ne.s32.totalorder %s53, %s67
      %p69 = scmp.eq.s32.totalorder %s22, 0
      %p70 = por %p68, %p69
      %s72 = sadd.s32 %s71, 1
      %p75 = scmp.eq.s32.totalorder %s16, 1
      %p76 = scmp.ne.s32.totalorder %s71, %s73
      %p77 = scmp.eq.s32.totalorder %s16, 0
      %p78 = por %p76, %p77
      %p79 = scmp.ne.s32.totalorder %s71, %s73
      %p80 = scmp.eq.s32.totalorder %s21, 1
      %p81 = por %p79, %p80
      %p82 = scmp.ne.s32.totalorder %s73, %s74
      %p83 = scmp.eq.s32.totalorder %s21, 0
      %p84 = por %p82, %p83
      %p85 = scmp.ne.s32.totalorder %s73, %s74
      %p86 = scmp.eq.s32.totalorder %s22, 1
      %p87 = por %p85, %p86
      %p89 = scmp.ne.s32.totalorder %s74, %s88
      %p90 = scmp.eq.s32.totalorder %s22, 0
      %p91 = por %p89, %p90
      %s93 = sadd.s32 %s92, 1
      %p96 = scmp.eq.s32.totalorder %s16, 1
      %p97 = scmp.ne.s32.totalorder %s92, %s94
      %p98 = scmp.eq.s32.totalorder %s16, 0
      %p99 = por %p97, %p98
      %p100 = scmp.ne.s32.totalorder %s92, %s94
      %p101 = scmp.eq.s32.totalorder %s21, 1
      %p102 = por %p100, %p101
      %p103 = scmp.ne.s32.totalorder %s94, %s95
      %p104 = scmp.eq.s32.totalorder %s21, 0
      %p105 = por %p103, %p104
      %p106 = scmp.ne.s32.totalorder %s94, %s95
      %p107 = scmp.eq.s32.totalorder %s22, 1
      %p108 = por %p106, %p107
      %p110 = scmp.ne.s32.totalorder %s95, %s109
      %p111 = scmp.eq.s32.totalorder %s22, 0
      %p112 = por %p110, %p111
      %s114 = sadd.s32 %s113, 1
      %p117 = scmp.eq.s32.totalorder %s16, 1
      %p118 = scmp.ne.s32.totalorder %s113, %s115
      %p119 = scmp.eq.s32.totalorder %s16, 0
      %p120 = por %p118, %p119
      %p121 = scmp.ne.s32.totalorder %s113, %s115
      %p122 = scmp.eq.s32.totalorder %s21, 1
      %p123 = por %p121, %p122
      %p124 = scmp.ne.s32.totalorder %s115, %s116
      %p125 = scmp.eq.s32.totalorder %s21, 0
      %p126 = por %p124, %p125
      %p127 = scmp.ne.s32.totalorder %s115, %s116
      %p128 = scmp.eq.s32.totalorder %s22, 1
      %p129 = por %p127, %p128
      %p131 = scmp.ne.s32.totalorder %s116, %s130
      %p132 = scmp.eq.s32.totalorder %s22, 0
      %p133 = por %p131, %p132
      %s135 = sadd.s32 %s134, 1
      %p138 = scmp.eq.s32.totalorder %s16, 1
      %p139 = scmp.ne.s32.totalorder %s134, %s136
      %p140 = scmp.eq.s32.totalorder %s16, 0
      %p141 = por %p139, %p140
      %p142 = scmp.ne.s32.totalorder %s134, %s136
      %p143 = scmp.eq.s32.totalorder %s21, 1
      %p144 = por %p142, %p143
      %p145 = scmp.ne.s32.totalorder %s136, %s137
      %p146 = scmp.eq.s32.totalorder %s21, 0
      %p147 = por %p145, %p146
      %p148 = scmp.ne.s32.totalorder %s136, %s137
      %p149 = scmp.eq.s32.totalorder %s22, 1
      %p150 = por %p148, %p149
      %p152 = scmp.ne.s32.totalorder %s137, %s151
      %p153 = scmp.eq.s32.totalorder %s22, 0
      %p154 = por %p152, %p153
      %s156 = sadd.s32 %s155, 1
      %p159 = scmp.eq.s32.totalorder %s16, 1
      %p160 = scmp.ne.s32.totalorder %s155, %s157
      %p161 = scmp.eq.s32.totalorder %s16, 0
      %p162 = por %p160, %p161
      %p163 = scmp.ne.s32.totalorder %s155, %s157
      %p164 = scmp.eq.s32.totalorder %s21, 1
      %p165 = por %p163, %p164
      %p166 = scmp.ne.s32.totalorder %s157, %s158
      %p167 = scmp.eq.s32.totalorder %s21, 0
      %p168 = por %p166, %p167
      %p169 = scmp.ne.s32.totalorder %s157, %s158
      %p170 = scmp.eq.s32.totalorder %s22, 1
      %p171 = por %p169, %p170
      %p173 = scmp.ne.s32.totalorder %s158, %s172
      %p174 = scmp.eq.s32.totalorder %s22, 0
      %p175 = por %p173, %p174
      %s176 = ssub.s32 %s16, %s23
      %p177 = scmp.eq.s32.totalorder %s176, 0
      %s179 = sadd.s32 %s178, 1
      %s180 = scalar_select %p177, %s178, %s179
      %p183 = pneg %p177
      %p184 = scmp.eq.s32.totalorder %s16, 1
      %p185 = por %p183, %p184
      %p186 = scmp.ne.s32.totalorder %s178, %s181
      %p187 = scmp.eq.s32.totalorder %s16, 0
      %p188 = por %p186, %p187
      %p189 = scmp.ne.s32.totalorder %s178, %s181
      %p190 = scmp.eq.s32.totalorder %s21, 1
      %p191 = por %p189, %p190
      %p192 = scmp.ne.s32.totalorder %s181, %s182
      %p193 = scmp.eq.s32.totalorder %s21, 0
      %p194 = por %p192, %p193
      %p195 = scmp.ne.s32.totalorder %s181, %s182
      %p196 = scmp.eq.s32.totalorder %s22, 1
      %p197 = por %p195, %p196
      %p199 = scmp.ne.s32.totalorder %s182, %s198
      %p200 = scmp.eq.s32.totalorder %s22, 0
      %p201 = por %p199, %p200
      %p202 = scmp.le.s32.totalorder 1, %s16
      %p203 = scmp.lt.s32.totalorder %s16, 3
      %p204 = pnand %p202, %p203
      %p205 = pneg %p204
      // Predicated region
      $region9: #{nlayer_classifier_forward.13} parent=5 // pred_check
        _
      $region10: #{nlayer_classifier_forward.13} parent=5 // pred_check_branch
        %207 = sbr.rel (%p204) target = $region12
      $region11: #{nlayer_classifier_forward.13} parent=5 // pred_region
        %s208 = ssub.s32 %s16, 1
        // Predicated region
        $region13: #{nlayer_classifier_forward.13} parent=11 // pred_check
          %p209 = pneg %p63
        $region14: #{nlayer_classifier_forward.13} parent=11 // pred_check_branch
          %211 = sbr.rel (%p209) target = $region16
        $region15: #{nlayer_classifier_forward.13} parent=11 // pred_region
          _
        $region16: #{nlayer_classifier_forward.13} parent=11 // pred_fallthru
          _
        // Predicated region
        $region17: #{nlayer_classifier_forward.13} parent=11 // pred_check
          %p212 = pneg %p84
        $region18: #{nlayer_classifier_forward.13} parent=11 // pred_check_branch
          %214 = sbr.rel (%p212) target = $region20
        $region19: #{nlayer_classifier_forward.13} parent=11 // pred_region
          _
        $region20: #{nlayer_classifier_forward.13} parent=11 // pred_fallthru
          _
        // Predicated region
        $region21: #{nlayer_classifier_forward.13} parent=11 // pred_check
          %p215 = pneg %p105
        $region22: #{nlayer_classifier_forward.13} parent=11 // pred_check_branch
          %217 = sbr.rel (%p215) target = $region24
        $region23: #{nlayer_classifier_forward.13} parent=11 // pred_region
          _
        $region24: #{nlayer_classifier_forward.13} parent=11 // pred_fallthru
          _
        // Predicated region
        $region25: #{nlayer_classifier_forward.13} parent=11 // pred_check
          %p218 = pneg %p126
        $region26: #{nlayer_classifier_forward.13} parent=11 // pred_check_branch
          %220 = sbr.rel (%p218) target = $region28
        $region27: #{nlayer_classifier_forward.13} parent=11 // pred_region
          _
        $region28: #{nlayer_classifier_forward.13} parent=11 // pred_fallthru
          _
        // Predicated region
        $region29: #{nlayer_classifier_forward.13} parent=11 // pred_check
          %p221 = pneg %p147
        $region30: #{nlayer_classifier_forward.13} parent=11 // pred_check_branch
          %223 = sbr.rel (%p221) target = $region32
        $region31: #{nlayer_classifier_forward.13} parent=11 // pred_region
          _
        $region32: #{nlayer_classifier_forward.13} parent=11 // pred_fallthru
          _
        // Predicated region
        $region33: #{nlayer_classifier_forward.13} parent=11 // pred_check
          %p224 = pneg %p168
        $region34: #{nlayer_classifier_forward.13} parent=11 // pred_check_branch
          %226 = sbr.rel (%p224) target = $region36
        $region35: #{nlayer_classifier_forward.13} parent=11 // pred_region
          _
        $region36: #{nlayer_classifier_forward.13} parent=11 // pred_fallthru
          _
      $region12: #{nlayer_classifier_forward.13} parent=5 // pred_fallthru
        _
      %p227 = scmp.lt.s32.totalorder %s16, 2
      // Predicated region
      $region37: #{nlayer_classifier_forward.13} parent=5 // pred_check
        %p228 = pneg %p227
      $region38: #{nlayer_classifier_forward.13} parent=5 // pred_check_branch
        %230 = sbr.rel (%p228) target = $region40
      $region39: #{nlayer_classifier_forward.13} parent=5 // pred_region
        // Predicated region
        $region41: #{nlayer_classifier_forward.13} parent=39 // pred_check
          %p231 = pneg %p36
        $region42: #{nlayer_classifier_forward.13} parent=39 // pred_check_branch
          %233 = sbr.rel (%p231) target = $region44
        $region43: #{nlayer_classifier_forward.13} parent=39 // pred_region
          %p234 = scmp.lt.s32.totalorder %s16, 1
          %s235 = scalar_select %p234, %s16, 1
          %s236 = smul.addr %s235, 2
          %s237 = smul.addr %s236, 8
          %s238 = scalar_lea.vmem %s0, %s237
        $region44: #{nlayer_classifier_forward.13} parent=39 // pred_fallthru
          _
      $region40: #{nlayer_classifier_forward.13} parent=5 // pred_fallthru
        _
      %p239 = scmp.le.s32.totalorder 1, %s16
      %p240 = scmp.lt.s32.totalorder %s16, 3
      %p241 = pnand %p239, %p240
      %p242 = pneg %p241
      // Predicated region
      $region45: #{nlayer_classifier_forward.13} parent=5 // pred_check
        _
      $region46: #{nlayer_classifier_forward.13} parent=5 // pred_check_branch
        %244 = sbr.rel (%p241) target = $region48
      $region47: #{nlayer_classifier_forward.13} parent=5 // pred_region
        %s245 = ssub.s32 %s16, 1
        %p246 = scmp.lt.s32.totalorder %s21, 1
        %s247 = scalar_select %p246, %s21, 1
        %s248 = smul.addr %s247, 2
        %s249 = smul.addr %s248, 8
        %s250 = scalar_lea.vmem %s0, %s249
        %p251 = pneg %p42
        %p252 = pneg %p39
        %p253 = pneg %p63
        %p254 = pneg %p60
        %p255 = pneg %p84
        %p256 = pneg %p81
        %p257 = pneg %p105
        %p258 = pneg %p102
        %p259 = pneg %p126
        %p260 = pneg %p123
        %p261 = pneg %p147
        %p262 = pneg %p144
        %p263 = pneg %p168
        %p264 = pneg %p165
        %p265 = pneg %p194
        %p266 = pneg %p191
        %s267 = sand.u32 %s181, 1
        %s268 = scalar_lea.sflag [#allocation3], %s267
        %s269 = sand.u32 %s181, 1
        %s270 = scalar_lea.vmem [#allocation2], %s269
        %p271 = scmp.lt.s32.totalorder %s21, 1
        %s272 = scalar_select %p271, %s21, 1
        %s273 = smul.addr %s272, 2
        %s274 = smul.addr %s273, 8
        %s275 = scalar_lea.vmem %s0, %s274
        %v276 = vld [vmem:[%s1] sm:$0x1]
        %v277 = vmul.f32 %v276, 0.055555556
        %v278 = vld [vmem:[%s2] sm:$0x1]
        %v279 = vmul.f32 %v278, 0.055555556
        %v280 = vmul.f32 %v277, %v277
        %v281 = vsub.f32 %v279, %v280
        %v282 = vld [vmem:[%s3] sm:$0x1]
        %v283 = vadd.f32 %v281, 1e-05
        %v284 = vrsqrt.pop %v283
        %v285 = vmul.f32 %v284, %v283
        %v286 = vmul.f32 %v285, %v284
        %v287 = vmul.f32 0.5, %v286
        %v288 = vsub.f32 1.5, %v287
        %v289 = vmul.f32 %v284, %v288
        %vm290 = vweird.f32 %v283
        %vm291 = vweird.f32 %v284
        %vm292 = vmor %vm290, %vm291
        %v293 = vsel %vm292, %v284, %v289
        %v294 = vmul.f32 %v282, %v293
        %v295 = vld [vmem:[%s4] sm:$0x1]
        %v296 = vmul.f32 %v277, %v294
        %v297 = vsub.f32 %v295, %v296
        %v298 = vld [vmem:[%s275] sm:$0xff]
        %v299 = vld [vmem:[%s275 + $0x8] sm:$0x1]
        %v301 = vperm.slane %v294, 0
        %v303 = vmul.f32 %v298, %v301
        %v304 = vmul.f32 %v299, %v301
        %v306 = vperm.slane %v297, 0
        %v308 = vadd.f32 %v303, %v306
        %v309 = vadd.f32 %v304, %v306
        %v310 = vmul.f32 %v308, 0.2
        %v311 = vmul.f32 %v309, 0.2
        %v312 = vmax.f32 %v308, %v310
        %v313 = vmax.f32 %v309, %v311
        %vm314 = vcmask 1040384
        %v315 = vsel %vm314, %v313, 0.0
        %v316 = vadd.f32 %v312, %v315
        %v317 = vrot.slane %v316, 4
        %v318 = vadd.f32 %v316, %v317
        %v319 = vrot.slane %v318, 2
        %v320 = vadd.f32 %v318, %v319
        %v321 = vrot.slane %v320, 1
        %v322 = vadd.f32 %v320, %v321
        %v323 = vrcp.pop 9.0
        %v324 = vmul.f32 9.0, %v323
        %v325 = vsub.f32 1.0, %v324
        %v326 = vmul.f32 %v323, %v325
        %v327 = vadd.f32 %v323, %v326
        %vm328 = vweird.f32 %v323
        %v329 = vsel %vm328, %v323, %v327
        %v330 = vmul.f32 %v322, %v329
        %v331 = vld [vmem:[%s5] sm:$0xff]
        %v332 = vld [vmem:[%s5 + $0x8] sm:$0xff]
        %v333 = vld [vmem:[%s5 + $0x10] sm:$0xff]
        %v334 = vld [vmem:[%s5 + $0x18] sm:$0xff]
        %v335 = vld [vmem:[%s5 + $0x20] sm:$0xff]
        %v336 = vld [vmem:[%s5 + $0x28] sm:$0xff]
        %v337 = vld [vmem:[%s5 + $0x30] sm:$0xff]
        %v338 = vld [vmem:[%s5 + $0x38] sm:$0xff]
        %v339 = vld [vmem:[%s5 + $0x40] sm:$0xff]
        %v340 = vld [vmem:[%s5 + $0x48] sm:$0xff]
        %v341 = vld [vmem:[%s5 + $0x50] sm:$0xff]
        %v342 = vld [vmem:[%s5 + $0x58] sm:$0xff]
        %v343 = vld [vmem:[%s5 + $0x60] sm:$0xff]
        %v344 = vld [vmem:[%s5 + $0x68] sm:$0xff]
        %v345 = vld [vmem:[%s5 + $0x70] sm:$0xff]
        %v346 = vld [vmem:[%s5 + $0x78] sm:$0xff]
        %v347 = vld [vmem:[%s6] sm:$0x1]
        %348 = vmatpush.msra.mxu0 %v346
        %349 = vmatpush.msra.mxu0 %v345
        %350 = vmatpush.msra.mxu0 %v344
        %351 = vmatpush.msra.mxu0 %v343
        %352 = vmatpush.msra.mxu0 %v342
        %353 = vmatpush.msra.mxu0 %v341
        %354 = vmatpush.msra.mxu0 %v340
        %355 = vmatpush.msra.mxu0 %v339
        %356 = vmatpush.msra.mxu0 %v338
        %357 = vmatpush.msra.mxu0 %v337
        %358 = vmatpush.msra.mxu0 %v336
        %359 = vmatpush.msra.mxu0 %v335
        %360 = vmatpush.msra.mxu0 %v334
        %361 = vmatpush.msra.mxu0 %v333
        %362 = vmatpush.msra.mxu0 %v332
        %363 = vmatpush.msra.mxu0 %v331
        %364 = vmatmul.f32.gmra.mxu0 %v330
        %v365 = vpop.f32.mrf.mxu0
        %v366 = vadd.f32 %v347, %v365
        %367 = vdwg.mxu0
        %368 = vst [vmem:[%s270] sm:$0x1] %v366
        %s369 = sand.u32 %s181, 1
        %s370 = scalar_lea.sflag [#allocation3], %s369
        %s371 = sand.u32 %s181, 1
        %s372 = scalar_lea.vmem [#allocation2], %s371
        // Predicated region
        $region49: #{nlayer_classifier_forward.13} parent=47 // pred_check
          %p373 = pneg %p191
        $region50: #{nlayer_classifier_forward.13} parent=47 // pred_check_branch
          %375 = sbr.rel (%p373) target = $region52
        $region51: #{nlayer_classifier_forward.13} parent=47 // pred_region
          %377 = vsyncadd %s370, 0
          %s378 = scalar_lea.hbm %s7, %s21
          %s380 = sshll.u32 %s372, 4
          %s381 = int_to_ptr.vmem [resolvable:$true] %s380
          %s382 = sshll.u32 %s378, 4
          %s383 = int_to_ptr.hbm [resolvable:$true] %s382
          %385 = dma.vmem_to_hbm [thread:$0]  %s381, 16, %s383, %s370
        $region52: #{nlayer_classifier_forward.13} parent=47 // pred_fallthru
          _
      $region48: #{nlayer_classifier_forward.13} parent=5 // pred_fallthru
        _
      %p386 = scmp.le.s32.totalorder 2, %s16
      // Predicated region
      $region53: #{nlayer_classifier_forward.13} parent=5 // pred_check
        %p387 = pneg %p386
      $region54: #{nlayer_classifier_forward.13} parent=5 // pred_check_branch
        %389 = sbr.rel (%p387) target = $region56
      $region55: #{nlayer_classifier_forward.13} parent=5 // pred_region
        %s390 = ssub.s32 %s16, 2
        // Predicated region
        $region57: #{nlayer_classifier_forward.13} parent=55 // pred_check
          %p391 = pneg %p197
        $region58: #{nlayer_classifier_forward.13} parent=55 // pred_check_branch
          %393 = sbr.rel (%p391) target = $region60
        $region59: #{nlayer_classifier_forward.13} parent=55 // pred_region
          %s394 = sand.u32 %s182, 1
          %s395 = scalar_lea.sflag [#allocation3], %s394
          %s396 = sand.u32 %s182, 1
          %s397 = scalar_lea.vmem [#allocation2], %s396
          %399 = dma.done %s395, 16
        $region60: #{nlayer_classifier_forward.13} parent=55 // pred_fallthru
          _
      $region56: #{nlayer_classifier_forward.13} parent=5 // pred_fallthru
        _
    $region6: #{nlayer_classifier_forward.13} parent=1 // loop_footer
      %s20 = sadd.s32 1, %s16
    $region7: #{nlayer_classifier_forward.13} parent=1 // loop_footer_branch
      %15 = sbr.rel target = $region3
    $region8: #{nlayer_classifier_forward.13} parent=1 // loop_exit
      _
    %400 = vsyncpa [#allocation3], 1
    %s401 = scalar_lea.sflag [#allocation3], 1
    %402 = vsyncpa %s401, 1

// kernel: nlayer_classifier_forward.12
$region0: #{nlayer_classifier_forward.12}
  #allocation0 [shape = 'u32[]', space=smem, size = 0x4, offset = 0x4, fixed_abs, tag = 'smem constant byte address 0x4 - core index']
  #allocation1 [shape = 'u32[72,128]{1,0:T(1,128)}', space=vmem, size = 0x9000, scoped, tag = 'internal scratch']
  %s0 = inlined_call_operand.vmem [shape: bf16[24,512], index: 0, kind: input, shape index: {}]
  %s1 = inlined_call_operand.vmem [shape: bf16[512,128], index: 1, kind: input, shape index: {}]
  %s2 = inlined_call_operand.vmem [shape: f32[24,128], index: 2, kind: output, shape index: {0}]
  %s3 = inlined_call_operand.vmem [shape: f32[1,128], index: 3, kind: output, shape index: {1}]
  %s4 = inlined_call_operand.vmem [shape: f32[1,128], index: 4, kind: output, shape index: {2}]
  %5 = xla_tuple %s2, %s3, %s4
  %s6 = sld [smem:[#allocation0]]
  $region38: #{nlayer_classifier_forward.12} parent=0
    _
  %s8 = ssub.s32 1, %s6
  %s9 = scalar_select 0, %s8, %s6
  // Predicated region
  $region2: #{nlayer_classifier_forward.12} parent=0 // pred_check
    _
  $region3: #{nlayer_classifier_forward.12} parent=0 // pred_check_branch
    %11 = sbr.rel (0) target = $region5
  $region4: #{nlayer_classifier_forward.12} parent=0 // pred_region
    _
  $region5: #{nlayer_classifier_forward.12} parent=0 // pred_fallthru
    _
  // Predicated region
  $region6: #{nlayer_classifier_forward.12} parent=0 // pred_check
    _
  $region7: #{nlayer_classifier_forward.12} parent=0 // pred_check_branch
    %13 = sbr.rel (0) target = $region9
  $region8: #{nlayer_classifier_forward.12} parent=0 // pred_region
    _
  $region9: #{nlayer_classifier_forward.12} parent=0 // pred_fallthru
    _
  %v14 = vld [vmem:[%s0] sm:$0xff]
  %v15 = vld [vmem:[%s0 + $0x8] sm:$0xff]
  %v16 = vld [vmem:[%s0 + $0x10] sm:$0xff]
  %v17 = vld [vmem:[%s0 + $0x18] sm:$0xff]
  %v18 = vld [vmem:[%s0 + $0x20] sm:$0xff]
  %v19 = vld [vmem:[%s0 + $0x28] sm:$0xff]
  %v20 = vld [vmem:[%s1] sm:$0xf]
  %v21 = vld [vmem:[%s1 + $0x4] sm:$0xf]
  %v22 = vld [vmem:[%s1 + $0x8] sm:$0xf]
  %v23 = vld [vmem:[%s1 + $0xc] sm:$0xf]
  %v24 = vld [vmem:[%s1 + $0x10] sm:$0xf]
  %v25 = vld [vmem:[%s1 + $0x14] sm:$0xf]
  %v26 = vld [vmem:[%s1 + $0x18] sm:$0xf]
  %v27 = vld [vmem:[%s1 + $0x1c] sm:$0xf]
  %v28 = vld [vmem:[%s1 + $0x20] sm:$0xf]
  %v29 = vld [vmem:[%s1 + $0x24] sm:$0xf]
  %v30 = vld [vmem:[%s1 + $0x28] sm:$0xf]
  %v31 = vld [vmem:[%s1 + $0x2c] sm:$0xf]
  %v32 = vld [vmem:[%s1 + $0x30] sm:$0xf]
  %v33 = vld [vmem:[%s1 + $0x34] sm:$0xf]
  %v34 = vld [vmem:[%s1 + $0x38] sm:$0xf]
  %v35 = vld [vmem:[%s1 + $0x3c] sm:$0xf]
  %v36 = vld [vmem:[%s1 + $0x40] sm:$0xf]
  %v37 = vld [vmem:[%s1 + $0x44] sm:$0xf]
  %v38 = vld [vmem:[%s1 + $0x48] sm:$0xf]
  %v39 = vld [vmem:[%s1 + $0x4c] sm:$0xf]
  %v40 = vld [vmem:[%s1 + $0x50] sm:$0xf]
  %v41 = vld [vmem:[%s1 + $0x54] sm:$0xf]
  %v42 = vld [vmem:[%s1 + $0x58] sm:$0xf]
  %v43 = vld [vmem:[%s1 + $0x5c] sm:$0xf]
  %v44 = vld [vmem:[%s1 + $0x60] sm:$0xf]
  %v45 = vld [vmem:[%s1 + $0x64] sm:$0xf]
  %v46 = vld [vmem:[%s1 + $0x68] sm:$0xf]
  %v47 = vld [vmem:[%s1 + $0x6c] sm:$0xf]
  %v48 = vld [vmem:[%s1 + $0x70] sm:$0xf]
  %v49 = vld [vmem:[%s1 + $0x74] sm:$0xf]
  %v50 = vld [vmem:[%s1 + $0x78] sm:$0xf]
  %v51 = vld [vmem:[%s1 + $0x7c] sm:$0xf]
  %v52 = vld [vmem:[%s1 + $0x80] sm:$0xf]
  %v53 = vld [vmem:[%s1 + $0x84] sm:$0xf]
  %v54 = vld [vmem:[%s1 + $0x88] sm:$0xf]
  %v55 = vld [vmem:[%s1 + $0x8c] sm:$0xf]
  %v56 = vld [vmem:[%s1 + $0x90] sm:$0xf]
  %v57 = vld [vmem:[%s1 + $0x94] sm:$0xf]
  %v58 = vld [vmem:[%s1 + $0x98] sm:$0xf]
  %v59 = vld [vmem:[%s1 + $0x9c] sm:$0xf]
  %v60 = vld [vmem:[%s1 + $0xa0] sm:$0xf]
  %v61 = vld [vmem:[%s1 + $0xa4] sm:$0xf]
  %v62 = vld [vmem:[%s1 + $0xa8] sm:$0xf]
  %v63 = vld [vmem:[%s1 + $0xac] sm:$0xf]
  %v64 = vld [vmem:[%s1 + $0xb0] sm:$0xf]
  %v65 = vld [vmem:[%s1 + $0xb4] sm:$0xf]
  %v66 = vld [vmem:[%s1 + $0xb8] sm:$0xf]
  %v67 = vld [vmem:[%s1 + $0xbc] sm:$0xf]
  %v68 = vld [vmem:[%s1 + $0xc0] sm:$0xf]
  %v69 = vld [vmem:[%s1 + $0xc4] sm:$0xf]
  %v70 = vld [vmem:[%s1 + $0xc8] sm:$0xf]
  %v71 = vld [vmem:[%s1 + $0xcc] sm:$0xf]
  %v72 = vld [vmem:[%s1 + $0xd0] sm:$0xf]
  %v73 = vld [vmem:[%s1 + $0xd4] sm:$0xf]
  %v74 = vld [vmem:[%s1 + $0xd8] sm:$0xf]
  %v75 = vld [vmem:[%s1 + $0xdc] sm:$0xf]
  %v76 = vld [vmem:[%s1 + $0xe0] sm:$0xf]
  %v77 = vld [vmem:[%s1 + $0xe4] sm:$0xf]
  %v78 = vld [vmem:[%s1 + $0xe8] sm:$0xf]
  %v79 = vld [vmem:[%s1 + $0xec] sm:$0xf]
  %v80 = vld [vmem:[%s1 + $0xf0] sm:$0xf]
  %v81 = vld [vmem:[%s1 + $0xf4] sm:$0xf]
  %v82 = vld [vmem:[%s1 + $0xf8] sm:$0xf]
  %v83 = vld [vmem:[%s1 + $0xfc] sm:$0xf]
  %v90 = vunpack.c.l.b16 %v14
  %v91 = vunpack.c.h.b16 %v14
  %v92 = vunpack.c.l.b16 %v15
  %v93 = vunpack.c.h.b16 %v15
  %v94 = vunpack.c.l.b16 %v16
  %v95 = vunpack.c.h.b16 %v16
  %v96 = vunpack.c.l.b16 %v17
  %v97 = vunpack.c.h.b16 %v17
  %v98 = vunpack.c.l.b16 %v18
  %v99 = vunpack.c.h.b16 %v18
  %v100 = vunpack.c.l.b16 %v19
  %v101 = vunpack.c.h.b16 %v19
  %v102 = vpack.c.b16 %v94, %v90
  %v103 = vpack.c.b16 %v95, %v91
  %v104 = vpack.c.b16 %v96, %v92
  %v105 = vpack.c.b16 %v97, %v93
  %v106 = vpack.c.b16 %v98, %v98
  %v107 = vpack.c.b16 %v99, %v99
  %v108 = vpack.c.b16 %v100, %v100
  %v109 = vpack.c.b16 %v101, %v101
  %v182 = vunpack.c.l.b16 %v20
  %v183 = vunpack.c.l.b16 %v21
  %v184 = vunpack.c.l.b16 %v22
  %v185 = vunpack.c.l.b16 %v23
  %v186 = vunpack.c.l.b16 %v24
  %v187 = vunpack.c.l.b16 %v25
  %v188 = vunpack.c.l.b16 %v26
  %v189 = vunpack.c.l.b16 %v27
  %v190 = vunpack.c.l.b16 %v28
  %v191 = vunpack.c.l.b16 %v29
  %v192 = vunpack.c.l.b16 %v30
  %v193 = vunpack.c.l.b16 %v31
  %v194 = vunpack.c.l.b16 %v32
  %v195 = vunpack.c.l.b16 %v33
  %v196 = vunpack.c.l.b16 %v34
  %v197 = vunpack.c.l.b16 %v35
  %v198 = vunpack.c.l.b16 %v36
  %v199 = vunpack.c.l.b16 %v37
  %v200 = vunpack.c.l.b16 %v38
  %v201 = vunpack.c.l.b16 %v39
  %v202 = vunpack.c.l.b16 %v40
  %v203 = vunpack.c.l.b16 %v41
  %v204 = vunpack.c.l.b16 %v42
  %v205 = vunpack.c.l.b16 %v43
  %v206 = vunpack.c.l.b16 %v44
  %v207 = vunpack.c.l.b16 %v45
  %v208 = vunpack.c.l.b16 %v46
  %v209 = vunpack.c.l.b16 %v47
  %v210 = vunpack.c.l.b16 %v48
  %v211 = vunpack.c.l.b16 %v49
  %v212 = vunpack.c.l.b16 %v50
  %v213 = vunpack.c.l.b16 %v51
  %v214 = vunpack.c.l.b16 %v52
  %v215 = vunpack.c.l.b16 %v53
  %v216 = vunpack.c.l.b16 %v54
  %v217 = vunpack.c.l.b16 %v55
  %v218 = vunpack.c.l.b16 %v56
  %v219 = vunpack.c.l.b16 %v57
  %v220 = vunpack.c.l.b16 %v58
  %v221 = vunpack.c.l.b16 %v59
  %v222 = vunpack.c.l.b16 %v60
  %v223 = vunpack.c.l.b16 %v61
  %v224 = vunpack.c.l.b16 %v62
  %v225 = vunpack.c.l.b16 %v63
  %v226 = vunpack.c.l.b16 %v64
  %v227 = vunpack.c.l.b16 %v65
  %v228 = vunpack.c.l.b16 %v66
  %v229 = vunpack.c.l.b16 %v67
  %v230 = vunpack.c.l.b16 %v68
  %v231 = vunpack.c.l.b16 %v69
  %v232 = vunpack.c.l.b16 %v70
  %v233 = vunpack.c.l.b16 %v71
  %v234 = vunpack.c.l.b16 %v72
  %v235 = vunpack.c.l.b16 %v73
  %v236 = vunpack.c.l.b16 %v74
  %v237 = vunpack.c.l.b16 %v75
  %v238 = vunpack.c.l.b16 %v76
  %v239 = vunpack.c.l.b16 %v77
  %v240 = vunpack.c.l.b16 %v78
  %v241 = vunpack.c.l.b16 %v79
  %v242 = vunpack.c.l.b16 %v80
  %v243 = vunpack.c.l.b16 %v81
  %v244 = vunpack.c.l.b16 %v82
  %v245 = vunpack.c.l.b16 %v83
  %v246 = vpack.c.b16 %v183, %v182
  %v247 = vpack.c.b16 %v185, %v184
  %v248 = vpack.c.b16 %v187, %v186
  %v249 = vpack.c.b16 %v189, %v188
  %v250 = vpack.c.b16 %v191, %v190
  %v251 = vpack.c.b16 %v193, %v192
  %v252 = vpack.c.b16 %v195, %v194
  %v253 = vpack.c.b16 %v197, %v196
  %v254 = vpack.c.b16 %v199, %v198
  %v255 = vpack.c.b16 %v201, %v200
  %v256 = vpack.c.b16 %v203, %v202
  %v257 = vpack.c.b16 %v205, %v204
  %v258 = vpack.c.b16 %v207, %v206
  %v259 = vpack.c.b16 %v209, %v208
  %v260 = vpack.c.b16 %v211, %v210
  %v261 = vpack.c.b16 %v213, %v212
  %v262 = vpack.c.b16 %v215, %v214
  %v263 = vpack.c.b16 %v217, %v216
  %v264 = vpack.c.b16 %v219, %v218
  %v265 = vpack.c.b16 %v221, %v220
  %v266 = vpack.c.b16 %v223, %v222
  %v267 = vpack.c.b16 %v225, %v224
  %v268 = vpack.c.b16 %v227, %v226
  %v269 = vpack.c.b16 %v229, %v228
  %v270 = vpack.c.b16 %v231, %v230
  %v271 = vpack.c.b16 %v233, %v232
  %v272 = vpack.c.b16 %v235, %v234
  %v273 = vpack.c.b16 %v237, %v236
  %v274 = vpack.c.b16 %v239, %v238
  %v275 = vpack.c.b16 %v241, %v240
  %v276 = vpack.c.b16 %v243, %v242
  %v277 = vpack.c.b16 %v245, %v244
  %310 = vmatpush.bf16.msra.mxu0 %v253
  %311 = vmatpush.bf16.msra.mxu0 %v252
  %312 = vmatpush.bf16.msra.mxu0 %v251
  %313 = vmatpush.bf16.msra.mxu0 %v250
  %314 = vmatpush.bf16.msra.mxu0 %v249
  %315 = vmatpush.bf16.msra.mxu0 %v248
  %316 = vmatpush.bf16.msra.mxu0 %v247
  %317 = vmatpush.bf16.msra.mxu0 %v246
  %318 = vmatmul.bf16.gmra.mxu0 %v102
  %v319 = vpop.f32.mrf.mxu0
  %v320 = vadd.f32 0.0, %v319
  %v321 = vpop.f32.mrf.mxu0
  %v322 = vadd.f32 0.0, %v321
  %323 = vmatmul.bf16.gmra.mxu0 %v106
  %v324 = vpop.f32.mrf.mxu0
  %v325 = vadd.f32 0.0, %v324
  %v326 = vpop.f32.mrf.mxu0
  %327 = vdwg.mxu0
  %328 = vmatpush.bf16.msra.mxu0 %v261
  %329 = vmatpush.bf16.msra.mxu0 %v260
  %330 = vmatpush.bf16.msra.mxu0 %v259
  %331 = vmatpush.bf16.msra.mxu0 %v258
  %332 = vmatpush.bf16.msra.mxu0 %v257
  %333 = vmatpush.bf16.msra.mxu0 %v256
  %334 = vmatpush.bf16.msra.mxu0 %v255
  %335 = vmatpush.bf16.msra.mxu0 %v254
  %336 = vmatmul.bf16.gmra.mxu0 %v103
  %v337 = vpop.f32.mrf.mxu0
  %v338 = vadd.f32 %v320, %v337
  %v339 = vpop.f32.mrf.mxu0
  %v340 = vadd.f32 %v322, %v339
  %341 = vmatmul.bf16.gmra.mxu0 %v107
  %v342 = vpop.f32.mrf.mxu0
  %v343 = vadd.f32 %v325, %v342
  %v344 = vpop.f32.mrf.mxu0
  %345 = vdwg.mxu0
  %346 = vmatpush.bf16.msra.mxu0 %v269
  %347 = vmatpush.bf16.msra.mxu0 %v268
  %348 = vmatpush.bf16.msra.mxu0 %v267
  %349 = vmatpush.bf16.msra.mxu0 %v266
  %350 = vmatpush.bf16.msra.mxu0 %v265
  %351 = vmatpush.bf16.msra.mxu0 %v264
  %352 = vmatpush.bf16.msra.mxu0 %v263
  %353 = vmatpush.bf16.msra.mxu0 %v262
  %354 = vmatmul.bf16.gmra.mxu0 %v104
  %v355 = vpop.f32.mrf.mxu0
  %v356 = vadd.f32 %v338, %v355
  %v357 = vpop.f32.mrf.mxu0
  %v358 = vadd.f32 %v340, %v357
  %359 = vmatmul.bf16.gmra.mxu0 %v108
  %v360 = vpop.f32.mrf.mxu0
  %v361 = vadd.f32 %v343, %v360
  %v362 = vpop.f32.mrf.mxu0
  %363 = vdwg.mxu0
  %364 = vmatpush.bf16.msra.mxu0 %v277
  %365 = vmatpush.bf16.msra.mxu0 %v276
  %366 = vmatpush.bf16.msra.mxu0 %v275
  %367 = vmatpush.bf16.msra.mxu0 %v274
  %368 = vmatpush.bf16.msra.mxu0 %v273
  %369 = vmatpush.bf16.msra.mxu0 %v272
  %370 = vmatpush.bf16.msra.mxu0 %v271
  %371 = vmatpush.bf16.msra.mxu0 %v270
  %372 = vmatmul.bf16.gmra.mxu0 %v105
  %v373 = vpop.f32.mrf.mxu0
  %v374 = vadd.f32 %v356, %v373
  %v375 = vpop.f32.mrf.mxu0
  %v376 = vadd.f32 %v358, %v375
  %377 = vmatmul.bf16.gmra.mxu0 %v109
  %v378 = vpop.f32.mrf.mxu0
  %v379 = vadd.f32 %v361, %v378
  %v380 = vpop.f32.mrf.mxu0
  %381 = vdwg.mxu0
  %382 = vst [vmem:[%s2] sm:$0xff] %v374
  %383 = vst [vmem:[%s2 + $0x8] sm:$0xff] %v376
  %384 = vst [vmem:[%s2 + $0x10] sm:$0xff] %v379
  %p385 = scmp.eq.s32.totalorder 0, 0
  // Predicated region
  $region10: #{nlayer_classifier_forward.12} parent=0 // pred_check
    %p386 = pneg %p385
  $region11: #{nlayer_classifier_forward.12} parent=0 // pred_check_branch
    %388 = sbr.rel (%p386) target = $region13
  $region12: #{nlayer_classifier_forward.12} parent=0 // pred_region
    %389 = vst [vmem:[%s3] sm:$0x1] 0.0
    %390 = vst [vmem:[%s4] sm:$0x1] 0.0
  $region13: #{nlayer_classifier_forward.12} parent=0 // pred_fallthru
    _
  %v391 = vld [vmem:[%s3] sm:$0x1]
  %v392 = vadd.f32 %v374, %v376
  %v393 = vadd.f32 %v392, %v379
  %v394 = vrot.slane %v393, 4
  %v395 = vadd.f32 %v393, %v394
  %v396 = vrot.slane %v395, 2
  %v397 = vadd.f32 %v395, %v396
  %v398 = vrot.slane %v397, 1
  %v399 = vadd.f32 %v397, %v398
  %v400 = vadd.f32 %v391, %v399
  %401 = vst [vmem:[%s3] sm:$0x1] %v400
  %v402 = vld [vmem:[%s4] sm:$0x1]
  %v403 = vmul.f32 %v374, %v374
  %v404 = vmul.f32 %v376, %v376
  %v405 = vmul.f32 %v379, %v379
  %v406 = vadd.f32 %v403, %v404
  %v407 = vadd.f32 %v406, %v405
  %v408 = vrot.slane %v407, 4
  %v409 = vadd.f32 %v407, %v408
  %v410 = vrot.slane %v409, 2
  %v411 = vadd.f32 %v409, %v410
  %v412 = vrot.slane %v411, 1
  %v413 = vadd.f32 %v411, %v412
  %v414 = vadd.f32 %v402, %v413
  %415 = vst [vmem:[%s4] sm:$0x1] %v414
  // Predicated region
  $region14: #{nlayer_classifier_forward.12} parent=0 // pred_check
    _
  $region15: #{nlayer_classifier_forward.12} parent=0 // pred_check_branch
    %417 = sbr.rel (0) target = $region17
  $region16: #{nlayer_classifier_forward.12} parent=0 // pred_region
    _
  $region17: #{nlayer_classifier_forward.12} parent=0 // pred_fallthru
    _
  // Predicated region
  $region18: #{nlayer_classifier_forward.12} parent=0 // pred_check
    _
  $region19: #{nlayer_classifier_forward.12} parent=0 // pred_check_branch
    %419 = sbr.rel (0) target = $region21
  $region20: #{nlayer_classifier_forward.12} parent=0 // pred_region
    _
  $region21: #{nlayer_classifier_forward.12} parent=0 // pred_fallthru
    _
  // Predicated region
  $region22: #{nlayer_classifier_forward.12} parent=0 // pred_check
    _
  $region23: #{nlayer_classifier_forward.12} parent=0 // pred_check_branch
    %421 = sbr.rel (0) target = $region25
  $region24: #{nlayer_classifier_forward.12} parent=0 // pred_region
    _
  $region25: #{nlayer_classifier_forward.12} parent=0 // pred_fallthru
    _
  // Predicated region
  $region26: #{nlayer_classifier_forward.12} parent=0 // pred_check
    _
  $region27: #{nlayer_classifier_forward.12} parent=0 // pred_check_branch
    %423 = sbr.rel (0) target = $region29
  $region28: #{nlayer_classifier_forward.12} parent=0 // pred_region
    _
  $region29: #{nlayer_classifier_forward.12} parent=0 // pred_fallthru
    _
  // Predicated region
  $region30: #{nlayer_classifier_forward.12} parent=0 // pred_check
    _
  $region31: #{nlayer_classifier_forward.12} parent=0 // pred_check_branch
    %425 = sbr.rel (0) target = $region33
  $region32: #{nlayer_classifier_forward.12} parent=0 // pred_region
    _
  $region33: #{nlayer_classifier_forward.12} parent=0 // pred_fallthru
    _
  // Predicated region
  $region34: #{nlayer_classifier_forward.12} parent=0 // pred_check
    _
  $region35: #{nlayer_classifier_forward.12} parent=0 // pred_check_branch
    %427 = sbr.rel (0) target = $region37
  $region36: #{nlayer_classifier_forward.12} parent=0 // pred_region
    _
  $region37: #{nlayer_classifier_forward.12} parent=0 // pred_fallthru
    _

</llo_original>
